<compile_context>
chip_gen: v7x
topology: tpu7x:2x2x1
jax: 0.10.0
libtpu: 0.0.40
codegen_flags: <defaults>
</compile_context>

<pallas_src>
import functools

import jax
import jax.numpy as jnp
from jax import lax
from jax.experimental import pallas as pl
from jax.experimental.pallas import tpu as pltpu


LEAKY_SLOPE = 0.01   # nn.LeakyReLU default negative_slope
BN_EPS = 1e-5


def _round_up(x, m):
    return (x + m - 1) // m * m


# ----------------------------------------------------------------------------
# Fused [2x2 maxpool] -> conv3x3(pad=1) -> folded-BN bias -> LeakyReLU kernel
# ----------------------------------------------------------------------------
def _conv_kernel(xm_ref, xt_ref, xb_ref, w_ref, b_ref, o_ref, pt_ref, lhs_ref,
                 *, th, wo, cin, cinp, pool, slope):
    """One (batch, row-tile) grid step.

    pool=True:
      xm_ref: (1, 2*th, wo, 2*cin)  pre-pool rows, W split as (wo,2)->channels
      xt_ref/xb_ref: (1, 2, wo, 2*cin)  pre-pool rows of the halo pooled rows
    pool=False:
      xm_ref: (1, th*wo, cin)  raster-flat NHWC row tile
      xt_ref/xb_ref: (1, wo, cin)  halo pooled rows (above / below)
    w_ref : (9*cinp, coutp) bf16  taps folded into K, BN scale folded in
    b_ref : (1, coutp) f32        folded BN+conv bias
    o_ref : (1, th*wo, coutp)     raster-flat, lane-dense output tile
    pt_ref : VMEM ((th+2)*wo + 2, cinp) bf16  zero-padded flat input tile
    lhs_ref: VMEM (th*wo, 9*cinp) bf16        in-VMEM im2col LHS
    """
    i = pl.program_id(1)
    nrow = pl.num_programs(1)
    n_flat = (th + 2) * wo + 2   # guard row + (th+2) padded rows + guard row

    # Zero-padded raster-flat input tile: conv padding=1 and the channel
    # padding cin->cinp are both realized here (no jnp.pad HBM pass).
    pt_ref[...] = jnp.zeros((n_flat, cinp), pt_ref.dtype)

    if pool:
        def pool2x2(v):
            # v: (2r, wo, 2*cin); lanes are [even-col chans | odd-col chans]
            m = jnp.maximum(v[..., :cin], v[..., cin:])        # 1x2 max (lane halves)
            m = m.reshape(m.shape[0] // 2, 2, wo, cin)         # leading-dim split only
            return jnp.maximum(m[:, 0], m[:, 1])               # 2x1 max (row pairs)

        main = pool2x2(xm_ref[0])                              # (th, wo, cin)
        top = pool2x2(xt_ref[0])[0]                            # (wo, cin)
        bot = pool2x2(xb_ref[0])[0]                            # (wo, cin)
        for t in range(th):                                    # rows -> flat scratch
            pt_ref[1 + (t + 1) * wo:1 + (t + 2) * wo, :cin] = main[t]
    else:
        pt_ref[1 + wo:1 + wo + th * wo, :cin] = xm_ref[0]      # already raster-flat
        top = xt_ref[0]                                        # (wo, cin)
        bot = xb_ref[0]

    @pl.when(i > 0)                       # row above exists (else stays zero pad)
    def _():
        pt_ref[1:1 + wo, :cin] = top

    @pl.when(i < nrow - 1)                # row below exists (else stays zero pad)
    def _():
        pt_ref[1 + (th + 1) * wo:1 + (th + 2) * wo, :cin] = bot

    # In-VMEM im2col with the 9 taps folded into K.  Taps are contiguous slices
    # of the flat tile (row stride = wo); left/right image-border columns of the
    # dx=0 / dx=2 taps wrap onto neighbouring rows and are masked to the correct
    # zero padding value.
    col = lax.broadcasted_iota(jnp.int32, (th * wo, 1), 0) % wo
    not_left = col != 0
    not_right = col != wo - 1
    for dy in range(3):
        for dx in range(3):
            k = 3 * dy + dx
            s = dy * wo + dx
            tap = pt_ref[s:s + th * wo, :]                     # (th*wo, cinp)
            if dx == 0:
                tap = jnp.where(not_left, tap, jnp.zeros_like(tap))
            elif dx == 2:
                tap = jnp.where(not_right, tap, jnp.zeros_like(tap))
            lhs_ref[:, k * cinp:(k + 1) * cinp] = tap

    # Single MXU matmul per grid step: (th*wo, 9*cinp) x (9*cinp, coutp), f32 acc.
    acc = jnp.dot(lhs_ref[...], w_ref[...], preferred_element_type=jnp.float32)
    y = acc + b_ref[...]                                       # bias: once per step
    y = jnp.where(y > 0.0, y, slope * y)                       # LeakyReLU
    o_ref[0] = y.astype(o_ref.dtype)                           # lane-dense store


def _pick_row_tile(ho, wo, cinp, coutp, pool, budget_bytes=12 * 1024 * 1024):
    """Largest divisor of `ho` whose (double-buffered) per-step working set fits
    the budget.  Budget is sized so the kernel is comfortable on v7x (64 MiB
    physical VMEM, 32 MiB scoped default); v5e/v6e have more headroom.  Bigger
    tiles amortize the ~0.35us per-grid-step overhead and raise the matmul M
    dim toward MXU-native sizes."""
    best = 1
    for th in range(1, ho + 1):
        if ho % th:
            continue
        if pool:
            act = (2 * th + 4) * wo * (2 * cinp) * 2           # bf16 input blocks
        else:
            act = (th + 2) * wo * cinp * 2
        out = th * wo * coutp * 4                              # f32 worst case
        wgt = (9 * cinp + 1) * coutp * 4
        scr = ((th + 2) * wo + 2) * cinp * 2 + th * wo * 9 * cinp * 2
        if 2 * (act + out + wgt) + scr <= budget_bytes:
            best = th
    return best


def conv3x3_bn_lrelu(x, w, b, *, pool, ho, wo, out_dtype, slope=LEAKY_SLOPE):
    """Fused [2x2 maxpool (pool=True)] -> conv3x3(pad=1) -> bias -> LeakyReLU.

    pool=True : x is (N, 2*ho, wo, 2*cin)  (pre-pool NHWC, W split as (wo,2)
                with the "2" folded into channels -- a free reshape).
    pool=False: x is (N, ho*wo, cin)       (raster-flat NHWC).
    w: (9*cinp, coutp) bf16, b: (1, coutp) f32.
    Returns (N, ho*wo, coutp) in out_dtype (row-major identical to NHWC).
    """
    N = x.shape[0]
    cinp = w.shape[0] // 9
    coutp = w.shape[1]
    if pool:
        assert x.shape[1] == 2 * ho and x.shape[2] == wo and x.shape[3] % 2 == 0
        cin = x.shape[3] // 2
    else:
        assert x.shape[1] == ho * wo
        cin = x.shape[2]
    assert cin <= cinp and coutp % 128 == 0
    assert wo % 8 == 0, "sublane-aligned raster layout needs wo % 8 == 0"

    th = _pick_row_tile(ho, wo, cinp, coutp, pool)
    nrow = ho // th
    grid = (N, nrow)   # batch=2 in the demo -> both v7x TensorCores get work

    if pool:
        in_specs = [
            pl.BlockSpec((1, 2 * th, wo, 2 * cin), lambda n, i: (n, i, 0, 0)),
            pl.BlockSpec((1, 2, wo, 2 * cin),
                         lambda n, i: (n, jnp.maximum(i * th - 1, 0), 0, 0)),
            pl.BlockSpec((1, 2, wo, 2 * cin),
                         lambda n, i: (n, jnp.minimum((i + 1) * th, ho - 1), 0, 0)),
        ]
    else:
        in_specs = [
            pl.BlockSpec((1, th * wo, cin), lambda n, i: (n, i, 0)),
            pl.BlockSpec((1, wo, cin),
                         lambda n, i: (n, jnp.maximum(i * th - 1, 0), 0)),
            pl.BlockSpec((1, wo, cin),
                         lambda n, i: (n, jnp.minimum((i + 1) * th, ho - 1), 0)),
        ]
    in_specs += [
        pl.BlockSpec((9 * cinp, coutp), lambda n, i: (0, 0)),
        pl.BlockSpec((1, coutp), lambda n, i: (0, 0)),
    ]

    kernel = functools.partial(_conv_kernel, th=th, wo=wo, cin=cin, cinp=cinp,
                               pool=pool, slope=slope)
    return pl.pallas_call(
        kernel,
        out_shape=jax.ShapeDtypeStruct((N, ho * wo, coutp), out_dtype),
        grid=grid,
        in_specs=in_specs,
        out_specs=pl.BlockSpec((1, th * wo, coutp), lambda n, i: (n, i, 0)),
        scratch_shapes=[
            pltpu.VMEM(((th + 2) * wo + 2, cinp), jnp.bfloat16),   # padded flat tile
            pltpu.VMEM((th * wo, 9 * cinp), jnp.bfloat16),         # im2col LHS
        ],
        compiler_params=pltpu.CompilerParams(
            dimension_semantics=("parallel", "parallel"),
            vmem_limit_bytes=32 * 1024 * 1024),   # safe on v7x's 64 MiB VMEM
    )(x, x, x, w, b)


# ----------------------------------------------------------------------------
# Down block forward (NCHW in / NCHW out, like the PyTorch module)
# ----------------------------------------------------------------------------
def down_forward(x_nchw, params, *, out_channels):
    """Down: MaxPool2d(2) -> (Conv3x3 -> BN(eval) -> LeakyReLU) x 2."""
    N, cin, H, W = x_nchw.shape
    assert H % 2 == 0 and W % 2 == 0
    ho, wo = H // 2, W // 2

    x = jnp.transpose(x_nchw, (0, 2, 3, 1)).astype(jnp.bfloat16)   # NCHW -> NHWC bf16
    # Free reshape: split W into (wo, 2) and fold the "2" into channels so the
    # in-kernel 2x2 pool is a lane-half max + row-pair max (no strided slices).
    x = x.reshape(N, H, wo, 2 * cin)

    h = conv3x3_bn_lrelu(x, params["c1"]["w"], params["c1"]["b"],
                         pool=True, ho=ho, wo=wo, out_dtype=jnp.bfloat16)
    # h: (N, ho*wo, coutp) raster-flat padded-channel NHWC -> feed conv2 as-is.
    h = conv3x3_bn_lrelu(h, params["c2"]["w"], params["c2"]["b"],
                         pool=False, ho=ho, wo=wo, out_dtype=jnp.float32)
    h = h.reshape(N, ho, wo, -1)[..., :out_channels]               # drop channel pad
    return jnp.transpose(h, (0, 3, 1, 2))                          # NHWC -> NCHW


# ----------------------------------------------------------------------------
# Deterministic parameters (Conv2d + BatchNorm2d(eval), BN folded, kernel layout)
# ----------------------------------------------------------------------------
def make_params(key, in_channels, out_channels):
    bn_scale = 1.0 / jnp.sqrt(1.0 + BN_EPS)   # gamma=1, running_var=1, mean=0, beta=0
    kw1, kb1, kw2, kb2 = jax.random.split(key, 4)
    coutp = _round_up(out_channels, 128)      # lane-dense output channels

    def conv(kw, kb, cin, cout, cinp):
        w = jax.random.normal(kw, (cout, cin, 3, 3), jnp.float32) / jnp.sqrt(9.0 * cin)
        b = 0.05 * jax.random.normal(kb, (cout,), jnp.float32)
        whwio = jnp.transpose(w, (2, 3, 1, 0)) * bn_scale                  # (3,3,cin,cout)
        whwio = jnp.pad(whwio, ((0, 0), (0, 0), (0, cinp - cin), (0, coutp - cout)))
        wk = whwio.reshape(9 * cinp, coutp).astype(jnp.bfloat16)           # tap-major K
        bk = jnp.pad(bn_scale * b, (0, coutp - cout)).reshape(1, coutp)
        return {"w": wk, "b": bk.astype(jnp.float32)}

    return {
        "c1": conv(kw1, kb1, in_channels, out_channels, _round_up(in_channels, 8)),
        "c2": conv(kw2, kb2, out_channels, out_channels, coutp),
    }


# ----------------------------------------------------------------------------
# Pure-JAX reference (same bf16-rounded weights/activations, XLA f32 conv)
# ----------------------------------------------------------------------------
def _conv_ref(x, wk, bk, cin, cout, slope=LEAKY_SLOPE):
    cinp = wk.shape[0] // 9
    w = wk.astype(jnp.float32).reshape(3, 3, cinp, -1)[:, :, :cin, :cout]
    b = bk[0, :cout].astype(jnp.float32)
    y = lax.conv_general_dilated(x.astype(jnp.float32), w, (1, 1), "SAME",
                                 dimension_numbers=("NHWC", "HWIO", "NHWC"),
                                 precision=lax.Precision.HIGHEST)
    y = y + b
    return jnp.where(y > 0.0, y, slope * y)


def down_forward_ref(x_nchw, params, out_channels):
    cin = x_nchw.shape[1]
    x = jnp.transpose(x_nchw, (0, 2, 3, 1)).astype(jnp.bfloat16)
    p = lax.reduce_window(x, jnp.asarray(-jnp.inf, x.dtype), lax.max,
                          (1, 2, 2, 1), (1, 2, 2, 1), "VALID")
    h1 = _conv_ref(p, params["c1"]["w"], params["c1"]["b"], cin, out_channels)
    h1 = h1.astype(jnp.bfloat16)
    h2 = _conv_ref(h1, params["c2"]["w"], params["c2"]["b"], out_channels, out_channels)
    return jnp.transpose(h2, (0, 3, 1, 2))


# ----------------------------------------------------------------------------
if __name__ == "__main__":
    key = jax.random.PRNGKey(0)
    k_x, k_p = jax.random.split(key)

    N, Cin, H, W = 2, 4, 16, 16
    Cout = 32
    x = jax.random.normal(k_x, (N, Cin, H, W), jnp.float32)   # NCHW, like PyTorch
    params = make_params(k_p, Cin, Cout)

    fwd = jax.jit(functools.partial(down_forward, out_channels=Cout))
    out = fwd(x, params)
    jax.block_until_ready(out)

    assert out.shape == (N, Cout, H // 2, W // 2), out.shape
    assert bool(jnp.all(jnp.isfinite(out)))

    ref = down_forward_ref(x, params, Cout)
    err = float(jnp.max(jnp.abs(out - ref)))
    assert err < 1e-2, f"max abs error vs reference: {err}"

    print("KERNEL_OK")
</pallas_src>

<mosaic_0001>
module attributes {stable_mosaic.version = 11 : i64} {
  func.func @_conv_kernel(%arg0: i32, %arg1: i32, %arg2: memref<1x16x8x8xbf16, #tpu.memory_space<vmem>>, %arg3: memref<1x2x8x8xbf16, #tpu.memory_space<vmem>>, %arg4: memref<1x2x8x8xbf16, #tpu.memory_space<vmem>>, %arg5: memref<72x128xbf16, #tpu.memory_space<vmem>>, %arg6: memref<1x128xf32, #tpu.memory_space<vmem>>, %arg7: memref<1x64x128xbf16, #tpu.memory_space<vmem>>, %arg8: memref<82x8xbf16, #tpu.memory_space<vmem>>, %arg9: memref<64x72xbf16, #tpu.memory_space<vmem>>) attributes {dimension_semantics = [#tpu.dimension_semantics<parallel>, #tpu.dimension_semantics<parallel>], iteration_bounds = array<i64: 2, 1>, scalar_prefetch = 0 : i64, scratch_operands = 2 : i64, tpu.core_type = #tpu.core_type<tc>, window_params = [{transform_indices = @transform_0, window_bounds = array<i64: 1, 16, 8, 8>}, {transform_indices = @transform_1, window_bounds = array<i64: 1, 2, 8, 8>}, {transform_indices = @transform_2, window_bounds = array<i64: 1, 2, 8, 8>}, {pipeline_mode = #tpu.pipeline_mode<synchronous>, transform_indices = @transform_3, window_bounds = array<i64: 72, 128>}, {pipeline_mode = #tpu.pipeline_mode<synchronous>, transform_indices = @transform_4, window_bounds = array<i64: 1, 128>}, {transform_indices = @transform_5, window_bounds = array<i64: 1, 64, 128>}]} {
    %cst = arith.constant 0.000000e+00 : bf16
    %0 = vector.broadcast %cst : bf16 to vector<82x8xbf16>
    %c0 = arith.constant 0 : index
    %c0_0 = arith.constant 0 : index
    %1 = vector.load %arg8[%c0, %c0_0] : memref<82x8xbf16, #tpu.memory_space<vmem>>, vector<82x8xbf16>
    tpu.vector_store %arg8[%c0, %c0_0], %0 {strides = array<i32>} : memref<82x8xbf16, #tpu.memory_space<vmem>>, vector<82x8xbf16>,
    %c0_1 = arith.constant 0 : index
    %c0_2 = arith.constant 0 : index
    %c0_3 = arith.constant 0 : index
    %c0_4 = arith.constant 0 : index
    %2 = vector.load %arg2[%c0_1, %c0_2, %c0_3, %c0_4] : memref<1x16x8x8xbf16, #tpu.memory_space<vmem>>, vector<1x16x8x8xbf16>
    %3 = vector.shape_cast %2 : vector<1x16x8x8xbf16> to vector<16x8x8xbf16>
    %4 = vector.extract_strided_slice %3 {offsets = [0, 0, 0], sizes = [16, 8, 4], strides = [1, 1, 1]} : vector<16x8x8xbf16> to vector<16x8x4xbf16>
    %5 = vector.extract_strided_slice %3 {offsets = [0, 0, 4], sizes = [16, 8, 4], strides = [1, 1, 1]} : vector<16x8x8xbf16> to vector<16x8x4xbf16>
    %6 = arith.maximumf %4, %5 : vector<16x8x4xbf16>
    %7 = vector.shape_cast %6 : vector<16x8x4xbf16> to vector<8x2x8x4xbf16>
    %8 = vector.extract_strided_slice %7 {offsets = [0, 0, 0, 0], sizes = [8, 1, 8, 4], strides = [1, 1, 1, 1]} : vector<8x2x8x4xbf16> to vector<8x1x8x4xbf16>
    %9 = vector.shape_cast %8 : vector<8x1x8x4xbf16> to vector<8x8x4xbf16>
    %10 = vector.extract_strided_slice %7 {offsets = [0, 1, 0, 0], sizes = [8, 1, 8, 4], strides = [1, 1, 1, 1]} : vector<8x2x8x4xbf16> to vector<8x1x8x4xbf16>
    %11 = vector.shape_cast %10 : vector<8x1x8x4xbf16> to vector<8x8x4xbf16>
    %12 = arith.maximumf %9, %11 : vector<8x8x4xbf16>
    %c0_5 = arith.constant 0 : index
    %c0_6 = arith.constant 0 : index
    %c0_7 = arith.constant 0 : index
    %c0_8 = arith.constant 0 : index
    %13 = vector.load %arg3[%c0_5, %c0_6, %c0_7, %c0_8] : memref<1x2x8x8xbf16, #tpu.memory_space<vmem>>, vector<1x2x8x8xbf16>
    %14 = vector.shape_cast %13 : vector<1x2x8x8xbf16> to vector<2x8x8xbf16>
    %15 = vector.extract_strided_slice %14 {offsets = [0, 0, 0], sizes = [2, 8, 4], strides = [1, 1, 1]} : vector<2x8x8xbf16> to vector<2x8x4xbf16>
    %16 = vector.extract_strided_slice %14 {offsets = [0, 0, 4], sizes = [2, 8, 4], strides = [1, 1, 1]} : vector<2x8x8xbf16> to vector<2x8x4xbf16>
    %17 = arith.maximumf %15, %16 : vector<2x8x4xbf16>
    %18 = vector.shape_cast %17 : vector<2x8x4xbf16> to vector<1x2x8x4xbf16>
    %19 = vector.extract_strided_slice %18 {offsets = [0, 0, 0, 0], sizes = [1, 1, 8, 4], strides = [1, 1, 1, 1]} : vector<1x2x8x4xbf16> to vector<1x1x8x4xbf16>
    %20 = vector.shape_cast %19 : vector<1x1x8x4xbf16> to vector<1x8x4xbf16>
    %21 = vector.extract_strided_slice %18 {offsets = [0, 1, 0, 0], sizes = [1, 1, 8, 4], strides = [1, 1, 1, 1]} : vector<1x2x8x4xbf16> to vector<1x1x8x4xbf16>
    %22 = vector.shape_cast %21 : vector<1x1x8x4xbf16> to vector<1x8x4xbf16>
    %23 = arith.maximumf %20, %22 : vector<1x8x4xbf16>
    %24 = vector.shape_cast %23 : vector<1x8x4xbf16> to vector<8x4xbf16>
    %c0_9 = arith.constant 0 : index
    %c0_10 = arith.constant 0 : index
    %c0_11 = arith.constant 0 : index
    %c0_12 = arith.constant 0 : index
    %25 = vector.load %arg4[%c0_9, %c0_10, %c0_11, %c0_12] : memref<1x2x8x8xbf16, #tpu.memory_space<vmem>>, vector<1x2x8x8xbf16>
    %26 = vector.shape_cast %25 : vector<1x2x8x8xbf16> to vector<2x8x8xbf16>
    %27 = vector.extract_strided_slice %26 {offsets = [0, 0, 0], sizes = [2, 8, 4], strides = [1, 1, 1]} : vector<2x8x8xbf16> to vector<2x8x4xbf16>
    %28 = vector.extract_strided_slice %26 {offsets = [0, 0, 4], sizes = [2, 8, 4], strides = [1, 1, 1]} : vector<2x8x8xbf16> to vector<2x8x4xbf16>
    %29 = arith.maximumf %27, %28 : vector<2x8x4xbf16>
    %30 = vector.shape_cast %29 : vector<2x8x4xbf16> to vector<1x2x8x4xbf16>
    %31 = vector.extract_strided_slice %30 {offsets = [0, 0, 0, 0], sizes = [1, 1, 8, 4], strides = [1, 1, 1, 1]} : vector<1x2x8x4xbf16> to vector<1x1x8x4xbf16>
    %32 = vector.shape_cast %31 : vector<1x1x8x4xbf16> to vector<1x8x4xbf16>
    %33 = vector.extract_strided_slice %30 {offsets = [0, 1, 0, 0], sizes = [1, 1, 8, 4], strides = [1, 1, 1, 1]} : vector<1x2x8x4xbf16> to vector<1x1x8x4xbf16>
    %34 = vector.shape_cast %33 : vector<1x1x8x4xbf16> to vector<1x8x4xbf16>
    %35 = arith.maximumf %32, %34 : vector<1x8x4xbf16>
    %36 = vector.shape_cast %35 : vector<1x8x4xbf16> to vector<8x4xbf16>
    %37 = vector.extract_strided_slice %12 {offsets = [0, 0, 0], sizes = [1, 8, 4], strides = [1, 1, 1]} : vector<8x8x4xbf16> to vector<1x8x4xbf16>
    %38 = vector.shape_cast %37 : vector<1x8x4xbf16> to vector<8x4xbf16>
    %c9 = arith.constant 9 : index
    %c0_13 = arith.constant 0 : index
    %39 = vector.load %arg8[%c9, %c0_13] : memref<82x8xbf16, #tpu.memory_space<vmem>>, vector<8x4xbf16>
    tpu.vector_store %arg8[%c9, %c0_13], %38 {strides = array<i32>} : memref<82x8xbf16, #tpu.memory_space<vmem>>, vector<8x4xbf16>,
    %40 = vector.extract_strided_slice %12 {offsets = [1, 0, 0], sizes = [1, 8, 4], strides = [1, 1, 1]} : vector<8x8x4xbf16> to vector<1x8x4xbf16>
    %41 = vector.shape_cast %40 : vector<1x8x4xbf16> to vector<8x4xbf16>
    %c17 = arith.constant 17 : index
    %c0_14 = arith.constant 0 : index
    %42 = vector.load %arg8[%c17, %c0_14] : memref<82x8xbf16, #tpu.memory_space<vmem>>, vector<8x4xbf16>
    tpu.vector_store %arg8[%c17, %c0_14], %41 {strides = array<i32>} : memref<82x8xbf16, #tpu.memory_space<vmem>>, vector<8x4xbf16>,
    %43 = vector.extract_strided_slice %12 {offsets = [2, 0, 0], sizes = [1, 8, 4], strides = [1, 1, 1]} : vector<8x8x4xbf16> to vector<1x8x4xbf16>
    %44 = vector.shape_cast %43 : vector<1x8x4xbf16> to vector<8x4xbf16>
    %c25 = arith.constant 25 : index
    %c0_15 = arith.constant 0 : index
    %45 = vector.load %arg8[%c25, %c0_15] : memref<82x8xbf16, #tpu.memory_space<vmem>>, vector<8x4xbf16>
    tpu.vector_store %arg8[%c25, %c0_15], %44 {strides = array<i32>} : memref<82x8xbf16, #tpu.memory_space<vmem>>, vector<8x4xbf16>,
    %46 = vector.extract_strided_slice %12 {offsets = [3, 0, 0], sizes = [1, 8, 4], strides = [1, 1, 1]} : vector<8x8x4xbf16> to vector<1x8x4xbf16>
    %47 = vector.shape_cast %46 : vector<1x8x4xbf16> to vector<8x4xbf16>
    %c33 = arith.constant 33 : index
    %c0_16 = arith.constant 0 : index
    %48 = vector.load %arg8[%c33, %c0_16] : memref<82x8xbf16, #tpu.memory_space<vmem>>, vector<8x4xbf16>
    tpu.vector_store %arg8[%c33, %c0_16], %47 {strides = array<i32>} : memref<82x8xbf16, #tpu.memory_space<vmem>>, vector<8x4xbf16>,
    %49 = vector.extract_strided_slice %12 {offsets = [4, 0, 0], sizes = [1, 8, 4], strides = [1, 1, 1]} : vector<8x8x4xbf16> to vector<1x8x4xbf16>
    %50 = vector.shape_cast %49 : vector<1x8x4xbf16> to vector<8x4xbf16>
    %c41 = arith.constant 41 : index
    %c0_17 = arith.constant 0 : index
    %51 = vector.load %arg8[%c41, %c0_17] : memref<82x8xbf16, #tpu.memory_space<vmem>>, vector<8x4xbf16>
    tpu.vector_store %arg8[%c41, %c0_17], %50 {strides = array<i32>} : memref<82x8xbf16, #tpu.memory_space<vmem>>, vector<8x4xbf16>,
    %52 = vector.extract_strided_slice %12 {offsets = [5, 0, 0], sizes = [1, 8, 4], strides = [1, 1, 1]} : vector<8x8x4xbf16> to vector<1x8x4xbf16>
    %53 = vector.shape_cast %52 : vector<1x8x4xbf16> to vector<8x4xbf16>
    %c49 = arith.constant 49 : index
    %c0_18 = arith.constant 0 : index
    %54 = vector.load %arg8[%c49, %c0_18] : memref<82x8xbf16, #tpu.memory_space<vmem>>, vector<8x4xbf16>
    tpu.vector_store %arg8[%c49, %c0_18], %53 {strides = array<i32>} : memref<82x8xbf16, #tpu.memory_space<vmem>>, vector<8x4xbf16>,
    %55 = vector.extract_strided_slice %12 {offsets = [6, 0, 0], sizes = [1, 8, 4], strides = [1, 1, 1]} : vector<8x8x4xbf16> to vector<1x8x4xbf16>
    %56 = vector.shape_cast %55 : vector<1x8x4xbf16> to vector<8x4xbf16>
    %c57 = arith.constant 57 : index
    %c0_19 = arith.constant 0 : index
    %57 = vector.load %arg8[%c57, %c0_19] : memref<82x8xbf16, #tpu.memory_space<vmem>>, vector<8x4xbf16>
    tpu.vector_store %arg8[%c57, %c0_19], %56 {strides = array<i32>} : memref<82x8xbf16, #tpu.memory_space<vmem>>, vector<8x4xbf16>,
    %58 = vector.extract_strided_slice %12 {offsets = [7, 0, 0], sizes = [1, 8, 4], strides = [1, 1, 1]} : vector<8x8x4xbf16> to vector<1x8x4xbf16>
    %59 = vector.shape_cast %58 : vector<1x8x4xbf16> to vector<8x4xbf16>
    %c65 = arith.constant 65 : index
    %c0_20 = arith.constant 0 : index
    %60 = vector.load %arg8[%c65, %c0_20] : memref<82x8xbf16, #tpu.memory_space<vmem>>, vector<8x4xbf16>
    tpu.vector_store %arg8[%c65, %c0_20], %59 {strides = array<i32>} : memref<82x8xbf16, #tpu.memory_space<vmem>>, vector<8x4xbf16>,
    %c0_i32 = arith.constant 0 : i32
    %61 = arith.cmpi sgt, %arg1, %c0_i32 : i32
    %62 = arith.extui %61 : i1 to i32
    %c0_i32_21 = arith.constant 0 : i32
    %63 = arith.cmpi ne, %62, %c0_i32_21 : i32
    scf.if %63 {
      %c1_71 = arith.constant 1 : index
      %c0_72 = arith.constant 0 : index
      %145 = vector.load %arg8[%c1_71, %c0_72] : memref<82x8xbf16, #tpu.memory_space<vmem>>, vector<8x4xbf16>
      tpu.vector_store %arg8[%c1_71, %c0_72], %24 {strides = array<i32>} : memref<82x8xbf16, #tpu.memory_space<vmem>>, vector<8x4xbf16>,
    } else {
    }
    %c0_i32_22 = arith.constant 0 : i32
    %64 = arith.cmpi slt, %arg1, %c0_i32_22 : i32
    %65 = arith.extui %64 : i1 to i32
    %c0_i32_23 = arith.constant 0 : i32
    %66 = arith.cmpi ne, %65, %c0_i32_23 : i32
    scf.if %66 {
      %c73 = arith.constant 73 : index
      %c0_71 = arith.constant 0 : index
      %145 = vector.load %arg8[%c73, %c0_71] : memref<82x8xbf16, #tpu.memory_space<vmem>>, vector<8x4xbf16>
      tpu.vector_store %arg8[%c73, %c0_71], %36 {strides = array<i32>} : memref<82x8xbf16, #tpu.memory_space<vmem>>, vector<8x4xbf16>,
    } else {
    }
    %67 = tpu.iota {dimensions = array<i32: 0>} : vector<64x1xi32>
    %c8_i32 = arith.constant 8 : i32
    %c0_i32_24 = arith.constant 0 : i32
    %68 = arith.cmpi eq, %c8_i32, %c0_i32_24 : i32
    %c1_i32 = arith.constant 1 : i32
    %69 = arith.select %68, %c1_i32, %c8_i32 : i32
    %70 = vector.broadcast %69 : i32 to vector<64x1xi32>
    %71 = arith.remsi %67, %70 : vector<64x1xi32>
    %c0_i32_25 = arith.constant 0 : i32
    %72 = vector.broadcast %c0_i32_25 : i32 to vector<64x1xi32>
    %73 = arith.cmpi ne, %71, %72 : vector<64x1xi32>
    %c0_i32_26 = arith.constant 0 : i32
    %74 = vector.broadcast %c0_i32_26 : i32 to vector<64x1xi32>
    %75 = arith.cmpi slt, %71, %74 : vector<64x1xi32>
    %c0_i32_27 = arith.constant 0 : i32
    %76 = arith.cmpi slt, %69, %c0_i32_27 : i32
    %77 = vector.broadcast %76 : i1 to vector<64x1xi1>
    %78 = vector.broadcast %77 : vector<64x1xi1> to vector<64x1xi1>
    %79 = arith.xori %75, %78 : vector<64x1xi1>
    %80 = arith.andi %79, %73 : vector<64x1xi1>
    %81 = vector.broadcast %69 : i32 to vector<64x1xi32>
    %82 = arith.addi %71, %81 : vector<64x1xi32>
    %83 = arith.select %80, %82, %71 : vector<64x1xi1>, vector<64x1xi32>
    %c0_i32_28 = arith.constant 0 : i32
    %84 = vector.broadcast %c0_i32_28 : i32 to vector<64x1xi32>
    %85 = arith.cmpi ne, %83, %84 : vector<64x1xi32>
    %c7_i32 = arith.constant 7 : i32
    %86 = vector.broadcast %c7_i32 : i32 to vector<64x1xi32>
    %87 = arith.cmpi ne, %83, %86 : vector<64x1xi32>
    %c0_29 = arith.constant 0 : index
    %c0_30 = arith.constant 0 : index
    %88 = vector.load %arg8[%c0_29, %c0_30] : memref<82x8xbf16, #tpu.memory_space<vmem>>, vector<64x8xbf16>
    %cst_31 = arith.constant 0.000000e+00 : bf16
    %89 = vector.broadcast %cst_31 : bf16 to vector<64x8xbf16>
    %90 = vector.shape_cast %85 : vector<64x1xi1> to vector<64x1xi1>
    %91 = vector.broadcast %90 : vector<64x1xi1> to vector<64x8xi1>
    %92 = arith.select %91, %88, %89 : vector<64x8xi1>, vector<64x8xbf16>
    %c0_32 = arith.constant 0 : index
    %c0_33 = arith.constant 0 : index
    %93 = vector.load %arg9[%c0_32, %c0_33] : memref<64x72xbf16, #tpu.memory_space<vmem>>, vector<64x8xbf16>
    tpu.vector_store %arg9[%c0_32, %c0_33], %92 {strides = array<i32>} : memref<64x72xbf16, #tpu.memory_space<vmem>>, vector<64x8xbf16>,
    %c1 = arith.constant 1 : index
    %c0_34 = arith.constant 0 : index
    %94 = vector.load %arg8[%c1, %c0_34] : memref<82x8xbf16, #tpu.memory_space<vmem>>, vector<64x8xbf16>
    %c0_35 = arith.constant 0 : index
    %c8 = arith.constant 8 : index
    %95 = vector.load %arg9[%c0_35, %c8] : memref<64x72xbf16, #tpu.memory_space<vmem>>, vector<64x8xbf16>
    tpu.vector_store %arg9[%c0_35, %c8], %94 {strides = array<i32>} : memref<64x72xbf16, #tpu.memory_space<vmem>>, vector<64x8xbf16>,
    %c2 = arith.constant 2 : index
    %c0_36 = arith.constant 0 : index
    %96 = vector.load %arg8[%c2, %c0_36] : memref<82x8xbf16, #tpu.memory_space<vmem>>, vector<64x8xbf16>
    %cst_37 = arith.constant 0.000000e+00 : bf16
    %97 = vector.broadcast %cst_37 : bf16 to vector<64x8xbf16>
    %98 = vector.shape_cast %87 : vector<64x1xi1> to vector<64x1xi1>
    %99 = vector.broadcast %98 : vector<64x1xi1> to vector<64x8xi1>
    %100 = arith.select %99, %96, %97 : vector<64x8xi1>, vector<64x8xbf16>
    %c0_38 = arith.constant 0 : index
    %c16 = arith.constant 16 : index
    %101 = vector.load %arg9[%c0_38, %c16] : memref<64x72xbf16, #tpu.memory_space<vmem>>, vector<64x8xbf16>
    tpu.vector_store %arg9[%c0_38, %c16], %100 {strides = array<i32>} : memref<64x72xbf16, #tpu.memory_space<vmem>>, vector<64x8xbf16>,
    %c8_39 = arith.constant 8 : index
    %c0_40 = arith.constant 0 : index
    %102 = vector.load %arg8[%c8_39, %c0_40] : memref<82x8xbf16, #tpu.memory_space<vmem>>, vector<64x8xbf16>
    %cst_41 = arith.constant 0.000000e+00 : bf16
    %103 = vector.broadcast %cst_41 : bf16 to vector<64x8xbf16>
    %104 = vector.shape_cast %85 : vector<64x1xi1> to vector<64x1xi1>
    %105 = vector.broadcast %104 : vector<64x1xi1> to vector<64x8xi1>
    %106 = arith.select %105, %102, %103 : vector<64x8xi1>, vector<64x8xbf16>
    %c0_42 = arith.constant 0 : index
    %c24 = arith.constant 24 : index
    %107 = vector.load %arg9[%c0_42, %c24] : memref<64x72xbf16, #tpu.memory_space<vmem>>, vector<64x8xbf16>
    tpu.vector_store %arg9[%c0_42, %c24], %106 {strides = array<i32>} : memref<64x72xbf16, #tpu.memory_space<vmem>>, vector<64x8xbf16>,
    %c9_43 = arith.constant 9 : index
    %c0_44 = arith.constant 0 : index
    %108 = vector.load %arg8[%c9_43, %c0_44] : memref<82x8xbf16, #tpu.memory_space<vmem>>, vector<64x8xbf16>
    %c0_45 = arith.constant 0 : index
    %c32 = arith.constant 32 : index
    %109 = vector.load %arg9[%c0_45, %c32] : memref<64x72xbf16, #tpu.memory_space<vmem>>, vector<64x8xbf16>
    tpu.vector_store %arg9[%c0_45, %c32], %108 {strides = array<i32>} : memref<64x72xbf16, #tpu.memory_space<vmem>>, vector<64x8xbf16>,
    %c10 = arith.constant 10 : index
    %c0_46 = arith.constant 0 : index
    %110 = vector.load %arg8[%c10, %c0_46] : memref<82x8xbf16, #tpu.memory_space<vmem>>, vector<64x8xbf16>
    %cst_47 = arith.constant 0.000000e+00 : bf16
    %111 = vector.broadcast %cst_47 : bf16 to vector<64x8xbf16>
    %112 = vector.shape_cast %87 : vector<64x1xi1> to vector<64x1xi1>
    %113 = vector.broadcast %112 : vector<64x1xi1> to vector<64x8xi1>
    %114 = arith.select %113, %110, %111 : vector<64x8xi1>, vector<64x8xbf16>
    %c0_48 = arith.constant 0 : index
    %c40 = arith.constant 40 : index
    %115 = vector.load %arg9[%c0_48, %c40] : memref<64x72xbf16, #tpu.memory_space<vmem>>, vector<64x8xbf16>
    tpu.vector_store %arg9[%c0_48, %c40], %114 {strides = array<i32>} : memref<64x72xbf16, #tpu.memory_space<vmem>>, vector<64x8xbf16>,
    %c16_49 = arith.constant 16 : index
    %c0_50 = arith.constant 0 : index
    %116 = vector.load %arg8[%c16_49, %c0_50] : memref<82x8xbf16, #tpu.memory_space<vmem>>, vector<64x8xbf16>
    %cst_51 = arith.constant 0.000000e+00 : bf16
    %117 = vector.broadcast %cst_51 : bf16 to vector<64x8xbf16>
    %118 = vector.shape_cast %85 : vector<64x1xi1> to vector<64x1xi1>
    %119 = vector.broadcast %118 : vector<64x1xi1> to vector<64x8xi1>
    %120 = arith.select %119, %116, %117 : vector<64x8xi1>, vector<64x8xbf16>
    %c0_52 = arith.constant 0 : index
    %c48 = arith.constant 48 : index
    %121 = vector.load %arg9[%c0_52, %c48] : memref<64x72xbf16, #tpu.memory_space<vmem>>, vector<64x8xbf16>
    tpu.vector_store %arg9[%c0_52, %c48], %120 {strides = array<i32>} : memref<64x72xbf16, #tpu.memory_space<vmem>>, vector<64x8xbf16>,
    %c17_53 = arith.constant 17 : index
    %c0_54 = arith.constant 0 : index
    %122 = vector.load %arg8[%c17_53, %c0_54] : memref<82x8xbf16, #tpu.memory_space<vmem>>, vector<64x8xbf16>
    %c0_55 = arith.constant 0 : index
    %c56 = arith.constant 56 : index
    %123 = vector.load %arg9[%c0_55, %c56] : memref<64x72xbf16, #tpu.memory_space<vmem>>, vector<64x8xbf16>
    tpu.vector_store %arg9[%c0_55, %c56], %122 {strides = array<i32>} : memref<64x72xbf16, #tpu.memory_space<vmem>>, vector<64x8xbf16>,
    %c18 = arith.constant 18 : index
    %c0_56 = arith.constant 0 : index
    %124 = vector.load %arg8[%c18, %c0_56] : memref<82x8xbf16, #tpu.memory_space<vmem>>, vector<64x8xbf16>
    %cst_57 = arith.constant 0.000000e+00 : bf16
    %125 = vector.broadcast %cst_57 : bf16 to vector<64x8xbf16>
    %126 = vector.shape_cast %87 : vector<64x1xi1> to vector<64x1xi1>
    %127 = vector.broadcast %126 : vector<64x1xi1> to vector<64x8xi1>
    %128 = arith.select %127, %124, %125 : vector<64x8xi1>, vector<64x8xbf16>
    %c0_58 = arith.constant 0 : index
    %c64 = arith.constant 64 : index
    %129 = vector.load %arg9[%c0_58, %c64] : memref<64x72xbf16, #tpu.memory_space<vmem>>, vector<64x8xbf16>
    tpu.vector_store %arg9[%c0_58, %c64], %128 {strides = array<i32>} : memref<64x72xbf16, #tpu.memory_space<vmem>>, vector<64x8xbf16>,
    %c0_59 = arith.constant 0 : index
    %c0_60 = arith.constant 0 : index
    %130 = vector.load %arg9[%c0_59, %c0_60] : memref<64x72xbf16, #tpu.memory_space<vmem>>, vector<64x72xbf16>
    %c0_61 = arith.constant 0 : index
    %c0_62 = arith.constant 0 : index
    %131 = vector.load %arg5[%c0_61, %c0_62] : memref<72x128xbf16, #tpu.memory_space<vmem>>, vector<72x128xbf16>
    %cst_63 = arith.constant dense<0.000000e+00> : vector<64x128xf32>
    %132 = tpu.matmul %130, %131, %cst_63 {dimension_numbers = #tpu.dot_dimension_numbers<[1], [0], [0], [1], [0, 0, 1, 1], [], []>} : vector<64x72xbf16>, vector<72x128xbf16>, vector<64x128xf32> -> vector<64x128xf32>
    %c0_64 = arith.constant 0 : index
    %c0_65 = arith.constant 0 : index
    %133 = vector.load %arg6[%c0_64, %c0_65] : memref<1x128xf32, #tpu.memory_space<vmem>>, vector<1x128xf32>
    %134 = vector.broadcast %133 : vector<1x128xf32> to vector<64x128xf32>
    %135 = arith.addf %132, %134 : vector<64x128xf32>
    %cst_66 = arith.constant 0.000000e+00 : f32
    %136 = vector.broadcast %cst_66 : f32 to vector<64x128xf32>
    %137 = arith.cmpf ogt, %135, %136 : vector<64x128xf32>
    %cst_67 = arith.constant 0.00999999977 : f32
    %138 = vector.broadcast %cst_67 : f32 to vector<64x128xf32>
    %139 = arith.mulf %138, %135 : vector<64x128xf32>
    %140 = arith.select %137, %135, %139 : vector<64x128xi1>, vector<64x128xf32>
    %141 = arith.truncf %140 : vector<64x128xf32> to vector<64x128xbf16>
    %c0_68 = arith.constant 0 : index
    %c0_69 = arith.constant 0 : index
    %c0_70 = arith.constant 0 : index
    %142 = vector.load %arg7[%c0_68, %c0_69, %c0_70] : memref<1x64x128xbf16, #tpu.memory_space<vmem>>, vector<1x64x128xbf16>
    %143 = vector.shape_cast %142 : vector<1x64x128xbf16> to vector<64x128xbf16>
    %144 = vector.shape_cast %141 : vector<64x128xbf16> to vector<1x64x128xbf16>
    tpu.vector_store %arg7[%c0_68, %c0_69, %c0_70], %144 {strides = array<i32>} : memref<1x64x128xbf16, #tpu.memory_space<vmem>>, vector<1x64x128xbf16>,
    return
  }
  func.func @transform_0(%arg0: i32, %arg1: i32) -> (i32, i32, i32, i32) {
    %c0_i32 = arith.constant 0 : i32
    %c0_i32_0 = arith.constant 0 : i32
    %c0_i32_1 = arith.constant 0 : i32
    return %arg0, %arg1, %c0_i32, %c0_i32_0 : i32, i32, i32, i32
  }
  func.func @transform_1(%arg0: i32, %arg1: i32) -> (i32, i32, i32, i32) {
    %c8_i32 = arith.constant 8 : i32
    %0 = arith.muli %arg1, %c8_i32 : i32
    %c1_i32 = arith.constant 1 : i32
    %1 = arith.subi %0, %c1_i32 : i32
    %c0_i32 = arith.constant 0 : i32
    %2 = arith.maxsi %1, %c0_i32 : i32
    %c0_i32_0 = arith.constant 0 : i32
    %c0_i32_1 = arith.constant 0 : i32
    %c0_i32_2 = arith.constant 0 : i32
    return %arg0, %2, %c0_i32_0, %c0_i32_1 : i32, i32, i32, i32
  }
  func.func @transform_2(%arg0: i32, %arg1: i32) -> (i32, i32, i32, i32) {
    %c1_i32 = arith.constant 1 : i32
    %0 = arith.addi %arg1, %c1_i32 : i32
    %c8_i32 = arith.constant 8 : i32
    %1 = arith.muli %0, %c8_i32 : i32
    %c7_i32 = arith.constant 7 : i32
    %2 = arith.minsi %1, %c7_i32 : i32
    %c0_i32 = arith.constant 0 : i32
    %c0_i32_0 = arith.constant 0 : i32
    %c0_i32_1 = arith.constant 0 : i32
    return %arg0, %2, %c0_i32, %c0_i32_0 : i32, i32, i32, i32
  }
  func.func @transform_3(%arg0: i32, %arg1: i32) -> (i32, i32) {
    %c0_i32 = arith.constant 0 : i32
    %c0_i32_0 = arith.constant 0 : i32
    %c0_i32_1 = arith.constant 0 : i32
    return %c0_i32, %c0_i32_0 : i32, i32
  }
  func.func @transform_4(%arg0: i32, %arg1: i32) -> (i32, i32) {
    %c0_i32 = arith.constant 0 : i32
    %c0_i32_0 = arith.constant 0 : i32
    %c0_i32_1 = arith.constant 0 : i32
    return %c0_i32, %c0_i32_0 : i32, i32
  }
  func.func @transform_5(%arg0: i32, %arg1: i32) -> (i32, i32, i32) {
    %c0_i32 = arith.constant 0 : i32
    %c0_i32_0 = arith.constant 0 : i32
    return %arg0, %arg1, %c0_i32 : i32, i32, i32
  }
}

module attributes {stable_mosaic.version = 11 : i64} {
  func.func @_conv_kernel(%arg0: i32, %arg1: i32, %arg2: memref<1x64x128xbf16, #tpu.memory_space<vmem>>, %arg3: memref<1x8x128xbf16, #tpu.memory_space<vmem>>, %arg4: memref<1x8x128xbf16, #tpu.memory_space<vmem>>, %arg5: memref<1152x128xbf16, #tpu.memory_space<vmem>>, %arg6: memref<1x128xf32, #tpu.memory_space<vmem>>, %arg7: memref<1x64x128xf32, #tpu.memory_space<vmem>>, %arg8: memref<82x128xbf16, #tpu.memory_space<vmem>>, %arg9: memref<64x1152xbf16, #tpu.memory_space<vmem>>) attributes {dimension_semantics = [#tpu.dimension_semantics<parallel>, #tpu.dimension_semantics<parallel>], iteration_bounds = array<i64: 2, 1>, scalar_prefetch = 0 : i64, scratch_operands = 2 : i64, tpu.core_type = #tpu.core_type<tc>, window_params = [{transform_indices = @transform_0, window_bounds = array<i64: 1, 64, 128>}, {transform_indices = @transform_1, window_bounds = array<i64: 1, 8, 128>}, {transform_indices = @transform_2, window_bounds = array<i64: 1, 8, 128>}, {pipeline_mode = #tpu.pipeline_mode<synchronous>, transform_indices = @transform_3, window_bounds = array<i64: 1152, 128>}, {pipeline_mode = #tpu.pipeline_mode<synchronous>, transform_indices = @transform_4, window_bounds = array<i64: 1, 128>}, {transform_indices = @transform_5, window_bounds = array<i64: 1, 64, 128>}]} {
    %cst = arith.constant 0.000000e+00 : bf16
    %0 = vector.broadcast %cst : bf16 to vector<82x128xbf16>
    %c0 = arith.constant 0 : index
    %c0_0 = arith.constant 0 : index
    %1 = vector.load %arg8[%c0, %c0_0] : memref<82x128xbf16, #tpu.memory_space<vmem>>, vector<82x128xbf16>
    tpu.vector_store %arg8[%c0, %c0_0], %0 {strides = array<i32>} : memref<82x128xbf16, #tpu.memory_space<vmem>>, vector<82x128xbf16>,
    %c0_1 = arith.constant 0 : index
    %c0_2 = arith.constant 0 : index
    %c0_3 = arith.constant 0 : index
    %2 = vector.load %arg2[%c0_1, %c0_2, %c0_3] : memref<1x64x128xbf16, #tpu.memory_space<vmem>>, vector<1x64x128xbf16>
    %3 = vector.shape_cast %2 : vector<1x64x128xbf16> to vector<64x128xbf16>
    %c9 = arith.constant 9 : index
    %c0_4 = arith.constant 0 : index
    %4 = vector.load %arg8[%c9, %c0_4] : memref<82x128xbf16, #tpu.memory_space<vmem>>, vector<64x128xbf16>
    tpu.vector_store %arg8[%c9, %c0_4], %3 {strides = array<i32>} : memref<82x128xbf16, #tpu.memory_space<vmem>>, vector<64x128xbf16>,
    %c0_5 = arith.constant 0 : index
    %c0_6 = arith.constant 0 : index
    %c0_7 = arith.constant 0 : index
    %5 = vector.load %arg3[%c0_5, %c0_6, %c0_7] : memref<1x8x128xbf16, #tpu.memory_space<vmem>>, vector<1x8x128xbf16>
    %6 = vector.shape_cast %5 : vector<1x8x128xbf16> to vector<8x128xbf16>
    %c0_8 = arith.constant 0 : index
    %c0_9 = arith.constant 0 : index
    %c0_10 = arith.constant 0 : index
    %7 = vector.load %arg4[%c0_8, %c0_9, %c0_10] : memref<1x8x128xbf16, #tpu.memory_space<vmem>>, vector<1x8x128xbf16>
    %8 = vector.shape_cast %7 : vector<1x8x128xbf16> to vector<8x128xbf16>
    %c0_i32 = arith.constant 0 : i32
    %9 = arith.cmpi sgt, %arg1, %c0_i32 : i32
    %10 = arith.extui %9 : i1 to i32
    %c0_i32_11 = arith.constant 0 : i32
    %11 = arith.cmpi ne, %10, %c0_i32_11 : i32
    scf.if %11 {
      %c1_58 = arith.constant 1 : index
      %c0_59 = arith.constant 0 : index
      %92 = vector.load %arg8[%c1_58, %c0_59] : memref<82x128xbf16, #tpu.memory_space<vmem>>, vector<8x128xbf16>
      tpu.vector_store %arg8[%c1_58, %c0_59], %6 {strides = array<i32>} : memref<82x128xbf16, #tpu.memory_space<vmem>>, vector<8x128xbf16>,
    } else {
    }
    %c0_i32_12 = arith.constant 0 : i32
    %12 = arith.cmpi slt, %arg1, %c0_i32_12 : i32
    %13 = arith.extui %12 : i1 to i32
    %c0_i32_13 = arith.constant 0 : i32
    %14 = arith.cmpi ne, %13, %c0_i32_13 : i32
    scf.if %14 {
      %c73 = arith.constant 73 : index
      %c0_58 = arith.constant 0 : index
      %92 = vector.load %arg8[%c73, %c0_58] : memref<82x128xbf16, #tpu.memory_space<vmem>>, vector<8x128xbf16>
      tpu.vector_store %arg8[%c73, %c0_58], %8 {strides = array<i32>} : memref<82x128xbf16, #tpu.memory_space<vmem>>, vector<8x128xbf16>,
    } else {
    }
    %15 = tpu.iota {dimensions = array<i32: 0>} : vector<64x1xi32>
    %c8_i32 = arith.constant 8 : i32
    %c0_i32_14 = arith.constant 0 : i32
    %16 = arith.cmpi eq, %c8_i32, %c0_i32_14 : i32
    %c1_i32 = arith.constant 1 : i32
    %17 = arith.select %16, %c1_i32, %c8_i32 : i32
    %18 = vector.broadcast %17 : i32 to vector<64x1xi32>
    %19 = arith.remsi %15, %18 : vector<64x1xi32>
    %c0_i32_15 = arith.constant 0 : i32
    %20 = vector.broadcast %c0_i32_15 : i32 to vector<64x1xi32>
    %21 = arith.cmpi ne, %19, %20 : vector<64x1xi32>
    %c0_i32_16 = arith.constant 0 : i32
    %22 = vector.broadcast %c0_i32_16 : i32 to vector<64x1xi32>
    %23 = arith.cmpi slt, %19, %22 : vector<64x1xi32>
    %c0_i32_17 = arith.constant 0 : i32
    %24 = arith.cmpi slt, %17, %c0_i32_17 : i32
    %25 = vector.broadcast %24 : i1 to vector<64x1xi1>
    %26 = vector.broadcast %25 : vector<64x1xi1> to vector<64x1xi1>
    %27 = arith.xori %23, %26 : vector<64x1xi1>
    %28 = arith.andi %27, %21 : vector<64x1xi1>
    %29 = vector.broadcast %17 : i32 to vector<64x1xi32>
    %30 = arith.addi %19, %29 : vector<64x1xi32>
    %31 = arith.select %28, %30, %19 : vector<64x1xi1>, vector<64x1xi32>
    %c0_i32_18 = arith.constant 0 : i32
    %32 = vector.broadcast %c0_i32_18 : i32 to vector<64x1xi32>
    %33 = arith.cmpi ne, %31, %32 : vector<64x1xi32>
    %c7_i32 = arith.constant 7 : i32
    %34 = vector.broadcast %c7_i32 : i32 to vector<64x1xi32>
    %35 = arith.cmpi ne, %31, %34 : vector<64x1xi32>
    %c0_19 = arith.constant 0 : index
    %c0_20 = arith.constant 0 : index
    %36 = vector.load %arg8[%c0_19, %c0_20] : memref<82x128xbf16, #tpu.memory_space<vmem>>, vector<64x128xbf16>
    %cst_21 = arith.constant 0.000000e+00 : bf16
    %37 = vector.broadcast %cst_21 : bf16 to vector<64x128xbf16>
    %38 = vector.shape_cast %33 : vector<64x1xi1> to vector<64x1xi1>
    %39 = vector.broadcast %38 : vector<64x1xi1> to vector<64x128xi1>
    %40 = arith.select %39, %36, %37 : vector<64x128xi1>, vector<64x128xbf16>
    %c0_22 = arith.constant 0 : index
    %c0_23 = arith.constant 0 : index
    %41 = vector.load %arg9[%c0_22, %c0_23] : memref<64x1152xbf16, #tpu.memory_space<vmem>>, vector<64x128xbf16>
    tpu.vector_store %arg9[%c0_22, %c0_23], %40 {strides = array<i32>} : memref<64x1152xbf16, #tpu.memory_space<vmem>>, vector<64x128xbf16>,
    %c1 = arith.constant 1 : index
    %c0_24 = arith.constant 0 : index
    %42 = vector.load %arg8[%c1, %c0_24] : memref<82x128xbf16, #tpu.memory_space<vmem>>, vector<64x128xbf16>
    %c0_25 = arith.constant 0 : index
    %c128 = arith.constant 128 : index
    %43 = vector.load %arg9[%c0_25, %c128] : memref<64x1152xbf16, #tpu.memory_space<vmem>>, vector<64x128xbf16>
    tpu.vector_store %arg9[%c0_25, %c128], %42 {strides = array<i32>} : memref<64x1152xbf16, #tpu.memory_space<vmem>>, vector<64x128xbf16>,
    %c2 = arith.constant 2 : index
    %c0_26 = arith.constant 0 : index
    %44 = vector.load %arg8[%c2, %c0_26] : memref<82x128xbf16, #tpu.memory_space<vmem>>, vector<64x128xbf16>
    %cst_27 = arith.constant 0.000000e+00 : bf16
    %45 = vector.broadcast %cst_27 : bf16 to vector<64x128xbf16>
    %46 = vector.shape_cast %35 : vector<64x1xi1> to vector<64x1xi1>
    %47 = vector.broadcast %46 : vector<64x1xi1> to vector<64x128xi1>
    %48 = arith.select %47, %44, %45 : vector<64x128xi1>, vector<64x128xbf16>
    %c0_28 = arith.constant 0 : index
    %c256 = arith.constant 256 : index
    %49 = vector.load %arg9[%c0_28, %c256] : memref<64x1152xbf16, #tpu.memory_space<vmem>>, vector<64x128xbf16>
    tpu.vector_store %arg9[%c0_28, %c256], %48 {strides = array<i32>} : memref<64x1152xbf16, #tpu.memory_space<vmem>>, vector<64x128xbf16>,
    %c8 = arith.constant 8 : index
    %c0_29 = arith.constant 0 : index
    %50 = vector.load %arg8[%c8, %c0_29] : memref<82x128xbf16, #tpu.memory_space<vmem>>, vector<64x128xbf16>
    %cst_30 = arith.constant 0.000000e+00 : bf16
    %51 = vector.broadcast %cst_30 : bf16 to vector<64x128xbf16>
    %52 = vector.shape_cast %33 : vector<64x1xi1> to vector<64x1xi1>
    %53 = vector.broadcast %52 : vector<64x1xi1> to vector<64x128xi1>
    %54 = arith.select %53, %50, %51 : vector<64x128xi1>, vector<64x128xbf16>
    %c0_31 = arith.constant 0 : index
    %c384 = arith.constant 384 : index
    %55 = vector.load %arg9[%c0_31, %c384] : memref<64x1152xbf16, #tpu.memory_space<vmem>>, vector<64x128xbf16>
    tpu.vector_store %arg9[%c0_31, %c384], %54 {strides = array<i32>} : memref<64x1152xbf16, #tpu.memory_space<vmem>>, vector<64x128xbf16>,
    %c9_32 = arith.constant 9 : index
    %c0_33 = arith.constant 0 : index
    %56 = vector.load %arg8[%c9_32, %c0_33] : memref<82x128xbf16, #tpu.memory_space<vmem>>, vector<64x128xbf16>
    %c0_34 = arith.constant 0 : index
    %c512 = arith.constant 512 : index
    %57 = vector.load %arg9[%c0_34, %c512] : memref<64x1152xbf16, #tpu.memory_space<vmem>>, vector<64x128xbf16>
    tpu.vector_store %arg9[%c0_34, %c512], %56 {strides = array<i32>} : memref<64x1152xbf16, #tpu.memory_space<vmem>>, vector<64x128xbf16>,
    %c10 = arith.constant 10 : index
    %c0_35 = arith.constant 0 : index
    %58 = vector.load %arg8[%c10, %c0_35] : memref<82x128xbf16, #tpu.memory_space<vmem>>, vector<64x128xbf16>
    %cst_36 = arith.constant 0.000000e+00 : bf16
    %59 = vector.broadcast %cst_36 : bf16 to vector<64x128xbf16>
    %60 = vector.shape_cast %35 : vector<64x1xi1> to vector<64x1xi1>
    %61 = vector.broadcast %60 : vector<64x1xi1> to vector<64x128xi1>
    %62 = arith.select %61, %58, %59 : vector<64x128xi1>, vector<64x128xbf16>
    %c0_37 = arith.constant 0 : index
    %c640 = arith.constant 640 : index
    %63 = vector.load %arg9[%c0_37, %c640] : memref<64x1152xbf16, #tpu.memory_space<vmem>>, vector<64x128xbf16>
    tpu.vector_store %arg9[%c0_37, %c640], %62 {strides = array<i32>} : memref<64x1152xbf16, #tpu.memory_space<vmem>>, vector<64x128xbf16>,
    %c16 = arith.constant 16 : index
    %c0_38 = arith.constant 0 : index
    %64 = vector.load %arg8[%c16, %c0_38] : memref<82x128xbf16, #tpu.memory_space<vmem>>, vector<64x128xbf16>
    %cst_39 = arith.constant 0.000000e+00 : bf16
    %65 = vector.broadcast %cst_39 : bf16 to vector<64x128xbf16>
    %66 = vector.shape_cast %33 : vector<64x1xi1> to vector<64x1xi1>
    %67 = vector.broadcast %66 : vector<64x1xi1> to vector<64x128xi1>
    %68 = arith.select %67, %64, %65 : vector<64x128xi1>, vector<64x128xbf16>
    %c0_40 = arith.constant 0 : index
    %c768 = arith.constant 768 : index
    %69 = vector.load %arg9[%c0_40, %c768] : memref<64x1152xbf16, #tpu.memory_space<vmem>>, vector<64x128xbf16>
    tpu.vector_store %arg9[%c0_40, %c768], %68 {strides = array<i32>} : memref<64x1152xbf16, #tpu.memory_space<vmem>>, vector<64x128xbf16>,
    %c17 = arith.constant 17 : index
    %c0_41 = arith.constant 0 : index
    %70 = vector.load %arg8[%c17, %c0_41] : memref<82x128xbf16, #tpu.memory_space<vmem>>, vector<64x128xbf16>
    %c0_42 = arith.constant 0 : index
    %c896 = arith.constant 896 : index
    %71 = vector.load %arg9[%c0_42, %c896] : memref<64x1152xbf16, #tpu.memory_space<vmem>>, vector<64x128xbf16>
    tpu.vector_store %arg9[%c0_42, %c896], %70 {strides = array<i32>} : memref<64x1152xbf16, #tpu.memory_space<vmem>>, vector<64x128xbf16>,
    %c18 = arith.constant 18 : index
    %c0_43 = arith.constant 0 : index
    %72 = vector.load %arg8[%c18, %c0_43] : memref<82x128xbf16, #tpu.memory_space<vmem>>, vector<64x128xbf16>
    %cst_44 = arith.constant 0.000000e+00 : bf16
    %73 = vector.broadcast %cst_44 : bf16 to vector<64x128xbf16>
    %74 = vector.shape_cast %35 : vector<64x1xi1> to vector<64x1xi1>
    %75 = vector.broadcast %74 : vector<64x1xi1> to vector<64x128xi1>
    %76 = arith.select %75, %72, %73 : vector<64x128xi1>, vector<64x128xbf16>
    %c0_45 = arith.constant 0 : index
    %c1024 = arith.constant 1024 : index
    %77 = vector.load %arg9[%c0_45, %c1024] : memref<64x1152xbf16, #tpu.memory_space<vmem>>, vector<64x128xbf16>
    tpu.vector_store %arg9[%c0_45, %c1024], %76 {strides = array<i32>} : memref<64x1152xbf16, #tpu.memory_space<vmem>>, vector<64x128xbf16>,
    %c0_46 = arith.constant 0 : index
    %c0_47 = arith.constant 0 : index
    %78 = vector.load %arg9[%c0_46, %c0_47] : memref<64x1152xbf16, #tpu.memory_space<vmem>>, vector<64x1152xbf16>
    %c0_48 = arith.constant 0 : index
    %c0_49 = arith.constant 0 : index
    %79 = vector.load %arg5[%c0_48, %c0_49] : memref<1152x128xbf16, #tpu.memory_space<vmem>>, vector<1152x128xbf16>
    %cst_50 = arith.constant dense<0.000000e+00> : vector<64x128xf32>
    %80 = tpu.matmul %78, %79, %cst_50 {dimension_numbers = #tpu.dot_dimension_numbers<[1], [0], [0], [1], [0, 0, 1, 1], [], []>} : vector<64x1152xbf16>, vector<1152x128xbf16>, vector<64x128xf32> -> vector<64x128xf32>
    %c0_51 = arith.constant 0 : index
    %c0_52 = arith.constant 0 : index
    %81 = vector.load %arg6[%c0_51, %c0_52] : memref<1x128xf32, #tpu.memory_space<vmem>>, vector<1x128xf32>
    %82 = vector.broadcast %81 : vector<1x128xf32> to vector<64x128xf32>
    %83 = arith.addf %80, %82 : vector<64x128xf32>
    %cst_53 = arith.constant 0.000000e+00 : f32
    %84 = vector.broadcast %cst_53 : f32 to vector<64x128xf32>
    %85 = arith.cmpf ogt, %83, %84 : vector<64x128xf32>
    %cst_54 = arith.constant 0.00999999977 : f32
    %86 = vector.broadcast %cst_54 : f32 to vector<64x128xf32>
    %87 = arith.mulf %86, %83 : vector<64x128xf32>
    %88 = arith.select %85, %83, %87 : vector<64x128xi1>, vector<64x128xf32>
    %c0_55 = arith.constant 0 : index
    %c0_56 = arith.constant 0 : index
    %c0_57 = arith.constant 0 : index
    %89 = vector.load %arg7[%c0_55, %c0_56, %c0_57] : memref<1x64x128xf32, #tpu.memory_space<vmem>>, vector<1x64x128xf32>
    %90 = vector.shape_cast %89 : vector<1x64x128xf32> to vector<64x128xf32>
    %91 = vector.shape_cast %88 : vector<64x128xf32> to vector<1x64x128xf32>
    tpu.vector_store %arg7[%c0_55, %c0_56, %c0_57], %91 {strides = array<i32>} : memref<1x64x128xf32, #tpu.memory_space<vmem>>, vector<1x64x128xf32>,
    return
  }
  func.func @transform_0(%arg0: i32, %arg1: i32) -> (i32, i32, i32) {
    %c0_i32 = arith.constant 0 : i32
    %c0_i32_0 = arith.constant 0 : i32
    return %arg0, %arg1, %c0_i32 : i32, i32, i32
  }
  func.func @transform_1(%arg0: i32, %arg1: i32) -> (i32, i32, i32) {
    %c8_i32 = arith.constant 8 : i32
    %0 = arith.muli %arg1, %c8_i32 : i32
    %c1_i32 = arith.constant 1 : i32
    %1 = arith.subi %0, %c1_i32 : i32
    %c0_i32 = arith.constant 0 : i32
    %2 = arith.maxsi %1, %c0_i32 : i32
    %c0_i32_0 = arith.constant 0 : i32
    %c0_i32_1 = arith.constant 0 : i32
    return %arg0, %2, %c0_i32_0 : i32, i32, i32
  }
  func.func @transform_2(%arg0: i32, %arg1: i32) -> (i32, i32, i32) {
    %c1_i32 = arith.constant 1 : i32
    %0 = arith.addi %arg1, %c1_i32 : i32
    %c8_i32 = arith.constant 8 : i32
    %1 = arith.muli %0, %c8_i32 : i32
    %c7_i32 = arith.constant 7 : i32
    %2 = arith.minsi %1, %c7_i32 : i32
    %c0_i32 = arith.constant 0 : i32
    %c0_i32_0 = arith.constant 0 : i32
    return %arg0, %2, %c0_i32 : i32, i32, i32
  }
  func.func @transform_3(%arg0: i32, %arg1: i32) -> (i32, i32) {
    %c0_i32 = arith.constant 0 : i32
    %c0_i32_0 = arith.constant 0 : i32
    %c0_i32_1 = arith.constant 0 : i32
    return %c0_i32, %c0_i32_0 : i32, i32
  }
  func.func @transform_4(%arg0: i32, %arg1: i32) -> (i32, i32) {
    %c0_i32 = arith.constant 0 : i32
    %c0_i32_0 = arith.constant 0 : i32
    %c0_i32_1 = arith.constant 0 : i32
    return %c0_i32, %c0_i32_0 : i32, i32
  }
  func.func @transform_5(%arg0: i32, %arg1: i32) -> (i32, i32, i32) {
    %c0_i32 = arith.constant 0 : i32
    %c0_i32_0 = arith.constant 0 : i32
    return %arg0, %arg1, %c0_i32 : i32, i32, i32
  }
}

</mosaic_0001>

<llo_original>
// kernel: down_forward.2
$region0: #{down_forward.2}
  #allocation0 [shape = 'u32[]', space=smem, size = 0x4, offset = 0x4, fixed_abs, tag = 'smem constant byte address 0x4 - core index']
  #allocation1 [shape = 'u32[144,128]{1,0:T(1,128)}', space=vmem, size = 0x12000, scoped, tag = 'internal scratch']
  #allocation2 [shape = 'bf16[82,8]{1,0:T(8,128)(2,1)}', space=vmem, size = 0x5800, scoped, tag = 'scratch operand']
  #allocation3 [shape = 'bf16[64,72]{1,0:T(16,128)(2,1)}', space=vmem, size = 0x4000, scoped, tag = 'scratch operand']
  %s0 = inlined_call_operand.vmem [shape: bf16[2,16,8,8], index: 0, kind: input, shape index: {}, may-alias: {0,1,2}]
  %s1 = inlined_call_operand.vmem [shape: bf16[2,16,8,8], index: 1, kind: input, shape index: {}, may-alias: {0,1,2}]
  %s2 = inlined_call_operand.vmem [shape: bf16[2,16,8,8], index: 2, kind: input, shape index: {}, may-alias: {0,1,2}]
  %s3 = inlined_call_operand.hbm [shape: bf16[72,128], index: 3, kind: input, shape index: {}]
  %s4 = inlined_call_operand.hbm [shape: f32[1,128], index: 4, kind: input, shape index: {}]
  %s5 = inlined_call_operand.vmem [shape: bf16[2,64,128], index: 5, kind: output, shape index: {}]
  %s6 = sld [smem:[#allocation0]]
  $region69: #{down_forward.2} parent=0
    _
  %s8 = ssub.s32 1, %s6
  %s9 = scalar_select 0, %s8, %s6
  $region1: #{down_forward.2} parent=0
    #allocation4 [shape = 'u8[18432]{0}', space=vmem, size = 0x4800, scoped, tag = 'input window, operand 3, single buffered']
    #allocation5 [shape = 's32[2]{0}', space=sflag, size = 0x8, scoped, tag = 'scoped memory for down_forward.2']
    #allocation6 [shape = 'u8[512]{0}', space=vmem, size = 0x400, scoped, tag = 'input window, operand 4, single buffered']
    #allocation7 [shape = 's32[1]{0}', space=sflag, size = 0x4, scoped, tag = 'scoped memory for down_forward.2']
    %10 = vsyncpa [#allocation5], 0
    %11 = vsyncpa [#allocation7], 0
    loop: start=0, step=1, limit=4
    $region2: #{down_forward.2} parent=1 // loop_pre_header
      _
    $region3: #{down_forward.2} parent=1 // loop_header
      %s13 = sphi 0, %s17
      %p14 = scmp.ge.s32.totalorder %s13, 4
      %s20 = sphi 0, %s32
      %s21 = sphi 0, %s28
      %s22 = sphi 0, %s20
      %s23 = sphi 0, %s21
      %s24 = sphi 0, %s22
      %s25 = sphi 0, %s23
      %s37 = sphi 0, %s39
      %s40 = sphi 0, %s37
      %s41 = sphi 0, %s40
      %s57 = sphi 0, %s41
      %s73 = sphi 0, %s75
      %s76 = sphi 0, %s73
      %s77 = sphi 0, %s76
      %s93 = sphi 0, %s77
      %s109 = sphi 0, %s111
      %s112 = sphi 0, %s109
      %s113 = sphi 0, %s112
      %s129 = sphi 0, %s113
      %s133 = sphi 0, %s133
      %s135 = sphi 0, %s133
      %s136 = sphi 0, %s135
      %s150 = sphi 0, %s136
      %s154 = sphi 0, %s154
      %s156 = sphi 0, %s154
      %s157 = sphi 0, %s156
      %s171 = sphi 0, %s157
      %s179 = sphi 0, %s181
      %s182 = sphi 0, %s179
      %s183 = sphi 0, %s182
      %s199 = sphi 0, %s183
    $region4: #{down_forward.2} parent=1 // loop_header_branch
      %16 = sbr.rel (%p14) target = $region8
    $region5: #{down_forward.2} parent=1 // loop_body
      %s18 = ssub.s32 %s13, 1
      %s19 = ssub.s32 %s13, 2
      %s26 = sadd.s32 1, %s21
      %p27 = scmp.ge.s32.totalorder %s26, 1
      %s28 = scalar_select %p27, 0, %s26
      %s29 = sadd.s32 1, %s20
      %s30 = scalar_select %p27, %s29, %s20
      %p31 = scmp.ge.s32.totalorder %s30, 2
      %s32 = scalar_select %p31, 0, %s30
      %s33 = ssub.s32 %s20, %s32
      %s34 = ssub.s32 %s21, %s28
      %s35 = sor.u32 %s33, %s34
      %p36 = scmp.eq.s32.totalorder %s35, 0
      %s38 = sadd.s32 %s37, 1
      %s39 = scalar_select %p36, %s37, %s38
      %p42 = pneg %p36
      %p43 = scmp.eq.s32.totalorder %s13, 1
      %p44 = por %p42, %p43
      %p45 = scmp.ne.s32.totalorder %s37, %s40
      %p46 = scmp.eq.s32.totalorder %s13, 0
      %p47 = por %p45, %p46
      %p48 = scmp.ne.s32.totalorder %s37, %s40
      %p49 = scmp.eq.s32.totalorder %s18, 1
      %p50 = por %p48, %p49
      %p51 = scmp.ne.s32.totalorder %s40, %s41
      %p52 = scmp.eq.s32.totalorder %s18, 0
      %p53 = por %p51, %p52
      %p54 = scmp.ne.s32.totalorder %s40, %s41
      %p55 = scmp.eq.s32.totalorder %s19, 1
      %p56 = por %p54, %p55
      %p58 = scmp.ne.s32.totalorder %s41, %s57
      %p59 = scmp.eq.s32.totalorder %s19, 0
      %p60 = por %p58, %p59
      %s61 = smul.u32 %s21, 8
      %s62 = ssub.s32 %s61, 1
      %p63 = scmp.gt.s32.totalorder %s62, 0
      %s64 = scalar_select %p63, %s62, 0
      %s65 = smul.u32 %s28, 8
      %s66 = ssub.s32 %s65, 1
      %p67 = scmp.gt.s32.totalorder %s66, 0
      %s68 = scalar_select %p67, %s66, 0
      %s69 = ssub.s32 %s20, %s32
      %s70 = ssub.s32 %s64, %s68
      %s71 = sor.u32 %s69, %s70
      %p72 = scmp.eq.s32.totalorder %s71, 0
      %s74 = sadd.s32 %s73, 1
      %s75 = scalar_select %p72, %s73, %s74
      %p78 = pneg %p72
      %p79 = scmp.eq.s32.totalorder %s13, 1
      %p80 = por %p78, %p79
      %p81 = scmp.ne.s32.totalorder %s73, %s76
      %p82 = scmp.eq.s32.totalorder %s13, 0
      %p83 = por %p81, %p82
      %p84 = scmp.ne.s32.totalorder %s73, %s76
      %p85 = scmp.eq.s32.totalorder %s18, 1
      %p86 = por %p84, %p85
      %p87 = scmp.ne.s32.totalorder %s76, %s77
      %p88 = scmp.eq.s32.totalorder %s18, 0
      %p89 = por %p87, %p88
      %p90 = scmp.ne.s32.totalorder %s76, %s77
      %p91 = scmp.eq.s32.totalorder %s19, 1
      %p92 = por %p90, %p91
      %p94 = scmp.ne.s32.totalorder %s77, %s93
      %p95 = scmp.eq.s32.totalorder %s19, 0
      %p96 = por %p94, %p95
      %s97 = sadd.s32 %s21, 1
      %s98 = smul.u32 %s97, 8
      %p99 = scmp.lt.s32.totalorder %s98, 7
      %s100 = scalar_select %p99, %s98, 7
      %s101 = sadd.s32 %s28, 1
      %s102 = smul.u32 %s101, 8
      %p103 = scmp.lt.s32.totalorder %s102, 7
      %s104 = scalar_select %p103, %s102, 7
      %s105 = ssub.s32 %s20, %s32
      %s106 = ssub.s32 %s100, %s104
      %s107 = sor.u32 %s105, %s106
      %p108 = scmp.eq.s32.totalorder %s107, 0
      %s110 = sadd.s32 %s109, 1
      %s111 = scalar_select %p108, %s109, %s110
      %p114 = pneg %p108
      %p115 = scmp.eq.s32.totalorder %s13, 1
      %p116 = por %p114, %p115
      %p117 = scmp.ne.s32.totalorder %s109, %s112
      %p118 = scmp.eq.s32.totalorder %s13, 0
      %p119 = por %p117, %p118
      %p120 = scmp.ne.s32.totalorder %s109, %s112
      %p121 = scmp.eq.s32.totalorder %s18, 1
      %p122 = por %p120, %p121
      %p123 = scmp.ne.s32.totalorder %s112, %s113
      %p124 = scmp.eq.s32.totalorder %s18, 0
      %p125 = por %p123, %p124
      %p126 = scmp.ne.s32.totalorder %s112, %s113
      %p127 = scmp.eq.s32.totalorder %s19, 1
      %p128 = por %p126, %p127
      %p130 = scmp.ne.s32.totalorder %s113, %s129
      %p131 = scmp.eq.s32.totalorder %s19, 0
      %p132 = por %p130, %p131
      %s134 = sadd.s32 %s133, 1
      %p137 = scmp.eq.s32.totalorder %s13, 1
      %p138 = scmp.ne.s32.totalorder %s133, %s135
      %p139 = scmp.eq.s32.totalorder %s13, 0
      %p140 = por %p138, %p139
      %p141 = scmp.ne.s32.totalorder %s133, %s135
      %p142 = scmp.eq.s32.totalorder %s18, 1
      %p143 = por %p141, %p142
      %p144 = scmp.ne.s32.totalorder %s135, %s136
      %p145 = scmp.eq.s32.totalorder %s18, 0
      %p146 = por %p144, %p145
      %p147 = scmp.ne.s32.totalorder %s135, %s136
      %p148 = scmp.eq.s32.totalorder %s19, 1
      %p149 = por %p147, %p148
      %p151 = scmp.ne.s32.totalorder %s136, %s150
      %p152 = scmp.eq.s32.totalorder %s19, 0
      %p153 = por %p151, %p152
      %s155 = sadd.s32 %s154, 1
      %p158 = scmp.eq.s32.totalorder %s13, 1
      %p159 = scmp.ne.s32.totalorder %s154, %s156
      %p160 = scmp.eq.s32.totalorder %s13, 0
      %p161 = por %p159, %p160
      %p162 = scmp.ne.s32.totalorder %s154, %s156
      %p163 = scmp.eq.s32.totalorder %s18, 1
      %p164 = por %p162, %p163
      %p165 = scmp.ne.s32.totalorder %s156, %s157
      %p166 = scmp.eq.s32.totalorder %s18, 0
      %p167 = por %p165, %p166
      %p168 = scmp.ne.s32.totalorder %s156, %s157
      %p169 = scmp.eq.s32.totalorder %s19, 1
      %p170 = por %p168, %p169
      %p172 = scmp.ne.s32.totalorder %s157, %s171
      %p173 = scmp.eq.s32.totalorder %s19, 0
      %p174 = por %p172, %p173
      %s175 = ssub.s32 %s20, %s32
      %s176 = ssub.s32 %s21, %s28
      %s177 = sor.u32 %s175, %s176
      %p178 = scmp.eq.s32.totalorder %s177, 0
      %s180 = sadd.s32 %s179, 1
      %s181 = scalar_select %p178, %s179, %s180
      %p184 = pneg %p178
      %p185 = scmp.eq.s32.totalorder %s13, 1
      %p186 = por %p184, %p185
      %p187 = scmp.ne.s32.totalorder %s179, %s182
      %p188 = scmp.eq.s32.totalorder %s13, 0
      %p189 = por %p187, %p188
      %p190 = scmp.ne.s32.totalorder %s179, %s182
      %p191 = scmp.eq.s32.totalorder %s18, 1
      %p192 = por %p190, %p191
      %p193 = scmp.ne.s32.totalorder %s182, %s183
      %p194 = scmp.eq.s32.totalorder %s18, 0
      %p195 = por %p193, %p194
      %p196 = scmp.ne.s32.totalorder %s182, %s183
      %p197 = scmp.eq.s32.totalorder %s19, 1
      %p198 = por %p196, %p197
      %p200 = scmp.ne.s32.totalorder %s183, %s199
      %p201 = scmp.eq.s32.totalorder %s19, 0
      %p202 = por %p200, %p201
      %p203 = scmp.le.s32.totalorder 1, %s13
      %p204 = scmp.lt.s32.totalorder %s13, 3
      %p205 = pnand %p203, %p204
      %p206 = pneg %p205
      // Predicated region
      $region9: #{down_forward.2} parent=5 // pred_check
        _
      $region10: #{down_forward.2} parent=5 // pred_check_branch
        %208 = sbr.rel (%p205) target = $region12
      $region11: #{down_forward.2} parent=5 // pred_region
        %s209 = ssub.s32 %s13, 1
        // Predicated region
        $region13: #{down_forward.2} parent=11 // pred_check
          %p210 = pneg %p146
        $region14: #{down_forward.2} parent=11 // pred_check_branch
          %212 = sbr.rel (%p210) target = $region16
        $region15: #{down_forward.2} parent=11 // pred_region
          %s214 = ssub.s32 576, 576
          %215 = vsyncadd [#allocation5], %s214
          %s216 = sshll.u32 [#allocation4], 4
          %s217 = int_to_ptr.vmem [resolvable:$true] %s216
          %222 = dma.hbm_to_vmem [thread:$0]  %s3, 576, %s217, [#allocation5], 64, 64, 4
        $region16: #{down_forward.2} parent=11 // pred_fallthru
          _
        // Predicated region
        $region17: #{down_forward.2} parent=11 // pred_check
          %p223 = pneg %p167
        $region18: #{down_forward.2} parent=11 // pred_check_branch
          %225 = sbr.rel (%p223) target = $region20
        $region19: #{down_forward.2} parent=11 // pred_region
          %s227 = ssub.s32 16, 16
          %228 = vsyncadd [#allocation7], %s227
          %s230 = sshll.u32 [#allocation6], 4
          %s231 = int_to_ptr.vmem [resolvable:$true] %s230
          %233 = dma.hbm_to_vmem [thread:$0]  %s4, 16, %s231, [#allocation7]
        $region20: #{down_forward.2} parent=11 // pred_fallthru
          _
      $region12: #{down_forward.2} parent=5 // pred_fallthru
        _
      %p234 = scmp.lt.s32.totalorder %s13, 2
      // Predicated region
      $region21: #{down_forward.2} parent=5 // pred_check
        %p235 = pneg %p234
      $region22: #{down_forward.2} parent=5 // pred_check_branch
        %237 = sbr.rel (%p235) target = $region24
      $region23: #{down_forward.2} parent=5 // pred_region
        // Predicated region
        $region25: #{down_forward.2} parent=23 // pred_check
          %p238 = pneg %p47
        $region26: #{down_forward.2} parent=23 // pred_check_branch
          %240 = sbr.rel (%p238) target = $region28
        $region27: #{down_forward.2} parent=23 // pred_region
          %s241 = smul.u32 16, %s21
          %p242 = scmp.lt.s32.totalorder %s20, 1
          %s243 = scalar_select %p242, %s20, 1
          %p244 = scmp.lt.s32.totalorder %s241, 15
          %s245 = scalar_select %p244, %s241, 15
          %s246 = smul.addr %s243, 16
          %s247 = sadd.s32 %s245, %s246
          %s248 = smul.addr %s247, 4
          %s249 = scalar_lea.vmem %s0, %s248
          %s250 = smul.u32 16, %s21
        $region28: #{down_forward.2} parent=23 // pred_fallthru
          _
        // Predicated region
        $region29: #{down_forward.2} parent=23 // pred_check
          %p251 = pneg %p83
        $region30: #{down_forward.2} parent=23 // pred_check_branch
          %253 = sbr.rel (%p251) target = $region32
        $region31: #{down_forward.2} parent=23 // pred_region
          %s254 = smul.u32 %s21, 8
          %s255 = ssub.s32 %s254, 1
          %p256 = scmp.gt.s32.totalorder %s255, 0
          %s257 = scalar_select %p256, %s255, 0
          %s258 = smul.u32 2, %s257
          %p259 = scmp.lt.s32.totalorder %s20, 1
          %s260 = scalar_select %p259, %s20, 1
          %p261 = scmp.lt.s32.totalorder %s258, 15
          %s262 = scalar_select %p261, %s258, 15
          %s263 = smul.addr %s260, 16
          %s264 = sadd.s32 %s262, %s263
          %s265 = smul.addr %s264, 4
          %s266 = scalar_lea.vmem %s1, %s265
          %s267 = smul.u32 %s21, 8
          %s268 = ssub.s32 %s267, 1
          %p269 = scmp.gt.s32.totalorder %s268, 0
          %s270 = scalar_select %p269, %s268, 0
          %s271 = smul.u32 2, %s270
        $region32: #{down_forward.2} parent=23 // pred_fallthru
          _
        // Predicated region
        $region33: #{down_forward.2} parent=23 // pred_check
          %p272 = pneg %p119
        $region34: #{down_forward.2} parent=23 // pred_check_branch
          %274 = sbr.rel (%p272) target = $region36
        $region35: #{down_forward.2} parent=23 // pred_region
          %s275 = sadd.s32 %s21, 1
          %s276 = smul.u32 %s275, 8
          %p277 = scmp.lt.s32.totalorder %s276, 7
          %s278 = scalar_select %p277, %s276, 7
          %s279 = smul.u32 2, %s278
          %p280 = scmp.lt.s32.totalorder %s20, 1
          %s281 = scalar_select %p280, %s20, 1
          %p282 = scmp.lt.s32.totalorder %s279, 15
          %s283 = scalar_select %p282, %s279, 15
          %s284 = smul.addr %s281, 16
          %s285 = sadd.s32 %s283, %s284
          %s286 = smul.addr %s285, 4
          %s287 = scalar_lea.vmem %s2, %s286
          %s288 = sadd.s32 %s21, 1
          %s289 = smul.u32 %s288, 8
          %p290 = scmp.lt.s32.totalorder %s289, 7
          %s291 = scalar_select %p290, %s289, 7
          %s292 = smul.u32 2, %s291
        $region36: #{down_forward.2} parent=23 // pred_fallthru
          _
      $region24: #{down_forward.2} parent=5 // pred_fallthru
        _
      %p293 = scmp.le.s32.totalorder 1, %s13
      %p294 = scmp.lt.s32.totalorder %s13, 3
      %p295 = pnand %p293, %p294
      %p296 = pneg %p295
      // Predicated region
      $region37: #{down_forward.2} parent=5 // pred_check
        _
      $region38: #{down_forward.2} parent=5 // pred_check_branch
        %298 = sbr.rel (%p295) target = $region40
      $region39: #{down_forward.2} parent=5 // pred_region
        %s299 = ssub.s32 %s13, 1
        // Predicated region
        $region41: #{down_forward.2} parent=39 // pred_check
          %p300 = pneg %p146
        $region42: #{down_forward.2} parent=39 // pred_check_branch
          %302 = sbr.rel (%p300) target = $region44
        $region43: #{down_forward.2} parent=39 // pred_region
          %303 = dma.done [#allocation5], 576
        $region44: #{down_forward.2} parent=39 // pred_fallthru
          _
        // Predicated region
        $region45: #{down_forward.2} parent=39 // pred_check
          %p304 = pneg %p167
        $region46: #{down_forward.2} parent=39 // pred_check_branch
          %306 = sbr.rel (%p304) target = $region48
        $region47: #{down_forward.2} parent=39 // pred_region
          %307 = dma.done [#allocation7], 16
        $region48: #{down_forward.2} parent=39 // pred_fallthru
          _
        %s308 = smul.u32 16, %s23
        %p309 = scmp.lt.s32.totalorder %s22, 1
        %s310 = scalar_select %p309, %s22, 1
        %p311 = scmp.lt.s32.totalorder %s308, 15
        %s312 = scalar_select %p311, %s308, 15
        %s313 = smul.addr %s310, 16
        %s314 = sadd.s32 %s312, %s313
        %s315 = smul.addr %s314, 4
        %s316 = scalar_lea.vmem %s0, %s315
        %p317 = pneg %p53
        %p318 = pneg %p50
        %s319 = smul.u32 %s23, 8
        %s320 = ssub.s32 %s319, 1
        %p321 = scmp.gt.s32.totalorder %s320, 0
        %s322 = scalar_select %p321, %s320, 0
        %s323 = smul.u32 2, %s322
        %p324 = scmp.lt.s32.totalorder %s22, 1
        %s325 = scalar_select %p324, %s22, 1
        %p326 = scmp.lt.s32.totalorder %s323, 15
        %s327 = scalar_select %p326, %s323, 15
        %s328 = smul.addr %s325, 16
        %s329 = sadd.s32 %s327, %s328
        %s330 = smul.addr %s329, 4
        %s331 = scalar_lea.vmem %s1, %s330
        %p332 = pneg %p89
        %p333 = pneg %p86
        %s334 = sadd.s32 %s23, 1
        %s335 = smul.u32 %s334, 8
        %p336 = scmp.lt.s32.totalorder %s335, 7
        %s337 = scalar_select %p336, %s335, 7
        %s338 = smul.u32 2, %s337
        %p339 = scmp.lt.s32.totalorder %s22, 1
        %s340 = scalar_select %p339, %s22, 1
        %p341 = scmp.lt.s32.totalorder %s338, 15
        %s342 = scalar_select %p341, %s338, 15
        %s343 = smul.addr %s340, 16
        %s344 = sadd.s32 %s342, %s343
        %s345 = smul.addr %s344, 4
        %s346 = scalar_lea.vmem %s2, %s345
        %p347 = pneg %p125
        %p348 = pneg %p122
        %p349 = pneg %p146
        %p350 = pneg %p143
        %p351 = pneg %p167
        %p352 = pneg %p164
        %p353 = pneg %p195
        %p354 = pneg %p192
        %s355 = smul.u32 8, %s23
        %p356 = scmp.lt.s32.totalorder %s22, 1
        %s357 = scalar_select %p356, %s22, 1
        %p358 = scmp.lt.s32.totalorder %s355, 7
        %s359 = scalar_select %p358, %s355, 7
        %s360 = smul.addr %s357, 8
        %s361 = sadd.s32 %s359, %s360
        %s362 = smul.addr %s361, 4
        %s363 = scalar_lea.vmem %s5, %s362
        %s364 = smul.u32 16, %s23
        %p365 = scmp.lt.s32.totalorder %s22, 1
        %s366 = scalar_select %p365, %s22, 1
        %p367 = scmp.lt.s32.totalorder %s364, 15
        %s368 = scalar_select %p367, %s364, 15
        %s369 = smul.addr %s366, 16
        %s370 = sadd.s32 %s368, %s369
        %s371 = smul.addr %s370, 4
        %s372 = scalar_lea.vmem %s0, %s371
        %s373 = smul.u32 16, %s23
        %s374 = smul.u32 %s23, 8
        %s375 = ssub.s32 %s374, 1
        %p376 = scmp.gt.s32.totalorder %s375, 0
        %s377 = scalar_select %p376, %s375, 0
        %s378 = smul.u32 2, %s377
        %p379 = scmp.lt.s32.totalorder %s22, 1
        %s380 = scalar_select %p379, %s22, 1
        %p381 = scmp.lt.s32.totalorder %s378, 15
        %s382 = scalar_select %p381, %s378, 15
        %s383 = smul.addr %s380, 16
        %s384 = sadd.s32 %s382, %s383
        %s385 = smul.addr %s384, 4
        %s386 = scalar_lea.vmem %s1, %s385
        %s387 = smul.u32 %s23, 8
        %s388 = ssub.s32 %s387, 1
        %p389 = scmp.gt.s32.totalorder %s388, 0
        %s390 = scalar_select %p389, %s388, 0
        %s391 = smul.u32 2, %s390
        %s392 = sadd.s32 %s23, 1
        %s393 = smul.u32 %s392, 8
        %p394 = scmp.lt.s32.totalorder %s393, 7
        %s395 = scalar_select %p394, %s393, 7
        %s396 = smul.u32 2, %s395
        %p397 = scmp.lt.s32.totalorder %s22, 1
        %s398 = scalar_select %p397, %s22, 1
        %p399 = scmp.lt.s32.totalorder %s396, 15
        %s400 = scalar_select %p399, %s396, 15
        %s401 = smul.addr %s398, 16
        %s402 = sadd.s32 %s400, %s401
        %s403 = smul.addr %s402, 4
        %s404 = scalar_lea.vmem %s2, %s403
        %s405 = sadd.s32 %s23, 1
        %s406 = smul.u32 %s405, 8
        %p407 = scmp.lt.s32.totalorder %s406, 7
        %s408 = scalar_select %p407, %s406, 7
        %s409 = smul.u32 2, %s408
        %s410 = smul.u32 8, %s23
        %p411 = scmp.lt.s32.totalorder %s22, 1
        %s412 = scalar_select %p411, %s22, 1
        %p413 = scmp.lt.s32.totalorder %s410, 7
        %s414 = scalar_select %p413, %s410, 7
        %s415 = smul.addr %s412, 8
        %s416 = sadd.s32 %s414, %s415
        %s417 = smul.addr %s416, 4
        %s418 = scalar_lea.vmem %s5, %s417
        %s419 = smul.u32 8, %s23
        %vm423 = vcmask 60416
        %424 = vst.msk [vmem:[#allocation2] sm:$0xf] %vm423, 0
        %425 = vst.msk [vmem:[#allocation2 + $0x4] sm:$0xf] %vm423, 0
        %426 = vst.msk [vmem:[#allocation2 + $0x8] sm:$0xf] %vm423, 0
        %427 = vst.msk [vmem:[#allocation2 + $0xc] sm:$0xf] %vm423, 0
        %428 = vst.msk [vmem:[#allocation2 + $0x10] sm:$0xf] %vm423, 0
        %429 = vst.msk [vmem:[#allocation2 + $0x14] sm:$0xf] %vm423, 0
        %430 = vst.msk [vmem:[#allocation2 + $0x18] sm:$0xf] %vm423, 0
        %431 = vst.msk [vmem:[#allocation2 + $0x1c] sm:$0xf] %vm423, 0
        %432 = vst.msk [vmem:[#allocation2 + $0x20] sm:$0xf] %vm423, 0
        %433 = vst.msk [vmem:[#allocation2 + $0x24] sm:$0xf] %vm423, 0
        %vm434 = vcmask 57344
        %435 = vst.msk [vmem:[#allocation2 + $0x28] sm:$0x1] %vm434, 0
        %v436 = vld [vmem:[%s372] sm:$0xf]
        %v437 = vld [vmem:[%s372 + $0x4] sm:$0xf]
        %v438 = vld [vmem:[%s372 + $0x8] sm:$0xf]
        %v439 = vld [vmem:[%s372 + $0xc] sm:$0xf]
        %v440 = vld [vmem:[%s372 + $0x10] sm:$0xf]
        %v441 = vld [vmem:[%s372 + $0x14] sm:$0xf]
        %v442 = vld [vmem:[%s372 + $0x18] sm:$0xf]
        %v443 = vld [vmem:[%s372 + $0x1c] sm:$0xf]
        %v444 = vld [vmem:[%s372 + $0x20] sm:$0xf]
        %v445 = vld [vmem:[%s372 + $0x24] sm:$0xf]
        %v446 = vld [vmem:[%s372 + $0x28] sm:$0xf]
        %v447 = vld [vmem:[%s372 + $0x2c] sm:$0xf]
        %v448 = vld [vmem:[%s372 + $0x30] sm:$0xf]
        %v449 = vld [vmem:[%s372 + $0x34] sm:$0xf]
        %v450 = vld [vmem:[%s372 + $0x38] sm:$0xf]
        %v451 = vld [vmem:[%s372 + $0x3c] sm:$0xf]
        %468 = vrot.lane.b32.xlu0 %v436, 124
        %v469 = vpop.permute.xlu0 %468
        %470 = vrot.lane.b32.xlu0 %v437, 124
        %v471 = vpop.permute.xlu0 %470
        %472 = vrot.lane.b32.xlu0 %v438, 124
        %v473 = vpop.permute.xlu0 %472
        %474 = vrot.lane.b32.xlu0 %v439, 124
        %v475 = vpop.permute.xlu0 %474
        %476 = vrot.lane.b32.xlu0 %v440, 124
        %v477 = vpop.permute.xlu0 %476
        %478 = vrot.lane.b32.xlu0 %v441, 124
        %v479 = vpop.permute.xlu0 %478
        %480 = vrot.lane.b32.xlu0 %v442, 124
        %v481 = vpop.permute.xlu0 %480
        %482 = vrot.lane.b32.xlu0 %v443, 124
        %v483 = vpop.permute.xlu0 %482
        %484 = vrot.lane.b32.xlu0 %v444, 124
        %v485 = vpop.permute.xlu0 %484
        %486 = vrot.lane.b32.xlu0 %v445, 124
        %v487 = vpop.permute.xlu0 %486
        %488 = vrot.lane.b32.xlu0 %v446, 124
        %v489 = vpop.permute.xlu0 %488
        %490 = vrot.lane.b32.xlu0 %v447, 124
        %v491 = vpop.permute.xlu0 %490
        %492 = vrot.lane.b32.xlu0 %v448, 124
        %v493 = vpop.permute.xlu0 %492
        %494 = vrot.lane.b32.xlu0 %v449, 124
        %v495 = vpop.permute.xlu0 %494
        %496 = vrot.lane.b32.xlu0 %v450, 124
        %v497 = vpop.permute.xlu0 %496
        %498 = vrot.lane.b32.xlu0 %v451, 124
        %v499 = vpop.permute.xlu0 %498
        %v516 = vmax.bf16 %v436, %v469
        %v517 = vmax.bf16 %v437, %v471
        %v518 = vmax.bf16 %v438, %v473
        %v519 = vmax.bf16 %v439, %v475
        %v520 = vmax.bf16 %v440, %v477
        %v521 = vmax.bf16 %v441, %v479
        %v522 = vmax.bf16 %v442, %v481
        %v523 = vmax.bf16 %v443, %v483
        %v524 = vmax.bf16 %v444, %v485
        %v525 = vmax.bf16 %v445, %v487
        %v526 = vmax.bf16 %v446, %v489
        %v527 = vmax.bf16 %v447, %v491
        %v528 = vmax.bf16 %v448, %v493
        %v529 = vmax.bf16 %v449, %v495
        %v530 = vmax.bf16 %v450, %v497
        %v531 = vmax.bf16 %v451, %v499
        %v532 = vmax.bf16 %v516, %v517
        %v533 = vmax.bf16 %v518, %v519
        %v534 = vmax.bf16 %v520, %v521
        %v535 = vmax.bf16 %v522, %v523
        %v536 = vmax.bf16 %v524, %v525
        %v537 = vmax.bf16 %v526, %v527
        %v538 = vmax.bf16 %v528, %v529
        %v539 = vmax.bf16 %v530, %v531
        %v540 = vld [vmem:[%s386] sm:$0xf]
        %v541 = vld [vmem:[%s386 + $0x4] sm:$0xf]
        %544 = vrot.lane.b32.xlu0 %v540, 124
        %v545 = vpop.permute.xlu0 %544
        %546 = vrot.lane.b32.xlu0 %v541, 124
        %v547 = vpop.permute.xlu0 %546
        %v550 = vmax.bf16 %v540, %v545
        %v551 = vmax.bf16 %v541, %v547
        %v552 = vmax.bf16 %v550, %v551
        %v553 = vld [vmem:[%s404] sm:$0xf]
        %v554 = vld [vmem:[%s404 + $0x4] sm:$0xf]
        %557 = vrot.lane.b32.xlu0 %v553, 124
        %v558 = vpop.permute.xlu0 %557
        %559 = vrot.lane.b32.xlu0 %v554, 124
        %v560 = vpop.permute.xlu0 %559
        %v563 = vmax.bf16 %v553, %v558
        %v564 = vmax.bf16 %v554, %v560
        %v565 = vmax.bf16 %v563, %v564
        %v567 = vshrl.u32 %v532, 16
        %v569 = vrot.slane %v567, 7
        %v570 = vshll.u32 %v532, 16
        %v572 = vor.u32 %v569, %v570
        %v573 = vrot.slane %v569, 4
        %vm576 = vcmask 27648
        %vm577 = vsmask.f32 7938
        %vm578 = vmand %vm576, %vm577
        %v579 = vld [vmem:[#allocation2 + $0x4] sm:$0xf]
        %v580 = vsel %vm578, %v572, %v579
        %581 = vst [vmem:[#allocation2 + $0x4] sm:$0xf] %v580
        %vm582 = vcmask 24576
        %vm583 = vsmask.f32 256
        %vm584 = vmand %vm582, %vm583
        %v585 = vld [vmem:[#allocation2 + $0x8] sm:$0x1]
        %v586 = vsel %vm584, %v573, %v585
        %587 = vst [vmem:[#allocation2 + $0x8] sm:$0x1] %v586
        %v589 = vshrl.u32 %v533, 16
        %v591 = vrot.slane %v589, 7
        %v592 = vshll.u32 %v533, 16
        %v594 = vor.u32 %v591, %v592
        %v595 = vrot.slane %v591, 4
        %v598 = vld [vmem:[#allocation2 + $0x8] sm:$0xf]
        %v599 = vsel %vm578, %v594, %v598
        %600 = vst [vmem:[#allocation2 + $0x8] sm:$0xf] %v599
        %v601 = vld [vmem:[#allocation2 + $0xc] sm:$0x1]
        %v602 = vsel %vm584, %v595, %v601
        %603 = vst [vmem:[#allocation2 + $0xc] sm:$0x1] %v602
        %v605 = vshrl.u32 %v534, 16
        %v607 = vrot.slane %v605, 7
        %v608 = vshll.u32 %v534, 16
        %v610 = vor.u32 %v607, %v608
        %v611 = vrot.slane %v607, 4
        %v614 = vld [vmem:[#allocation2 + $0xc] sm:$0xf]
        %v615 = vsel %vm578, %v610, %v614
        %616 = vst [vmem:[#allocation2 + $0xc] sm:$0xf] %v615
        %v617 = vld [vmem:[#allocation2 + $0x10] sm:$0x1]
        %v618 = vsel %vm584, %v611, %v617
        %619 = vst [vmem:[#allocation2 + $0x10] sm:$0x1] %v618
        %v621 = vshrl.u32 %v535, 16
        %v623 = vrot.slane %v621, 7
        %v624 = vshll.u32 %v535, 16
        %v626 = vor.u32 %v623, %v624
        %v627 = vrot.slane %v623, 4
        %v630 = vld [vmem:[#allocation2 + $0x10] sm:$0xf]
        %v631 = vsel %vm578, %v626, %v630
        %632 = vst [vmem:[#allocation2 + $0x10] sm:$0xf] %v631
        %v633 = vld [vmem:[#allocation2 + $0x14] sm:$0x1]
        %v634 = vsel %vm584, %v627, %v633
        %635 = vst [vmem:[#allocation2 + $0x14] sm:$0x1] %v634
        %v637 = vshrl.u32 %v536, 16
        %v639 = vrot.slane %v637, 7
        %v640 = vshll.u32 %v536, 16
        %v642 = vor.u32 %v639, %v640
        %v643 = vrot.slane %v639, 4
        %v646 = vld [vmem:[#allocation2 + $0x14] sm:$0xf]
        %v647 = vsel %vm578, %v642, %v646
        %648 = vst [vmem:[#allocation2 + $0x14] sm:$0xf] %v647
        %v649 = vld [vmem:[#allocation2 + $0x18] sm:$0x1]
        %v650 = vsel %vm584, %v643, %v649
        %651 = vst [vmem:[#allocation2 + $0x18] sm:$0x1] %v650
        %v653 = vshrl.u32 %v537, 16
        %v655 = vrot.slane %v653, 7
        %v656 = vshll.u32 %v537, 16
        %v658 = vor.u32 %v655, %v656
        %v659 = vrot.slane %v655, 4
        %v662 = vld [vmem:[#allocation2 + $0x18] sm:$0xf]
        %v663 = vsel %vm578, %v658, %v662
        %664 = vst [vmem:[#allocation2 + $0x18] sm:$0xf] %v663
        %v665 = vld [vmem:[#allocation2 + $0x1c] sm:$0x1]
        %v666 = vsel %vm584, %v659, %v665
        %667 = vst [vmem:[#allocation2 + $0x1c] sm:$0x1] %v666
        %v669 = vshrl.u32 %v538, 16
        %v671 = vrot.slane %v669, 7
        %v672 = vshll.u32 %v538, 16
        %v674 = vor.u32 %v671, %v672
        %v675 = vrot.slane %v671, 4
        %v678 = vld [vmem:[#allocation2 + $0x1c] sm:$0xf]
        %v679 = vsel %vm578, %v674, %v678
        %680 = vst [vmem:[#allocation2 + $0x1c] sm:$0xf] %v679
        %v681 = vld [vmem:[#allocation2 + $0x20] sm:$0x1]
        %v682 = vsel %vm584, %v675, %v681
        %683 = vst [vmem:[#allocation2 + $0x20] sm:$0x1] %v682
        %v685 = vshrl.u32 %v539, 16
        %v687 = vrot.slane %v685, 7
        %v688 = vshll.u32 %v539, 16
        %v690 = vor.u32 %v687, %v688
        %v691 = vrot.slane %v687, 4
        %v694 = vld [vmem:[#allocation2 + $0x20] sm:$0xf]
        %v695 = vsel %vm578, %v690, %v694
        %696 = vst [vmem:[#allocation2 + $0x20] sm:$0xf] %v695
        %v697 = vld [vmem:[#allocation2 + $0x24] sm:$0x1]
        %v698 = vsel %vm584, %v691, %v697
        %699 = vst [vmem:[#allocation2 + $0x24] sm:$0x1] %v698
        %p700 = scmp.gt.s32.totalorder %s23, 0
        // Predicated region
        $region49: #{down_forward.2} parent=39 // pred_check
          %p701 = pneg %p700
        $region50: #{down_forward.2} parent=39 // pred_check_branch
          %703 = sbr.rel (%p701) target = $region52
        $region51: #{down_forward.2} parent=39 // pred_region
          %v705 = vshrl.u32 %v552, 16
          %v707 = vrot.slane %v705, 7
          %v708 = vshll.u32 %v552, 16
          %v710 = vor.u32 %v707, %v708
          %v711 = vrot.slane %v707, 4
          %v714 = vld [vmem:[#allocation2] sm:$0xf]
          %v715 = vsel %vm578, %v710, %v714
          %716 = vst [vmem:[#allocation2] sm:$0xf] %v715
          %v717 = vld [vmem:[#allocation2 + $0x4] sm:$0x1]
          %v718 = vsel %vm584, %v711, %v717
          %719 = vst [vmem:[#allocation2 + $0x4] sm:$0x1] %v718
        $region52: #{down_forward.2} parent=39 // pred_fallthru
          _
        %p720 = scmp.lt.s32.totalorder %s23, 0
        // Predicated region
        $region53: #{down_forward.2} parent=39 // pred_check
          %p721 = pneg %p720
        $region54: #{down_forward.2} parent=39 // pred_check_branch
          %723 = sbr.rel (%p721) target = $region56
        $region55: #{down_forward.2} parent=39 // pred_region
          %v725 = vshrl.u32 %v565, 16
          %v727 = vrot.slane %v725, 7
          %v728 = vshll.u32 %v565, 16
          %v730 = vor.u32 %v727, %v728
          %v731 = vrot.slane %v727, 4
          %v734 = vld [vmem:[#allocation2 + $0x24] sm:$0xf]
          %v735 = vsel %vm578, %v730, %v734
          %736 = vst [vmem:[#allocation2 + $0x24] sm:$0xf] %v735
          %v737 = vld [vmem:[#allocation2 + $0x28] sm:$0x1]
          %v738 = vsel %vm584, %v731, %v737
          %739 = vst [vmem:[#allocation2 + $0x28] sm:$0x1] %v738
        $region56: #{down_forward.2} parent=39 // pred_fallthru
          _
        %v740 = vlaneseq
        %v741 = vshrl.u32 %v740, 7
        %v742 = vadd.s32 %v741, 8
        %v743 = vadd.s32 %v741, 16
        %v744 = vadd.s32 %v741, 24
        %v745 = vadd.s32 %v741, 32
        %v746 = vadd.s32 %v741, 40
        %v747 = vadd.s32 %v741, 48
        %v748 = vadd.s32 %v741, 56
        %vm749 = vcmp.lt.s32.totalorder %v741, 0
        %v750 = vsub.s32 0, %v741
        %v751 = vsel %vm749, %v750, %v741
        %v752 = vshrl.u32 %v751, 3
        %v753 = vand.u32 %v751, 7
        %v754 = vsub.s32 0, %v753
        %v755 = vsel %vm749, %v754, %v753
        %vm756 = vcmp.lt.s32.totalorder %v742, 0
        %v757 = vsub.s32 0, %v742
        %v758 = vsel %vm756, %v757, %v742
        %v759 = vshrl.u32 %v758, 3
        %v760 = vand.u32 %v758, 7
        %v761 = vsub.s32 0, %v760
        %v762 = vsel %vm756, %v761, %v760
        %vm763 = vcmp.lt.s32.totalorder %v743, 0
        %v764 = vsub.s32 0, %v743
        %v765 = vsel %vm763, %v764, %v743
        %v766 = vshrl.u32 %v765, 3
        %v767 = vand.u32 %v765, 7
        %v768 = vsub.s32 0, %v767
        %v769 = vsel %vm763, %v768, %v767
        %vm770 = vcmp.lt.s32.totalorder %v744, 0
        %v771 = vsub.s32 0, %v744
        %v772 = vsel %vm770, %v771, %v744
        %v773 = vshrl.u32 %v772, 3
        %v774 = vand.u32 %v772, 7
        %v775 = vsub.s32 0, %v774
        %v776 = vsel %vm770, %v775, %v774
        %vm777 = vcmp.lt.s32.totalorder %v745, 0
        %v778 = vsub.s32 0, %v745
        %v779 = vsel %vm777, %v778, %v745
        %v780 = vshrl.u32 %v779, 3
        %v781 = vand.u32 %v779, 7
        %v782 = vsub.s32 0, %v781
        %v783 = vsel %vm777, %v782, %v781
        %vm784 = vcmp.lt.s32.totalorder %v746, 0
        %v785 = vsub.s32 0, %v746
        %v786 = vsel %vm784, %v785, %v746
        %v787 = vshrl.u32 %v786, 3
        %v788 = vand.u32 %v786, 7
        %v789 = vsub.s32 0, %v788
        %v790 = vsel %vm784, %v789, %v788
        %vm791 = vcmp.lt.s32.totalorder %v747, 0
        %v792 = vsub.s32 0, %v747
        %v793 = vsel %vm791, %v792, %v747
        %v794 = vshrl.u32 %v793, 3
        %v795 = vand.u32 %v793, 7
        %v796 = vsub.s32 0, %v795
        %v797 = vsel %vm791, %v796, %v795
        %vm798 = vcmp.lt.s32.totalorder %v748, 0
        %v799 = vsub.s32 0, %v748
        %v800 = vsel %vm798, %v799, %v748
        %v801 = vshrl.u32 %v800, 3
        %v802 = vand.u32 %v800, 7
        %v803 = vsub.s32 0, %v802
        %v804 = vsel %vm798, %v803, %v802
        %vm805 = vcmp.ne.s32.totalorder %v755, 0
        %vm806 = vcmp.ne.s32.totalorder %v762, 0
        %vm807 = vcmp.ne.s32.totalorder %v769, 0
        %vm808 = vcmp.ne.s32.totalorder %v776, 0
        %vm809 = vcmp.ne.s32.totalorder %v783, 0
        %vm810 = vcmp.ne.s32.totalorder %v790, 0
        %vm811 = vcmp.ne.s32.totalorder %v797, 0
        %vm812 = vcmp.ne.s32.totalorder %v804, 0
        %vm813 = vcmp.lt.s32.totalorder %v755, 0
        %vm814 = vcmp.lt.s32.totalorder %v762, 0
        %vm815 = vcmp.lt.s32.totalorder %v769, 0
        %vm816 = vcmp.lt.s32.totalorder %v776, 0
        %vm817 = vcmp.lt.s32.totalorder %v783, 0
        %vm818 = vcmp.lt.s32.totalorder %v790, 0
        %vm819 = vcmp.lt.s32.totalorder %v797, 0
        %vm820 = vcmp.lt.s32.totalorder %v804, 0
        %vm821 = vmand %vm813, %vm805
        %vm822 = vmand %vm814, %vm806
        %vm823 = vmand %vm815, %vm807
        %vm824 = vmand %vm816, %vm808
        %vm825 = vmand %vm817, %vm809
        %vm826 = vmand %vm818, %vm810
        %vm827 = vmand %vm819, %vm811
        %vm828 = vmand %vm820, %vm812
        %v829 = vadd.s32 %v755, 8
        %v830 = vadd.s32 %v762, 8
        %v831 = vadd.s32 %v769, 8
        %v832 = vadd.s32 %v776, 8
        %v833 = vadd.s32 %v783, 8
        %v834 = vadd.s32 %v790, 8
        %v835 = vadd.s32 %v797, 8
        %v836 = vadd.s32 %v804, 8
        %v837 = vsel %vm821, %v829, %v755
        %v838 = vsel %vm822, %v830, %v762
        %v839 = vsel %vm823, %v831, %v769
        %v840 = vsel %vm824, %v832, %v776
        %v841 = vsel %vm825, %v833, %v783
        %v842 = vsel %vm826, %v834, %v790
        %v843 = vsel %vm827, %v835, %v797
        %v844 = vsel %vm828, %v836, %v804
        %vm845 = vcmp.ne.s32.totalorder %v837, 0
        %vm846 = vcmp.ne.s32.totalorder %v838, 0
        %vm847 = vcmp.ne.s32.totalorder %v839, 0
        %vm848 = vcmp.ne.s32.totalorder %v840, 0
        %vm849 = vcmp.ne.s32.totalorder %v841, 0
        %vm850 = vcmp.ne.s32.totalorder %v842, 0
        %vm851 = vcmp.ne.s32.totalorder %v843, 0
        %vm852 = vcmp.ne.s32.totalorder %v844, 0
        %vm853 = vcmp.ne.s32.totalorder %v837, 7
        %vm854 = vcmp.ne.s32.totalorder %v838, 7
        %vm855 = vcmp.ne.s32.totalorder %v839, 7
        %vm856 = vcmp.ne.s32.totalorder %v840, 7
        %vm857 = vcmp.ne.s32.totalorder %v841, 7
        %vm858 = vcmp.ne.s32.totalorder %v842, 7
        %vm859 = vcmp.ne.s32.totalorder %v843, 7
        %vm860 = vcmp.ne.s32.totalorder %v844, 7
        %v861 = vld [vmem:[#allocation2] sm:$0xf]
        %v862 = vld [vmem:[#allocation2 + $0x4] sm:$0xf]
        %v863 = vld [vmem:[#allocation2 + $0x8] sm:$0xf]
        %v864 = vld [vmem:[#allocation2 + $0xc] sm:$0xf]
        %v865 = vld [vmem:[#allocation2 + $0x10] sm:$0xf]
        %v866 = vld [vmem:[#allocation2 + $0x14] sm:$0xf]
        %v867 = vld [vmem:[#allocation2 + $0x18] sm:$0xf]
        %v868 = vld [vmem:[#allocation2 + $0x1c] sm:$0xf]
        %v869 = vsel %vm845, 1, 0
        %v870 = vsel %vm846, 1, 0
        %v871 = vsel %vm847, 1, 0
        %v872 = vsel %vm848, 1, 0
        %v873 = vsel %vm849, 1, 0
        %v874 = vsel %vm850, 1, 0
        %v875 = vsel %vm851, 1, 0
        %v876 = vsel %vm852, 1, 0
        %vm877 = vcmp.eq.s32.totalorder %v869, 1
        %vm878 = vcmp.eq.s32.totalorder %v870, 1
        %vm879 = vcmp.eq.s32.totalorder %v871, 1
        %vm880 = vcmp.eq.s32.totalorder %v872, 1
        %vm881 = vcmp.eq.s32.totalorder %v873, 1
        %vm882 = vcmp.eq.s32.totalorder %v874, 1
        %vm883 = vcmp.eq.s32.totalorder %v875, 1
        %vm884 = vcmp.eq.s32.totalorder %v876, 1
        %vm885 = vmpackc.low %vm877, %vm877
        %vm886 = vmpackc.low %vm878, %vm878
        %vm887 = vmpackc.low %vm879, %vm879
        %vm888 = vmpackc.low %vm880, %vm880
        %vm889 = vmpackc.low %vm881, %vm881
        %vm890 = vmpackc.low %vm882, %vm882
        %vm891 = vmpackc.low %vm883, %vm883
        %vm892 = vmpackc.low %vm884, %vm884
        %v893 = vsel %vm885, %v861, 0
        %v894 = vsel %vm886, %v862, 0
        %v895 = vsel %vm887, %v863, 0
        %v896 = vsel %vm888, %v864, 0
        %v897 = vsel %vm889, %v865, 0
        %v898 = vsel %vm890, %v866, 0
        %v899 = vsel %vm891, %v867, 0
        %v900 = vsel %vm892, %v868, 0
        %v909 = vunpack.c.l.b16 %v893
        %v910 = vunpack.c.l.b16 %v894
        %v911 = vunpack.c.l.b16 %v895
        %v912 = vunpack.c.l.b16 %v896
        %v913 = vunpack.c.l.b16 %v897
        %v914 = vunpack.c.l.b16 %v898
        %v915 = vunpack.c.l.b16 %v899
        %v916 = vunpack.c.l.b16 %v900
        %v917 = vpack.c.b16 %v910, %v909
        %v918 = vpack.c.b16 %v912, %v911
        %v919 = vpack.c.b16 %v914, %v913
        %v920 = vpack.c.b16 %v916, %v915
        %vm925 = vcmask 64512
        %926 = vst.msk [vmem:[#allocation3] sm:$0xff] %vm925, %v917
        %927 = vst.msk [vmem:[#allocation3 + $0x8] sm:$0xff] %vm925, %v918
        %928 = vst.msk [vmem:[#allocation3 + $0x10] sm:$0xff] %vm925, %v919
        %929 = vst.msk [vmem:[#allocation3 + $0x18] sm:$0xff] %vm925, %v920
        %v930 = vld [vmem:[#allocation2] sm:$0xf]
        %v931 = vld [vmem:[#allocation2 + $0x4] sm:$0xf]
        %v932 = vld [vmem:[#allocation2 + $0x8] sm:$0xf]
        %v933 = vld [vmem:[#allocation2 + $0xc] sm:$0xf]
        %v934 = vld [vmem:[#allocation2 + $0x10] sm:$0xf]
        %v935 = vld [vmem:[#allocation2 + $0x14] sm:$0xf]
        %v936 = vld [vmem:[#allocation2 + $0x18] sm:$0xf]
        %v937 = vld [vmem:[#allocation2 + $0x1c] sm:$0xf]
        %v938 = vld [vmem:[#allocation2 + $0x20] sm:$0x1]
        %v948 = vunpack.c.l.b16 %v930
        %v949 = vunpack.c.l.b16 %v931
        %v950 = vunpack.c.l.b16 %v932
        %v951 = vunpack.c.l.b16 %v933
        %v952 = vunpack.c.l.b16 %v934
        %v953 = vunpack.c.l.b16 %v935
        %v954 = vunpack.c.l.b16 %v936
        %v955 = vunpack.c.l.b16 %v937
        %v956 = vunpack.c.l.b16 %v938
        %v957 = vpack.c.b16 %v949, %v948
        %v958 = vpack.c.b16 %v951, %v950
        %v959 = vpack.c.b16 %v953, %v952
        %v960 = vpack.c.b16 %v955, %v954
        %v961 = vpack.c.b16 %v956, %v956
        %vm962 = vsmask.f32 7424
        %v964 = vshrl.u32 %v957, 16
        %v966 = vshll.u32 %v957, 16
        %v968 = vrot.slane %v966, 1
        %v969 = vor.u32 %v964, %v968
        %v971 = vshll.u32 %v958, 16
        %v973 = vrot.slane %v971, 1
        %v974 = vsel %vm962, %v969, %v973
        %v975 = vshrl.u32 %v958, 16
        %v977 = vor.u32 %v975, %v973
        %v979 = vshll.u32 %v959, 16
        %v981 = vrot.slane %v979, 1
        %v982 = vsel %vm962, %v977, %v981
        %v983 = vshrl.u32 %v959, 16
        %v985 = vor.u32 %v983, %v981
        %v987 = vshll.u32 %v960, 16
        %v989 = vrot.slane %v987, 1
        %v990 = vsel %vm962, %v985, %v989
        %v991 = vshrl.u32 %v960, 16
        %v993 = vor.u32 %v991, %v989
        %v995 = vshll.u32 %v961, 16
        %v997 = vrot.slane %v995, 1
        %v998 = vsel %vm962, %v993, %v997
        %999 = vrot.lane.b32.xlu0 %v974, 8
        %v1000 = vpop.permute.xlu0 %999
        %1001 = vrot.lane.b32.xlu0 %v982, 8
        %v1002 = vpop.permute.xlu0 %1001
        %1003 = vrot.lane.b32.xlu0 %v990, 8
        %v1004 = vpop.permute.xlu0 %1003
        %1005 = vrot.lane.b32.xlu0 %v998, 8
        %v1006 = vpop.permute.xlu0 %1005
        %vm1011 = vcmask 130112
        %1012 = vst.msk [vmem:[#allocation3] sm:$0xff] %vm1011, %v1000
        %1013 = vst.msk [vmem:[#allocation3 + $0x8] sm:$0xff] %vm1011, %v1002
        %1014 = vst.msk [vmem:[#allocation3 + $0x10] sm:$0xff] %vm1011, %v1004
        %1015 = vst.msk [vmem:[#allocation3 + $0x18] sm:$0xff] %vm1011, %v1006
        %v1016 = vld [vmem:[#allocation2] sm:$0xe]
        %v1017 = vld [vmem:[#allocation2 + $0x4] sm:$0xf]
        %v1018 = vld [vmem:[#allocation2 + $0x8] sm:$0xf]
        %v1019 = vld [vmem:[#allocation2 + $0xc] sm:$0xf]
        %v1020 = vld [vmem:[#allocation2 + $0x10] sm:$0xf]
        %v1021 = vld [vmem:[#allocation2 + $0x14] sm:$0xf]
        %v1022 = vld [vmem:[#allocation2 + $0x18] sm:$0xf]
        %v1023 = vld [vmem:[#allocation2 + $0x1c] sm:$0xf]
        %v1024 = vld [vmem:[#allocation2 + $0x20] sm:$0x1]
        %v1025 = vsel %vm853, 1, 0
        %v1026 = vsel %vm854, 1, 0
        %v1027 = vsel %vm855, 1, 0
        %v1028 = vsel %vm856, 1, 0
        %v1029 = vsel %vm857, 1, 0
        %v1030 = vsel %vm858, 1, 0
        %v1031 = vsel %vm859, 1, 0
        %v1032 = vsel %vm860, 1, 0
        %vm1033 = vcmp.eq.s32.totalorder %v1025, 1
        %vm1034 = vcmp.eq.s32.totalorder %v1026, 1
        %vm1035 = vcmp.eq.s32.totalorder %v1027, 1
        %vm1036 = vcmp.eq.s32.totalorder %v1028, 1
        %vm1037 = vcmp.eq.s32.totalorder %v1029, 1
        %vm1038 = vcmp.eq.s32.totalorder %v1030, 1
        %vm1039 = vcmp.eq.s32.totalorder %v1031, 1
        %vm1040 = vcmp.eq.s32.totalorder %v1032, 1
        %vm1041 = vmpackc.low %vm1033, %vm1033
        %vm1042 = vmpackc.low %vm1034, %vm1034
        %vm1043 = vmpackc.low %vm1035, %vm1035
        %vm1044 = vmpackc.low %vm1036, %vm1036
        %vm1045 = vmpackc.low %vm1037, %vm1037
        %vm1046 = vmpackc.low %vm1038, %vm1038
        %vm1047 = vmpackc.low %vm1039, %vm1039
        %vm1048 = vmpackc.low %vm1040, %vm1040
        %v1049 = vsel %vm1041, 65537, 0
        %v1050 = vsel %vm1042, 65537, 0
        %v1051 = vsel %vm1043, 65537, 0
        %v1052 = vsel %vm1044, 65537, 0
        %v1053 = vsel %vm1045, 65537, 0
        %v1054 = vsel %vm1046, 65537, 0
        %v1055 = vsel %vm1047, 65537, 0
        %v1056 = vsel %vm1048, 65537, 0
        %vm1057 = vcmask 1040384
        %vm1058 = vcmask 1044484
        %vm1059 = vmor %vm1057, %vm1058
        %v1060 = vrot.slane %v1049, 7
        %v1061 = vrot.slane %v1060, 4
        %v1062 = vrot.slane %v1050, 7
        %v1063 = vsel %vm1059, %v1061, %v1062
        %v1064 = vrot.slane %v1062, 4
        %v1065 = vrot.slane %v1051, 7
        %v1066 = vsel %vm1059, %v1064, %v1065
        %v1067 = vrot.slane %v1065, 4
        %v1068 = vrot.slane %v1052, 7
        %v1069 = vsel %vm1059, %v1067, %v1068
        %v1070 = vrot.slane %v1068, 4
        %v1071 = vrot.slane %v1053, 7
        %v1072 = vsel %vm1059, %v1070, %v1071
        %v1073 = vrot.slane %v1071, 4
        %v1074 = vrot.slane %v1054, 7
        %v1075 = vsel %vm1059, %v1073, %v1074
        %v1076 = vrot.slane %v1074, 4
        %v1077 = vrot.slane %v1055, 7
        %v1078 = vsel %vm1059, %v1076, %v1077
        %v1079 = vrot.slane %v1077, 4
        %v1080 = vrot.slane %v1056, 7
        %v1081 = vsel %vm1059, %v1079, %v1080
        %v1082 = vrot.slane %v1080, 4
        %vm1083 = vcmp.ne.s16.totalorder %v1060, 0
        %vm1084 = vcmp.ne.s16.totalorder %v1063, 0
        %vm1085 = vcmp.ne.s16.totalorder %v1066, 0
        %vm1086 = vcmp.ne.s16.totalorder %v1069, 0
        %vm1087 = vcmp.ne.s16.totalorder %v1072, 0
        %vm1088 = vcmp.ne.s16.totalorder %v1075, 0
        %vm1089 = vcmp.ne.s16.totalorder %v1078, 0
        %vm1090 = vcmp.ne.s16.totalorder %v1081, 0
        %vm1091 = vcmp.ne.s16.totalorder %v1082, 0
        %v1092 = vsel %vm1083, %v1016, 0
        %v1093 = vsel %vm1084, %v1017, 0
        %v1094 = vsel %vm1085, %v1018, 0
        %v1095 = vsel %vm1086, %v1019, 0
        %v1096 = vsel %vm1087, %v1020, 0
        %v1097 = vsel %vm1088, %v1021, 0
        %v1098 = vsel %vm1089, %v1022, 0
        %v1099 = vsel %vm1090, %v1023, 0
        %v1100 = vsel %vm1091, %v1024, 0
        %v1110 = vunpack.c.l.b16 %v1092
        %v1111 = vunpack.c.l.b16 %v1093
        %v1112 = vunpack.c.l.b16 %v1094
        %v1113 = vunpack.c.l.b16 %v1095
        %v1114 = vunpack.c.l.b16 %v1096
        %v1115 = vunpack.c.l.b16 %v1097
        %v1116 = vunpack.c.l.b16 %v1098
        %v1117 = vunpack.c.l.b16 %v1099
        %v1118 = vunpack.c.l.b16 %v1100
        %v1119 = vpack.c.b16 %v1111, %v1110
        %v1120 = vpack.c.b16 %v1113, %v1112
        %v1121 = vpack.c.b16 %v1115, %v1114
        %v1122 = vpack.c.b16 %v1117, %v1116
        %v1123 = vpack.c.b16 %v1118, %v1118
        %vm1124 = vcmask 1046528
        %v1125 = vrot.slane %v1119, 1
        %v1126 = vrot.slane %v1120, 1
        %v1127 = vsel %vm1124, %v1125, %v1126
        %v1128 = vrot.slane %v1121, 1
        %v1129 = vsel %vm1124, %v1126, %v1128
        %v1130 = vrot.slane %v1122, 1
        %v1131 = vsel %vm1124, %v1128, %v1130
        %v1132 = vrot.slane %v1123, 1
        %v1133 = vsel %vm1124, %v1130, %v1132
        %1134 = vrot.lane.b32.xlu0 %v1127, 16
        %v1135 = vpop.permute.xlu0 %1134
        %1136 = vrot.lane.b32.xlu0 %v1129, 16
        %v1137 = vpop.permute.xlu0 %1136
        %1138 = vrot.lane.b32.xlu0 %v1131, 16
        %v1139 = vpop.permute.xlu0 %1138
        %1140 = vrot.lane.b32.xlu0 %v1133, 16
        %v1141 = vpop.permute.xlu0 %1140
        %vm1146 = vcmask 195712
        %1147 = vst.msk [vmem:[#allocation3] sm:$0xff] %vm1146, %v1135
        %1148 = vst.msk [vmem:[#allocation3 + $0x8] sm:$0xff] %vm1146, %v1137
        %1149 = vst.msk [vmem:[#allocation3 + $0x10] sm:$0xff] %vm1146, %v1139
        %1150 = vst.msk [vmem:[#allocation3 + $0x18] sm:$0xff] %vm1146, %v1141
        %v1151 = vld [vmem:[#allocation2 + $0x4] sm:$0xf]
        %v1152 = vld [vmem:[#allocation2 + $0x8] sm:$0xf]
        %v1153 = vld [vmem:[#allocation2 + $0xc] sm:$0xf]
        %v1154 = vld [vmem:[#allocation2 + $0x10] sm:$0xf]
        %v1155 = vld [vmem:[#allocation2 + $0x14] sm:$0xf]
        %v1156 = vld [vmem:[#allocation2 + $0x18] sm:$0xf]
        %v1157 = vld [vmem:[#allocation2 + $0x1c] sm:$0xf]
        %v1158 = vld [vmem:[#allocation2 + $0x20] sm:$0xf]
        %v1159 = vsel %vm885, %v1151, 0
        %v1160 = vsel %vm886, %v1152, 0
        %v1161 = vsel %vm887, %v1153, 0
        %v1162 = vsel %vm888, %v1154, 0
        %v1163 = vsel %vm889, %v1155, 0
        %v1164 = vsel %vm890, %v1156, 0
        %v1165 = vsel %vm891, %v1157, 0
        %v1166 = vsel %vm892, %v1158, 0
        %v1175 = vunpack.c.l.b16 %v1159
        %v1176 = vunpack.c.l.b16 %v1160
        %v1177 = vunpack.c.l.b16 %v1161
        %v1178 = vunpack.c.l.b16 %v1162
        %v1179 = vunpack.c.l.b16 %v1163
        %v1180 = vunpack.c.l.b16 %v1164
        %v1181 = vunpack.c.l.b16 %v1165
        %v1182 = vunpack.c.l.b16 %v1166
        %v1183 = vpack.c.b16 %v1176, %v1175
        %v1184 = vpack.c.b16 %v1178, %v1177
        %v1185 = vpack.c.b16 %v1180, %v1179
        %v1186 = vpack.c.b16 %v1182, %v1181
        %1187 = vrot.lane.b32.xlu0 %v1183, 24
        %v1188 = vpop.permute.xlu0 %1187
        %1189 = vrot.lane.b32.xlu0 %v1184, 24
        %v1190 = vpop.permute.xlu0 %1189
        %1191 = vrot.lane.b32.xlu0 %v1185, 24
        %v1192 = vpop.permute.xlu0 %1191
        %1193 = vrot.lane.b32.xlu0 %v1186, 24
        %v1194 = vpop.permute.xlu0 %1193
        %vm1199 = vcmask 261312
        %1200 = vst.msk [vmem:[#allocation3] sm:$0xff] %vm1199, %v1188
        %1201 = vst.msk [vmem:[#allocation3 + $0x8] sm:$0xff] %vm1199, %v1190
        %1202 = vst.msk [vmem:[#allocation3 + $0x10] sm:$0xff] %vm1199, %v1192
        %1203 = vst.msk [vmem:[#allocation3 + $0x18] sm:$0xff] %vm1199, %v1194
        %v1204 = vld [vmem:[#allocation2 + $0x4] sm:$0xf]
        %v1205 = vld [vmem:[#allocation2 + $0x8] sm:$0xf]
        %v1206 = vld [vmem:[#allocation2 + $0xc] sm:$0xf]
        %v1207 = vld [vmem:[#allocation2 + $0x10] sm:$0xf]
        %v1208 = vld [vmem:[#allocation2 + $0x14] sm:$0xf]
        %v1209 = vld [vmem:[#allocation2 + $0x18] sm:$0xf]
        %v1210 = vld [vmem:[#allocation2 + $0x1c] sm:$0xf]
        %v1211 = vld [vmem:[#allocation2 + $0x20] sm:$0xf]
        %v1212 = vld [vmem:[#allocation2 + $0x24] sm:$0x1]
        %v1222 = vunpack.c.l.b16 %v1204
        %v1223 = vunpack.c.l.b16 %v1205
        %v1224 = vunpack.c.l.b16 %v1206
        %v1225 = vunpack.c.l.b16 %v1207
        %v1226 = vunpack.c.l.b16 %v1208
        %v1227 = vunpack.c.l.b16 %v1209
        %v1228 = vunpack.c.l.b16 %v1210
        %v1229 = vunpack.c.l.b16 %v1211
        %v1230 = vunpack.c.l.b16 %v1212
        %v1231 = vpack.c.b16 %v1223, %v1222
        %v1232 = vpack.c.b16 %v1225, %v1224
        %v1233 = vpack.c.b16 %v1227, %v1226
        %v1234 = vpack.c.b16 %v1229, %v1228
        %v1235 = vpack.c.b16 %v1230, %v1230
        %v1237 = vshrl.u32 %v1231, 16
        %v1239 = vshll.u32 %v1231, 16
        %v1241 = vrot.slane %v1239, 1
        %v1242 = vor.u32 %v1237, %v1241
        %v1244 = vshll.u32 %v1232, 16
        %v1246 = vrot.slane %v1244, 1
        %v1247 = vsel %vm962, %v1242, %v1246
        %v1248 = vshrl.u32 %v1232, 16
        %v1250 = vor.u32 %v1248, %v1246
        %v1252 = vshll.u32 %v1233, 16
        %v1254 = vrot.slane %v1252, 1
        %v1255 = vsel %vm962, %v1250, %v1254
        %v1256 = vshrl.u32 %v1233, 16
        %v1258 = vor.u32 %v1256, %v1254
        %v1260 = vshll.u32 %v1234, 16
        %v1262 = vrot.slane %v1260, 1
        %v1263 = vsel %vm962, %v1258, %v1262
        %v1264 = vshrl.u32 %v1234, 16
        %v1266 = vor.u32 %v1264, %v1262
        %v1268 = vshll.u32 %v1235, 16
        %v1270 = vrot.slane %v1268, 1
        %v1271 = vsel %vm962, %v1266, %v1270
        %1272 = vrot.lane.b32.xlu0 %v1247, 32
        %v1273 = vpop.permute.xlu0 %1272
        %1274 = vrot.lane.b32.xlu0 %v1255, 32
        %v1275 = vpop.permute.xlu0 %1274
        %1276 = vrot.lane.b32.xlu0 %v1263, 32
        %v1277 = vpop.permute.xlu0 %1276
        %1278 = vrot.lane.b32.xlu0 %v1271, 32
        %v1279 = vpop.permute.xlu0 %1278
        %vm1284 = vcmask 326912
        %1285 = vst.msk [vmem:[#allocation3] sm:$0xff] %vm1284, %v1273
        %1286 = vst.msk [vmem:[#allocation3 + $0x8] sm:$0xff] %vm1284, %v1275
        %1287 = vst.msk [vmem:[#allocation3 + $0x10] sm:$0xff] %vm1284, %v1277
        %1288 = vst.msk [vmem:[#allocation3 + $0x18] sm:$0xff] %vm1284, %v1279
        %v1289 = vld [vmem:[#allocation2 + $0x4] sm:$0xe]
        %v1290 = vld [vmem:[#allocation2 + $0x8] sm:$0xf]
        %v1291 = vld [vmem:[#allocation2 + $0xc] sm:$0xf]
        %v1292 = vld [vmem:[#allocation2 + $0x10] sm:$0xf]
        %v1293 = vld [vmem:[#allocation2 + $0x14] sm:$0xf]
        %v1294 = vld [vmem:[#allocation2 + $0x18] sm:$0xf]
        %v1295 = vld [vmem:[#allocation2 + $0x1c] sm:$0xf]
        %v1296 = vld [vmem:[#allocation2 + $0x20] sm:$0xf]
        %v1297 = vld [vmem:[#allocation2 + $0x24] sm:$0x1]
        %v1298 = vsel %vm1083, %v1289, 0
        %v1299 = vsel %vm1084, %v1290, 0
        %v1300 = vsel %vm1085, %v1291, 0
        %v1301 = vsel %vm1086, %v1292, 0
        %v1302 = vsel %vm1087, %v1293, 0
        %v1303 = vsel %vm1088, %v1294, 0
        %v1304 = vsel %vm1089, %v1295, 0
        %v1305 = vsel %vm1090, %v1296, 0
        %v1306 = vsel %vm1091, %v1297, 0
        %v1316 = vunpack.c.l.b16 %v1298
        %v1317 = vunpack.c.l.b16 %v1299
        %v1318 = vunpack.c.l.b16 %v1300
        %v1319 = vunpack.c.l.b16 %v1301
        %v1320 = vunpack.c.l.b16 %v1302
        %v1321 = vunpack.c.l.b16 %v1303
        %v1322 = vunpack.c.l.b16 %v1304
        %v1323 = vunpack.c.l.b16 %v1305
        %v1324 = vunpack.c.l.b16 %v1306
        %v1325 = vpack.c.b16 %v1317, %v1316
        %v1326 = vpack.c.b16 %v1319, %v1318
        %v1327 = vpack.c.b16 %v1321, %v1320
        %v1328 = vpack.c.b16 %v1323, %v1322
        %v1329 = vpack.c.b16 %v1324, %v1324
        %v1330 = vrot.slane %v1325, 1
        %v1331 = vrot.slane %v1326, 1
        %v1332 = vsel %vm1124, %v1330, %v1331
        %v1333 = vrot.slane %v1327, 1
        %v1334 = vsel %vm1124, %v1331, %v1333
        %v1335 = vrot.slane %v1328, 1
        %v1336 = vsel %vm1124, %v1333, %v1335
        %v1337 = vrot.slane %v1329, 1
        %v1338 = vsel %vm1124, %v1335, %v1337
        %1339 = vrot.lane.b32.xlu0 %v1332, 40
        %v1340 = vpop.permute.xlu0 %1339
        %1341 = vrot.lane.b32.xlu0 %v1334, 40
        %v1342 = vpop.permute.xlu0 %1341
        %1343 = vrot.lane.b32.xlu0 %v1336, 40
        %v1344 = vpop.permute.xlu0 %1343
        %1345 = vrot.lane.b32.xlu0 %v1338, 40
        %v1346 = vpop.permute.xlu0 %1345
        %vm1351 = vcmask 392512
        %1352 = vst.msk [vmem:[#allocation3] sm:$0xff] %vm1351, %v1340
        %1353 = vst.msk [vmem:[#allocation3 + $0x8] sm:$0xff] %vm1351, %v1342
        %1354 = vst.msk [vmem:[#allocation3 + $0x10] sm:$0xff] %vm1351, %v1344
        %1355 = vst.msk [vmem:[#allocation3 + $0x18] sm:$0xff] %vm1351, %v1346
        %v1356 = vld [vmem:[#allocation2 + $0x8] sm:$0xf]
        %v1357 = vld [vmem:[#allocation2 + $0xc] sm:$0xf]
        %v1358 = vld [vmem:[#allocation2 + $0x10] sm:$0xf]
        %v1359 = vld [vmem:[#allocation2 + $0x14] sm:$0xf]
        %v1360 = vld [vmem:[#allocation2 + $0x18] sm:$0xf]
        %v1361 = vld [vmem:[#allocation2 + $0x1c] sm:$0xf]
        %v1362 = vld [vmem:[#allocation2 + $0x20] sm:$0xf]
        %v1363 = vld [vmem:[#allocation2 + $0x24] sm:$0xf]
        %v1364 = vsel %vm885, %v1356, 0
        %v1365 = vsel %vm886, %v1357, 0
        %v1366 = vsel %vm887, %v1358, 0
        %v1367 = vsel %vm888, %v1359, 0
        %v1368 = vsel %vm889, %v1360, 0
        %v1369 = vsel %vm890, %v1361, 0
        %v1370 = vsel %vm891, %v1362, 0
        %v1371 = vsel %vm892, %v1363, 0
        %v1380 = vunpack.c.l.b16 %v1364
        %v1381 = vunpack.c.l.b16 %v1365
        %v1382 = vunpack.c.l.b16 %v1366
        %v1383 = vunpack.c.l.b16 %v1367
        %v1384 = vunpack.c.l.b16 %v1368
        %v1385 = vunpack.c.l.b16 %v1369
        %v1386 = vunpack.c.l.b16 %v1370
        %v1387 = vunpack.c.l.b16 %v1371
        %v1388 = vpack.c.b16 %v1381, %v1380
        %v1389 = vpack.c.b16 %v1383, %v1382
        %v1390 = vpack.c.b16 %v1385, %v1384
        %v1391 = vpack.c.b16 %v1387, %v1386
        %1392 = vrot.lane.b32.xlu0 %v1388, 48
        %v1393 = vpop.permute.xlu0 %1392
        %1394 = vrot.lane.b32.xlu0 %v1389, 48
        %v1395 = vpop.permute.xlu0 %1394
        %1396 = vrot.lane.b32.xlu0 %v1390, 48
        %v1397 = vpop.permute.xlu0 %1396
        %1398 = vrot.lane.b32.xlu0 %v1391, 48
        %v1399 = vpop.permute.xlu0 %1398
        %vm1404 = vcmask 458112
        %1405 = vst.msk [vmem:[#allocation3] sm:$0xff] %vm1404, %v1393
        %1406 = vst.msk [vmem:[#allocation3 + $0x8] sm:$0xff] %vm1404, %v1395
        %1407 = vst.msk [vmem:[#allocation3 + $0x10] sm:$0xff] %vm1404, %v1397
        %1408 = vst.msk [vmem:[#allocation3 + $0x18] sm:$0xff] %vm1404, %v1399
        %v1409 = vld [vmem:[#allocation2 + $0x8] sm:$0xf]
        %v1410 = vld [vmem:[#allocation2 + $0xc] sm:$0xf]
        %v1411 = vld [vmem:[#allocation2 + $0x10] sm:$0xf]
        %v1412 = vld [vmem:[#allocation2 + $0x14] sm:$0xf]
        %v1413 = vld [vmem:[#allocation2 + $0x18] sm:$0xf]
        %v1414 = vld [vmem:[#allocation2 + $0x1c] sm:$0xf]
        %v1415 = vld [vmem:[#allocation2 + $0x20] sm:$0xf]
        %v1416 = vld [vmem:[#allocation2 + $0x24] sm:$0xf]
        %v1417 = vld [vmem:[#allocation2 + $0x28] sm:$0x1]
        %v1427 = vunpack.c.l.b16 %v1409
        %v1428 = vunpack.c.l.b16 %v1410
        %v1429 = vunpack.c.l.b16 %v1411
        %v1430 = vunpack.c.l.b16 %v1412
        %v1431 = vunpack.c.l.b16 %v1413
        %v1432 = vunpack.c.l.b16 %v1414
        %v1433 = vunpack.c.l.b16 %v1415
        %v1434 = vunpack.c.l.b16 %v1416
        %v1435 = vunpack.c.l.b16 %v1417
        %v1436 = vpack.c.b16 %v1428, %v1427
        %v1437 = vpack.c.b16 %v1430, %v1429
        %v1438 = vpack.c.b16 %v1432, %v1431
        %v1439 = vpack.c.b16 %v1434, %v1433
        %v1440 = vpack.c.b16 %v1435, %v1435
        %v1442 = vshrl.u32 %v1436, 16
        %v1444 = vshll.u32 %v1436, 16
        %v1446 = vrot.slane %v1444, 1
        %v1447 = vor.u32 %v1442, %v1446
        %v1449 = vshll.u32 %v1437, 16
        %v1451 = vrot.slane %v1449, 1
        %v1452 = vsel %vm962, %v1447, %v1451
        %v1453 = vshrl.u32 %v1437, 16
        %v1455 = vor.u32 %v1453, %v1451
        %v1457 = vshll.u32 %v1438, 16
        %v1459 = vrot.slane %v1457, 1
        %v1460 = vsel %vm962, %v1455, %v1459
        %v1461 = vshrl.u32 %v1438, 16
        %v1463 = vor.u32 %v1461, %v1459
        %v1465 = vshll.u32 %v1439, 16
        %v1467 = vrot.slane %v1465, 1
        %v1468 = vsel %vm962, %v1463, %v1467
        %v1469 = vshrl.u32 %v1439, 16
        %v1471 = vor.u32 %v1469, %v1467
        %v1473 = vshll.u32 %v1440, 16
        %v1475 = vrot.slane %v1473, 1
        %v1476 = vsel %vm962, %v1471, %v1475
        %1477 = vrot.lane.b32.xlu0 %v1452, 56
        %v1478 = vpop.permute.xlu0 %1477
        %1479 = vrot.lane.b32.xlu0 %v1460, 56
        %v1480 = vpop.permute.xlu0 %1479
        %1481 = vrot.lane.b32.xlu0 %v1468, 56
        %v1482 = vpop.permute.xlu0 %1481
        %1483 = vrot.lane.b32.xlu0 %v1476, 56
        %v1484 = vpop.permute.xlu0 %1483
        %vm1489 = vcmask 523712
        %1490 = vst.msk [vmem:[#allocation3] sm:$0xff] %vm1489, %v1478
        %1491 = vst.msk [vmem:[#allocation3 + $0x8] sm:$0xff] %vm1489, %v1480
        %1492 = vst.msk [vmem:[#allocation3 + $0x10] sm:$0xff] %vm1489, %v1482
        %1493 = vst.msk [vmem:[#allocation3 + $0x18] sm:$0xff] %vm1489, %v1484
        %v1494 = vld [vmem:[#allocation2 + $0x8] sm:$0xe]
        %v1495 = vld [vmem:[#allocation2 + $0xc] sm:$0xf]
        %v1496 = vld [vmem:[#allocation2 + $0x10] sm:$0xf]
        %v1497 = vld [vmem:[#allocation2 + $0x14] sm:$0xf]
        %v1498 = vld [vmem:[#allocation2 + $0x18] sm:$0xf]
        %v1499 = vld [vmem:[#allocation2 + $0x1c] sm:$0xf]
        %v1500 = vld [vmem:[#allocation2 + $0x20] sm:$0xf]
        %v1501 = vld [vmem:[#allocation2 + $0x24] sm:$0xf]
        %v1502 = vld [vmem:[#allocation2 + $0x28] sm:$0x1]
        %v1503 = vsel %vm1083, %v1494, 0
        %v1504 = vsel %vm1084, %v1495, 0
        %v1505 = vsel %vm1085, %v1496, 0
        %v1506 = vsel %vm1086, %v1497, 0
        %v1507 = vsel %vm1087, %v1498, 0
        %v1508 = vsel %vm1088, %v1499, 0
        %v1509 = vsel %vm1089, %v1500, 0
        %v1510 = vsel %vm1090, %v1501, 0
        %v1511 = vsel %vm1091, %v1502, 0
        %v1521 = vunpack.c.l.b16 %v1503
        %v1522 = vunpack.c.l.b16 %v1504
        %v1523 = vunpack.c.l.b16 %v1505
        %v1524 = vunpack.c.l.b16 %v1506
        %v1525 = vunpack.c.l.b16 %v1507
        %v1526 = vunpack.c.l.b16 %v1508
        %v1527 = vunpack.c.l.b16 %v1509
        %v1528 = vunpack.c.l.b16 %v1510
        %v1529 = vunpack.c.l.b16 %v1511
        %v1530 = vpack.c.b16 %v1522, %v1521
        %v1531 = vpack.c.b16 %v1524, %v1523
        %v1532 = vpack.c.b16 %v1526, %v1525
        %v1533 = vpack.c.b16 %v1528, %v1527
        %v1534 = vpack.c.b16 %v1529, %v1529
        %v1535 = vrot.slane %v1530, 1
        %v1536 = vrot.slane %v1531, 1
        %v1537 = vsel %vm1124, %v1535, %v1536
        %v1538 = vrot.slane %v1532, 1
        %v1539 = vsel %vm1124, %v1536, %v1538
        %v1540 = vrot.slane %v1533, 1
        %v1541 = vsel %vm1124, %v1538, %v1540
        %v1542 = vrot.slane %v1534, 1
        %v1543 = vsel %vm1124, %v1540, %v1542
        %1544 = vrot.lane.b32.xlu0 %v1537, 64
        %v1545 = vpop.permute.xlu0 %1544
        %1546 = vrot.lane.b32.xlu0 %v1539, 64
        %v1547 = vpop.permute.xlu0 %1546
        %1548 = vrot.lane.b32.xlu0 %v1541, 64
        %v1549 = vpop.permute.xlu0 %1548
        %1550 = vrot.lane.b32.xlu0 %v1543, 64
        %v1551 = vpop.permute.xlu0 %1550
        %vm1556 = vcmask 589312
        %1557 = vst.msk [vmem:[#allocation3] sm:$0xff] %vm1556, %v1545
        %1558 = vst.msk [vmem:[#allocation3 + $0x8] sm:$0xff] %vm1556, %v1547
        %1559 = vst.msk [vmem:[#allocation3 + $0x10] sm:$0xff] %vm1556, %v1549
        %1560 = vst.msk [vmem:[#allocation3 + $0x18] sm:$0xff] %vm1556, %v1551
        %v1561 = vld [vmem:[#allocation3] sm:$0xff]
        %v1562 = vld [vmem:[#allocation3 + $0x8] sm:$0xff]
        %v1563 = vld [vmem:[#allocation3 + $0x10] sm:$0xff]
        %v1564 = vld [vmem:[#allocation3 + $0x18] sm:$0xff]
        %v1565 = vld [vmem:[#allocation4] sm:$0xf]
        %v1566 = vld [vmem:[#allocation4 + $0x4] sm:$0xf]
        %v1567 = vld [vmem:[#allocation4 + $0x8] sm:$0xf]
        %v1568 = vld [vmem:[#allocation4 + $0xc] sm:$0xf]
        %v1569 = vld [vmem:[#allocation4 + $0x10] sm:$0xf]
        %v1570 = vld [vmem:[#allocation4 + $0x14] sm:$0xf]
        %v1571 = vld [vmem:[#allocation4 + $0x18] sm:$0xf]
        %v1572 = vld [vmem:[#allocation4 + $0x1c] sm:$0xf]
        %v1573 = vld [vmem:[#allocation4 + $0x20] sm:$0xf]
        %v1574 = vld [vmem:[#allocation6] sm:$0x1]
        %v1576 = vlaneseq
        %v1577 = vshrl.u32 %v1576, 7
        %v1578 = vsub.s32 0, %v1577
        %v1579 = vrot.slane %v1574, %v1578
        %v1590 = vunpack.c.l.b16 %v1565
        %v1591 = vunpack.c.l.b16 %v1566
        %v1592 = vunpack.c.l.b16 %v1567
        %v1593 = vunpack.c.l.b16 %v1568
        %v1594 = vunpack.c.l.b16 %v1569
        %v1595 = vunpack.c.l.b16 %v1570
        %v1596 = vunpack.c.l.b16 %v1571
        %v1597 = vunpack.c.l.b16 %v1572
        %v1598 = vunpack.c.l.b16 %v1573
        %v1599 = vpack.c.b16 %v1591, %v1590
        %v1600 = vpack.c.b16 %v1593, %v1592
        %v1601 = vpack.c.b16 %v1595, %v1594
        %v1602 = vpack.c.b16 %v1597, %v1596
        %v1603 = vpack.c.b16 %v1598, %v1598
        %vm1608 = vcmask 588800
        %v1610 = vsel %vm1608, %v1561, 0
        %v1613 = vsel %vm1608, %v1562, 0
        %v1616 = vsel %vm1608, %v1563, 0
        %v1619 = vsel %vm1608, %v1564, 0
        %vm1621 = vcmask 1043456
        %v1623 = vsel %vm1621, %v1603, 0
        %1625 = vmatprep.subr.bf16.mxu0 0
        %1626 = vmatpush1.bf16.msra.mxu0 %v1599
        %1627 = vmatprep.subr.bf16.mxu0 0
        %1628 = vmatpush1.bf16.msra.mxu0 %v1600
        %1629 = vmatprep.subr.bf16.mxu0 0
        %1630 = vmatpush1.bf16.msra.mxu0 %v1601
        %1631 = vmatprep.subr.bf16.mxu0 0
        %1632 = vmatpush1.bf16.msra.mxu0 %v1602
        %1633 = vmatprep.subr.bf16.mxu0 0
        %1634 = vmatpush1.bf16.msra.mxu0 %v1623
        %1635 = vmatprep.subr.bf16.mxu0 0
        %1636 = vmatpush1.bf16.msra.mxu0 0
        %1637 = vmatprep.subr.bf16.mxu0 0
        %1638 = vmatpush1.bf16.msra.mxu0 0
        %1639 = vmatprep.subr.bf16.mxu0 0
        %1640 = vmatpush1.bf16.msra.mxu0 0
        %1641 = vmatprep.subr.bf16.mxu0 0
        %1642 = vmatpush1.bf16.msra.mxu0 0
        %1643 = vmatprep.subr.bf16.mxu0 0
        %1644 = vmatpush1.bf16.msra.mxu0 0
        %1645 = vmatprep.subr.bf16.mxu0 0
        %1646 = vmatpush1.bf16.msra.mxu0 0
        %1647 = vmatprep.subr.bf16.mxu0 0
        %1648 = vmatpush1.bf16.msra.mxu0 0
        %1649 = vmatprep.subr.bf16.mxu0 0
        %1650 = vmatpush1.bf16.msra.mxu0 0
        %1651 = vmatprep.subr.bf16.mxu0 0
        %1652 = vmatpush1.bf16.msra.mxu0 0
        %1653 = vmatprep.subr.bf16.mxu0 0
        %1654 = vmatpush1.bf16.msra.mxu0 0
        %1655 = vmatprep.subr.bf16.mxu0 0
        %1656 = vmatpush1.bf16.msra.mxu0 0
        %1657 = vmatprep.mubr.bf16.mxu0 0
        %1658 = vmatmul.mubr.bf16.gmra.mrb[0].mxu0 %v1610
        %v1659 = vpop.f32.mrb[0].mxu0
        %v1660 = vadd.f32 %v1579, %v1659
        %v1661 = vpop.f32.mrb[0].mxu0
        %v1662 = vpop.f32.mrb[0].mxu0
        %v1663 = vadd.f32 %v1579, %v1662
        %v1664 = vpop.f32.mrb[0].mxu0
        %1665 = vmatprep.mubr.bf16.mxu0 0
        %1666 = vmatmul.mubr.bf16.gmra.mrb[0].mxu0 %v1613
        %v1667 = vpop.f32.mrb[0].mxu0
        %v1668 = vadd.f32 %v1579, %v1667
        %v1669 = vpop.f32.mrb[0].mxu0
        %v1670 = vpop.f32.mrb[0].mxu0
        %v1671 = vadd.f32 %v1579, %v1670
        %v1672 = vpop.f32.mrb[0].mxu0
        %1673 = vmatprep.mubr.bf16.mxu0 0
        %1674 = vmatmul.mubr.bf16.gmra.mrb[0].mxu0 %v1616
        %v1675 = vpop.f32.mrb[0].mxu0
        %v1676 = vadd.f32 %v1579, %v1675
        %v1677 = vpop.f32.mrb[0].mxu0
        %v1678 = vpop.f32.mrb[0].mxu0
        %v1679 = vadd.f32 %v1579, %v1678
        %v1680 = vpop.f32.mrb[0].mxu0
        %1681 = vmatprep.mubr.bf16.mxu0 0
        %1682 = vmatmul.mubr.bf16.gmra.mrb[0].mxu0 %v1619
        %v1683 = vpop.f32.mrb[0].mxu0
        %v1684 = vadd.f32 %v1579, %v1683
        %v1685 = vpop.f32.mrb[0].mxu0
        %v1686 = vpop.f32.mrb[0].mxu0
        %v1687 = vadd.f32 %v1579, %v1686
        %v1688 = vpop.f32.mrb[0].mxu0
        %1689 = vdwg.mxu0
        %vm1690 = vcmp.gt.f32.partialorder %v1660, 0.0
        %vm1691 = vcmp.gt.f32.partialorder %v1663, 0.0
        %vm1692 = vcmp.gt.f32.partialorder %v1668, 0.0
        %vm1693 = vcmp.gt.f32.partialorder %v1671, 0.0
        %vm1694 = vcmp.gt.f32.partialorder %v1676, 0.0
        %vm1695 = vcmp.gt.f32.partialorder %v1679, 0.0
        %vm1696 = vcmp.gt.f32.partialorder %v1684, 0.0
        %vm1697 = vcmp.gt.f32.partialorder %v1687, 0.0
        %v1698 = vmul.f32 %v1660, 0.01
        %v1699 = vmul.f32 %v1663, 0.01
        %v1700 = vmul.f32 %v1668, 0.01
        %v1701 = vmul.f32 %v1671, 0.01
        %v1702 = vmul.f32 %v1676, 0.01
        %v1703 = vmul.f32 %v1679, 0.01
        %v1704 = vmul.f32 %v1684, 0.01
        %v1705 = vmul.f32 %v1687, 0.01
        %v1706 = vsel %vm1690, %v1660, %v1698
        %v1707 = vsel %vm1691, %v1663, %v1699
        %v1708 = vsel %vm1692, %v1668, %v1700
        %v1709 = vsel %vm1693, %v1671, %v1701
        %v1710 = vsel %vm1694, %v1676, %v1702
        %v1711 = vsel %vm1695, %v1679, %v1703
        %v1712 = vsel %vm1696, %v1684, %v1704
        %v1713 = vsel %vm1697, %v1687, %v1705
        %v1714 = vpack.c.bf16 %v1707, %v1706
        %v1715 = vpack.c.bf16 %v1709, %v1708
        %v1716 = vpack.c.bf16 %v1711, %v1710
        %v1717 = vpack.c.bf16 %v1713, %v1712
        %v1722 = vunpack.c.l.b16 %v1714
        %v1723 = vunpack.c.h.b16 %v1714
        %v1724 = vunpack.c.l.b16 %v1715
        %v1725 = vunpack.c.h.b16 %v1715
        %v1726 = vunpack.c.l.b16 %v1716
        %v1727 = vunpack.c.h.b16 %v1716
        %v1728 = vunpack.c.l.b16 %v1717
        %v1729 = vunpack.c.h.b16 %v1717
        %v1730 = vpack.c.b16 %v1722, %v1722
        %v1731 = vpack.c.b16 %v1723, %v1723
        %v1732 = vpack.c.b16 %v1724, %v1724
        %v1733 = vpack.c.b16 %v1725, %v1725
        %v1734 = vpack.c.b16 %v1726, %v1726
        %v1735 = vpack.c.b16 %v1727, %v1727
        %v1736 = vpack.c.b16 %v1728, %v1728
        %v1737 = vpack.c.b16 %v1729, %v1729
        %1746 = vst [vmem:[%s418] sm:$0xf] %v1730
        %1747 = vst [vmem:[%s418 + $0x4] sm:$0xf] %v1731
        %1748 = vst [vmem:[%s418 + $0x8] sm:$0xf] %v1732
        %1749 = vst [vmem:[%s418 + $0xc] sm:$0xf] %v1733
        %1750 = vst [vmem:[%s418 + $0x10] sm:$0xf] %v1734
        %1751 = vst [vmem:[%s418 + $0x14] sm:$0xf] %v1735
        %1752 = vst [vmem:[%s418 + $0x18] sm:$0xf] %v1736
        %1753 = vst [vmem:[%s418 + $0x1c] sm:$0xf] %v1737
        %s1754 = smul.u32 8, %s23
        %p1755 = scmp.lt.s32.totalorder %s22, 1
        %s1756 = scalar_select %p1755, %s22, 1
        %p1757 = scmp.lt.s32.totalorder %s1754, 7
        %s1758 = scalar_select %p1757, %s1754, 7
        %s1759 = smul.addr %s1756, 8
        %s1760 = sadd.s32 %s1758, %s1759
        %s1761 = smul.addr %s1760, 4
        %s1762 = scalar_lea.vmem %s5, %s1761
        // Predicated region
        $region57: #{down_forward.2} parent=39 // pred_check
          %p1763 = pneg %p192
        $region58: #{down_forward.2} parent=39 // pred_check_branch
          %1765 = sbr.rel (%p1763) target = $region60
        $region59: #{down_forward.2} parent=39 // pred_region
          %s1766 = smul.u32 8, %s23
        $region60: #{down_forward.2} parent=39 // pred_fallthru
          _
      $region40: #{down_forward.2} parent=5 // pred_fallthru
        _
      %p1767 = scmp.le.s32.totalorder 2, %s13
      // Predicated region
      $region61: #{down_forward.2} parent=5 // pred_check
        %p1768 = pneg %p1767
      $region62: #{down_forward.2} parent=5 // pred_check_branch
        %1770 = sbr.rel (%p1768) target = $region64
      $region63: #{down_forward.2} parent=5 // pred_region
        %s1771 = ssub.s32 %s13, 2
        // Predicated region
        $region65: #{down_forward.2} parent=63 // pred_check
          %p1772 = pneg %p198
        $region66: #{down_forward.2} parent=63 // pred_check_branch
          %1774 = sbr.rel (%p1772) target = $region68
        $region67: #{down_forward.2} parent=63 // pred_region
          %s1775 = smul.u32 8, %s25
          %p1776 = scmp.lt.s32.totalorder %s24, 1
          %s1777 = scalar_select %p1776, %s24, 1
          %p1778 = scmp.lt.s32.totalorder %s1775, 7
          %s1779 = scalar_select %p1778, %s1775, 7
          %s1780 = smul.addr %s1777, 8
          %s1781 = sadd.s32 %s1779, %s1780
          %s1782 = smul.addr %s1781, 4
          %s1783 = scalar_lea.vmem %s5, %s1782
        $region68: #{down_forward.2} parent=63 // pred_fallthru
          _
      $region64: #{down_forward.2} parent=5 // pred_fallthru
        _
    $region6: #{down_forward.2} parent=1 // loop_footer
      %s17 = sadd.s32 1, %s13
    $region7: #{down_forward.2} parent=1 // loop_footer_branch
      %12 = sbr.rel target = $region3
    $region8: #{down_forward.2} parent=1 // loop_exit
      _
    %1784 = vsyncpa [#allocation5], 1
    %s1785 = scalar_lea.sflag [#allocation5], 1
    %1786 = vsyncpa %s1785, 1
    %1787 = vsyncpa [#allocation7], 1

// kernel: down_forward.3
$region0: #{down_forward.3}
  #allocation0 [shape = 'u32[]', space=smem, size = 0x4, offset = 0x4, fixed_abs, tag = 'smem constant byte address 0x4 - core index']
  #allocation1 [shape = 'u32[144,128]{1,0:T(1,128)}', space=vmem, size = 0x12000, scoped, tag = 'internal scratch']
  #allocation2 [shape = 'bf16[82,128]{1,0:T(8,128)(2,1)}', space=vmem, size = 0x5800, scoped, tag = 'scratch operand']
  #allocation3 [shape = 'bf16[64,1152]{1,0:T(16,128)(2,1)}', space=vmem, size = 0x24000, scoped, tag = 'scratch operand']
  %s0 = inlined_call_operand.vmem [shape: bf16[2,64,128], index: 0, kind: input, shape index: {}, may-alias: {0,1,2}]
  %s1 = inlined_call_operand.vmem [shape: bf16[2,64,128], index: 1, kind: input, shape index: {}, may-alias: {0,1,2}]
  %s2 = inlined_call_operand.vmem [shape: bf16[2,64,128], index: 2, kind: input, shape index: {}, may-alias: {0,1,2}]
  %s3 = inlined_call_operand.vmem [shape: bf16[1152,128], index: 3, kind: input, shape index: {}]
  %s4 = inlined_call_operand.vmem [shape: f32[1,128], index: 4, kind: input, shape index: {}]
  %s5 = inlined_call_operand.vmem [shape: f32[2,64,128], index: 5, kind: output, shape index: {}]
  %s6 = sld [smem:[#allocation0]]
  $region61: #{down_forward.3} parent=0
    _
  %s8 = ssub.s32 1, %s6
  %s9 = scalar_select 0, %s8, %s6
  loop: start=0, step=1, limit=4
  $region2: #{down_forward.3} parent=0 // loop_pre_header
    _
  $region3: #{down_forward.3} parent=0 // loop_header
    %s11 = sphi 0, %s15
    %p12 = scmp.ge.s32.totalorder %s11, 4
    %s18 = sphi 0, %s30
    %s19 = sphi 0, %s26
    %s20 = sphi 0, %s18
    %s21 = sphi 0, %s19
    %s22 = sphi 0, %s20
    %s23 = sphi 0, %s21
    %s35 = sphi 0, %s37
    %s38 = sphi 0, %s35
    %s39 = sphi 0, %s38
    %s55 = sphi 0, %s39
    %s71 = sphi 0, %s73
    %s74 = sphi 0, %s71
    %s75 = sphi 0, %s74
    %s91 = sphi 0, %s75
    %s107 = sphi 0, %s109
    %s110 = sphi 0, %s107
    %s111 = sphi 0, %s110
    %s127 = sphi 0, %s111
    %s131 = sphi 0, %s131
    %s133 = sphi 0, %s131
    %s134 = sphi 0, %s133
    %s148 = sphi 0, %s134
    %s152 = sphi 0, %s152
    %s154 = sphi 0, %s152
    %s155 = sphi 0, %s154
    %s169 = sphi 0, %s155
    %s177 = sphi 0, %s179
    %s180 = sphi 0, %s177
    %s181 = sphi 0, %s180
    %s197 = sphi 0, %s181
  $region4: #{down_forward.3} parent=0 // loop_header_branch
    %14 = sbr.rel (%p12) target = $region8
  $region5: #{down_forward.3} parent=0 // loop_body
    %s16 = ssub.s32 %s11, 1
    %s17 = ssub.s32 %s11, 2
    %s24 = sadd.s32 1, %s19
    %p25 = scmp.ge.s32.totalorder %s24, 1
    %s26 = scalar_select %p25, 0, %s24
    %s27 = sadd.s32 1, %s18
    %s28 = scalar_select %p25, %s27, %s18
    %p29 = scmp.ge.s32.totalorder %s28, 2
    %s30 = scalar_select %p29, 0, %s28
    %s31 = ssub.s32 %s18, %s30
    %s32 = ssub.s32 %s19, %s26
    %s33 = sor.u32 %s31, %s32
    %p34 = scmp.eq.s32.totalorder %s33, 0
    %s36 = sadd.s32 %s35, 1
    %s37 = scalar_select %p34, %s35, %s36
    %p40 = pneg %p34
    %p41 = scmp.eq.s32.totalorder %s11, 1
    %p42 = por %p40, %p41
    %p43 = scmp.ne.s32.totalorder %s35, %s38
    %p44 = scmp.eq.s32.totalorder %s11, 0
    %p45 = por %p43, %p44
    %p46 = scmp.ne.s32.totalorder %s35, %s38
    %p47 = scmp.eq.s32.totalorder %s16, 1
    %p48 = por %p46, %p47
    %p49 = scmp.ne.s32.totalorder %s38, %s39
    %p50 = scmp.eq.s32.totalorder %s16, 0
    %p51 = por %p49, %p50
    %p52 = scmp.ne.s32.totalorder %s38, %s39
    %p53 = scmp.eq.s32.totalorder %s17, 1
    %p54 = por %p52, %p53
    %p56 = scmp.ne.s32.totalorder %s39, %s55
    %p57 = scmp.eq.s32.totalorder %s17, 0
    %p58 = por %p56, %p57
    %s59 = smul.u32 %s19, 8
    %s60 = ssub.s32 %s59, 1
    %p61 = scmp.gt.s32.totalorder %s60, 0
    %s62 = scalar_select %p61, %s60, 0
    %s63 = smul.u32 %s26, 8
    %s64 = ssub.s32 %s63, 1
    %p65 = scmp.gt.s32.totalorder %s64, 0
    %s66 = scalar_select %p65, %s64, 0
    %s67 = ssub.s32 %s18, %s30
    %s68 = ssub.s32 %s62, %s66
    %s69 = sor.u32 %s67, %s68
    %p70 = scmp.eq.s32.totalorder %s69, 0
    %s72 = sadd.s32 %s71, 1
    %s73 = scalar_select %p70, %s71, %s72
    %p76 = pneg %p70
    %p77 = scmp.eq.s32.totalorder %s11, 1
    %p78 = por %p76, %p77
    %p79 = scmp.ne.s32.totalorder %s71, %s74
    %p80 = scmp.eq.s32.totalorder %s11, 0
    %p81 = por %p79, %p80
    %p82 = scmp.ne.s32.totalorder %s71, %s74
    %p83 = scmp.eq.s32.totalorder %s16, 1
    %p84 = por %p82, %p83
    %p85 = scmp.ne.s32.totalorder %s74, %s75
    %p86 = scmp.eq.s32.totalorder %s16, 0
    %p87 = por %p85, %p86
    %p88 = scmp.ne.s32.totalorder %s74, %s75
    %p89 = scmp.eq.s32.totalorder %s17, 1
    %p90 = por %p88, %p89
    %p92 = scmp.ne.s32.totalorder %s75, %s91
    %p93 = scmp.eq.s32.totalorder %s17, 0
    %p94 = por %p92, %p93
    %s95 = sadd.s32 %s19, 1
    %s96 = smul.u32 %s95, 8
    %p97 = scmp.lt.s32.totalorder %s96, 7
    %s98 = scalar_select %p97, %s96, 7
    %s99 = sadd.s32 %s26, 1
    %s100 = smul.u32 %s99, 8
    %p101 = scmp.lt.s32.totalorder %s100, 7
    %s102 = scalar_select %p101, %s100, 7
    %s103 = ssub.s32 %s18, %s30
    %s104 = ssub.s32 %s98, %s102
    %s105 = sor.u32 %s103, %s104
    %p106 = scmp.eq.s32.totalorder %s105, 0
    %s108 = sadd.s32 %s107, 1
    %s109 = scalar_select %p106, %s107, %s108
    %p112 = pneg %p106
    %p113 = scmp.eq.s32.totalorder %s11, 1
    %p114 = por %p112, %p113
    %p115 = scmp.ne.s32.totalorder %s107, %s110
    %p116 = scmp.eq.s32.totalorder %s11, 0
    %p117 = por %p115, %p116
    %p118 = scmp.ne.s32.totalorder %s107, %s110
    %p119 = scmp.eq.s32.totalorder %s16, 1
    %p120 = por %p118, %p119
    %p121 = scmp.ne.s32.totalorder %s110, %s111
    %p122 = scmp.eq.s32.totalorder %s16, 0
    %p123 = por %p121, %p122
    %p124 = scmp.ne.s32.totalorder %s110, %s111
    %p125 = scmp.eq.s32.totalorder %s17, 1
    %p126 = por %p124, %p125
    %p128 = scmp.ne.s32.totalorder %s111, %s127
    %p129 = scmp.eq.s32.totalorder %s17, 0
    %p130 = por %p128, %p129
    %s132 = sadd.s32 %s131, 1
    %p135 = scmp.eq.s32.totalorder %s11, 1
    %p136 = scmp.ne.s32.totalorder %s131, %s133
    %p137 = scmp.eq.s32.totalorder %s11, 0
    %p138 = por %p136, %p137
    %p139 = scmp.ne.s32.totalorder %s131, %s133
    %p140 = scmp.eq.s32.totalorder %s16, 1
    %p141 = por %p139, %p140
    %p142 = scmp.ne.s32.totalorder %s133, %s134
    %p143 = scmp.eq.s32.totalorder %s16, 0
    %p144 = por %p142, %p143
    %p145 = scmp.ne.s32.totalorder %s133, %s134
    %p146 = scmp.eq.s32.totalorder %s17, 1
    %p147 = por %p145, %p146
    %p149 = scmp.ne.s32.totalorder %s134, %s148
    %p150 = scmp.eq.s32.totalorder %s17, 0
    %p151 = por %p149, %p150
    %s153 = sadd.s32 %s152, 1
    %p156 = scmp.eq.s32.totalorder %s11, 1
    %p157 = scmp.ne.s32.totalorder %s152, %s154
    %p158 = scmp.eq.s32.totalorder %s11, 0
    %p159 = por %p157, %p158
    %p160 = scmp.ne.s32.totalorder %s152, %s154
    %p161 = scmp.eq.s32.totalorder %s16, 1
    %p162 = por %p160, %p161
    %p163 = scmp.ne.s32.totalorder %s154, %s155
    %p164 = scmp.eq.s32.totalorder %s16, 0
    %p165 = por %p163, %p164
    %p166 = scmp.ne.s32.totalorder %s154, %s155
    %p167 = scmp.eq.s32.totalorder %s17, 1
    %p168 = por %p166, %p167
    %p170 = scmp.ne.s32.totalorder %s155, %s169
    %p171 = scmp.eq.s32.totalorder %s17, 0
    %p172 = por %p170, %p171
    %s173 = ssub.s32 %s18, %s30
    %s174 = ssub.s32 %s19, %s26
    %s175 = sor.u32 %s173, %s174
    %p176 = scmp.eq.s32.totalorder %s175, 0
    %s178 = sadd.s32 %s177, 1
    %s179 = scalar_select %p176, %s177, %s178
    %p182 = pneg %p176
    %p183 = scmp.eq.s32.totalorder %s11, 1
    %p184 = por %p182, %p183
    %p185 = scmp.ne.s32.totalorder %s177, %s180
    %p186 = scmp.eq.s32.totalorder %s11, 0
    %p187 = por %p185, %p186
    %p188 = scmp.ne.s32.totalorder %s177, %s180
    %p189 = scmp.eq.s32.totalorder %s16, 1
    %p190 = por %p188, %p189
    %p191 = scmp.ne.s32.totalorder %s180, %s181
    %p192 = scmp.eq.s32.totalorder %s16, 0
    %p193 = por %p191, %p192
    %p194 = scmp.ne.s32.totalorder %s180, %s181
    %p195 = scmp.eq.s32.totalorder %s17, 1
    %p196 = por %p194, %p195
    %p198 = scmp.ne.s32.totalorder %s181, %s197
    %p199 = scmp.eq.s32.totalorder %s17, 0
    %p200 = por %p198, %p199
    %p201 = scmp.le.s32.totalorder 1, %s11
    %p202 = scmp.lt.s32.totalorder %s11, 3
    %p203 = pnand %p201, %p202
    %p204 = pneg %p203
    // Predicated region
    $region9: #{down_forward.3} parent=5 // pred_check
      _
    $region10: #{down_forward.3} parent=5 // pred_check_branch
      %206 = sbr.rel (%p203) target = $region12
    $region11: #{down_forward.3} parent=5 // pred_region
      %s207 = ssub.s32 %s11, 1
      // Predicated region
      $region13: #{down_forward.3} parent=11 // pred_check
        %p208 = pneg %p144
      $region14: #{down_forward.3} parent=11 // pred_check_branch
        %210 = sbr.rel (%p208) target = $region16
      $region15: #{down_forward.3} parent=11 // pred_region
        _
      $region16: #{down_forward.3} parent=11 // pred_fallthru
        _
      // Predicated region
      $region17: #{down_forward.3} parent=11 // pred_check
        %p211 = pneg %p165
      $region18: #{down_forward.3} parent=11 // pred_check_branch
        %213 = sbr.rel (%p211) target = $region20
      $region19: #{down_forward.3} parent=11 // pred_region
        _
      $region20: #{down_forward.3} parent=11 // pred_fallthru
        _
    $region12: #{down_forward.3} parent=5 // pred_fallthru
      _
    %p214 = scmp.lt.s32.totalorder %s11, 2
    // Predicated region
    $region21: #{down_forward.3} parent=5 // pred_check
      %p215 = pneg %p214
    $region22: #{down_forward.3} parent=5 // pred_check_branch
      %217 = sbr.rel (%p215) target = $region24
    $region23: #{down_forward.3} parent=5 // pred_region
      // Predicated region
      $region25: #{down_forward.3} parent=23 // pred_check
        %p218 = pneg %p45
      $region26: #{down_forward.3} parent=23 // pred_check_branch
        %220 = sbr.rel (%p218) target = $region28
      $region27: #{down_forward.3} parent=23 // pred_region
        %s221 = smul.u32 8, %s19
        %p222 = scmp.lt.s32.totalorder %s18, 1
        %s223 = scalar_select %p222, %s18, 1
        %p224 = scmp.lt.s32.totalorder %s221, 7
        %s225 = scalar_select %p224, %s221, 7
        %s226 = smul.addr %s223, 8
        %s227 = sadd.s32 %s225, %s226
        %s228 = smul.addr %s227, 4
        %s229 = scalar_lea.vmem %s0, %s228
        %s230 = smul.u32 8, %s19
      $region28: #{down_forward.3} parent=23 // pred_fallthru
        _
      // Predicated region
      $region29: #{down_forward.3} parent=23 // pred_check
        %p231 = pneg %p81
      $region30: #{down_forward.3} parent=23 // pred_check_branch
        %233 = sbr.rel (%p231) target = $region32
      $region31: #{down_forward.3} parent=23 // pred_region
        %s234 = smul.u32 %s19, 8
        %s235 = ssub.s32 %s234, 1
        %p236 = scmp.gt.s32.totalorder %s235, 0
        %s237 = scalar_select %p236, %s235, 0
        %p238 = scmp.lt.s32.totalorder %s18, 1
        %s239 = scalar_select %p238, %s18, 1
        %p240 = scmp.lt.s32.totalorder %s237, 7
        %s241 = scalar_select %p240, %s237, 7
        %s242 = smul.addr %s239, 8
        %s243 = sadd.s32 %s241, %s242
        %s244 = smul.addr %s243, 4
        %s245 = scalar_lea.vmem %s1, %s244
        %s246 = smul.u32 %s19, 8
        %s247 = ssub.s32 %s246, 1
        %p248 = scmp.gt.s32.totalorder %s247, 0
        %s249 = scalar_select %p248, %s247, 0
      $region32: #{down_forward.3} parent=23 // pred_fallthru
        _
      // Predicated region
      $region33: #{down_forward.3} parent=23 // pred_check
        %p250 = pneg %p117
      $region34: #{down_forward.3} parent=23 // pred_check_branch
        %252 = sbr.rel (%p250) target = $region36
      $region35: #{down_forward.3} parent=23 // pred_region
        %s253 = sadd.s32 %s19, 1
        %s254 = smul.u32 %s253, 8
        %p255 = scmp.lt.s32.totalorder %s254, 7
        %s256 = scalar_select %p255, %s254, 7
        %p257 = scmp.lt.s32.totalorder %s18, 1
        %s258 = scalar_select %p257, %s18, 1
        %p259 = scmp.lt.s32.totalorder %s256, 7
        %s260 = scalar_select %p259, %s256, 7
        %s261 = smul.addr %s258, 8
        %s262 = sadd.s32 %s260, %s261
        %s263 = smul.addr %s262, 4
        %s264 = scalar_lea.vmem %s2, %s263
        %s265 = sadd.s32 %s19, 1
        %s266 = smul.u32 %s265, 8
        %p267 = scmp.lt.s32.totalorder %s266, 7
        %s268 = scalar_select %p267, %s266, 7
      $region36: #{down_forward.3} parent=23 // pred_fallthru
        _
    $region24: #{down_forward.3} parent=5 // pred_fallthru
      _
    %p269 = scmp.le.s32.totalorder 1, %s11
    %p270 = scmp.lt.s32.totalorder %s11, 3
    %p271 = pnand %p269, %p270
    %p272 = pneg %p271
    // Predicated region
    $region37: #{down_forward.3} parent=5 // pred_check
      _
    $region38: #{down_forward.3} parent=5 // pred_check_branch
      %274 = sbr.rel (%p271) target = $region40
    $region39: #{down_forward.3} parent=5 // pred_region
      %s275 = ssub.s32 %s11, 1
      %s276 = smul.u32 8, %s21
      %p277 = scmp.lt.s32.totalorder %s20, 1
      %s278 = scalar_select %p277, %s20, 1
      %p279 = scmp.lt.s32.totalorder %s276, 7
      %s280 = scalar_select %p279, %s276, 7
      %s281 = smul.addr %s278, 8
      %s282 = sadd.s32 %s280, %s281
      %s283 = smul.addr %s282, 4
      %s284 = scalar_lea.vmem %s0, %s283
      %p285 = pneg %p51
      %p286 = pneg %p48
      %s287 = smul.u32 %s21, 8
      %s288 = ssub.s32 %s287, 1
      %p289 = scmp.gt.s32.totalorder %s288, 0
      %s290 = scalar_select %p289, %s288, 0
      %p291 = scmp.lt.s32.totalorder %s20, 1
      %s292 = scalar_select %p291, %s20, 1
      %p293 = scmp.lt.s32.totalorder %s290, 7
      %s294 = scalar_select %p293, %s290, 7
      %s295 = smul.addr %s292, 8
      %s296 = sadd.s32 %s294, %s295
      %s297 = smul.addr %s296, 4
      %s298 = scalar_lea.vmem %s1, %s297
      %p299 = pneg %p87
      %p300 = pneg %p84
      %s301 = sadd.s32 %s21, 1
      %s302 = smul.u32 %s301, 8
      %p303 = scmp.lt.s32.totalorder %s302, 7
      %s304 = scalar_select %p303, %s302, 7
      %p305 = scmp.lt.s32.totalorder %s20, 1
      %s306 = scalar_select %p305, %s20, 1
      %p307 = scmp.lt.s32.totalorder %s304, 7
      %s308 = scalar_select %p307, %s304, 7
      %s309 = smul.addr %s306, 8
      %s310 = sadd.s32 %s308, %s309
      %s311 = smul.addr %s310, 4
      %s312 = scalar_lea.vmem %s2, %s311
      %p313 = pneg %p123
      %p314 = pneg %p120
      %p315 = pneg %p144
      %p316 = pneg %p141
      %p317 = pneg %p165
      %p318 = pneg %p162
      %p319 = pneg %p193
      %p320 = pneg %p190
      %s321 = smul.u32 8, %s21
      %p322 = scmp.lt.s32.totalorder %s20, 1
      %s323 = scalar_select %p322, %s20, 1
      %p324 = scmp.lt.s32.totalorder %s321, 7
      %s325 = scalar_select %p324, %s321, 7
      %s326 = smul.addr %s323, 8
      %s327 = sadd.s32 %s325, %s326
      %s328 = smul.addr %s327, 8
      %s329 = scalar_lea.vmem %s5, %s328
      %s330 = smul.u32 8, %s21
      %p331 = scmp.lt.s32.totalorder %s20, 1
      %s332 = scalar_select %p331, %s20, 1
      %p333 = scmp.lt.s32.totalorder %s330, 7
      %s334 = scalar_select %p333, %s330, 7
      %s335 = smul.addr %s332, 8
      %s336 = sadd.s32 %s334, %s335
      %s337 = smul.addr %s336, 4
      %s338 = scalar_lea.vmem %s0, %s337
      %s339 = smul.u32 8, %s21
      %s340 = smul.u32 %s21, 8
      %s341 = ssub.s32 %s340, 1
      %p342 = scmp.gt.s32.totalorder %s341, 0
      %s343 = scalar_select %p342, %s341, 0
      %p344 = scmp.lt.s32.totalorder %s20, 1
      %s345 = scalar_select %p344, %s20, 1
      %p346 = scmp.lt.s32.totalorder %s343, 7
      %s347 = scalar_select %p346, %s343, 7
      %s348 = smul.addr %s345, 8
      %s349 = sadd.s32 %s347, %s348
      %s350 = smul.addr %s349, 4
      %s351 = scalar_lea.vmem %s1, %s350
      %s352 = smul.u32 %s21, 8
      %s353 = ssub.s32 %s352, 1
      %p354 = scmp.gt.s32.totalorder %s353, 0
      %s355 = scalar_select %p354, %s353, 0
      %s356 = sadd.s32 %s21, 1
      %s357 = smul.u32 %s356, 8
      %p358 = scmp.lt.s32.totalorder %s357, 7
      %s359 = scalar_select %p358, %s357, 7
      %p360 = scmp.lt.s32.totalorder %s20, 1
      %s361 = scalar_select %p360, %s20, 1
      %p362 = scmp.lt.s32.totalorder %s359, 7
      %s363 = scalar_select %p362, %s359, 7
      %s364 = smul.addr %s361, 8
      %s365 = sadd.s32 %s363, %s364
      %s366 = smul.addr %s365, 4
      %s367 = scalar_lea.vmem %s2, %s366
      %s368 = sadd.s32 %s21, 1
      %s369 = smul.u32 %s368, 8
      %p370 = scmp.lt.s32.totalorder %s369, 7
      %s371 = scalar_select %p370, %s369, 7
      %s372 = smul.u32 8, %s21
      %p373 = scmp.lt.s32.totalorder %s20, 1
      %s374 = scalar_select %p373, %s20, 1
      %p375 = scmp.lt.s32.totalorder %s372, 7
      %s376 = scalar_select %p375, %s372, 7
      %s377 = smul.addr %s374, 8
      %s378 = sadd.s32 %s376, %s377
      %s379 = smul.addr %s378, 8
      %s380 = scalar_lea.vmem %s5, %s379
      %s381 = smul.u32 8, %s21
      %385 = vst [vmem:[#allocation2] sm:$0xf] 0
      %386 = vst [vmem:[#allocation2 + $0x4] sm:$0xf] 0
      %387 = vst [vmem:[#allocation2 + $0x8] sm:$0xf] 0
      %388 = vst [vmem:[#allocation2 + $0xc] sm:$0xf] 0
      %389 = vst [vmem:[#allocation2 + $0x10] sm:$0xf] 0
      %390 = vst [vmem:[#allocation2 + $0x14] sm:$0xf] 0
      %391 = vst [vmem:[#allocation2 + $0x18] sm:$0xf] 0
      %392 = vst [vmem:[#allocation2 + $0x1c] sm:$0xf] 0
      %393 = vst [vmem:[#allocation2 + $0x20] sm:$0xf] 0
      %394 = vst [vmem:[#allocation2 + $0x24] sm:$0xf] 0
      %395 = vst [vmem:[#allocation2 + $0x28] sm:$0x1] 0
      %v396 = vld [vmem:[%s338] sm:$0xf]
      %v397 = vld [vmem:[%s338 + $0x4] sm:$0xf]
      %v398 = vld [vmem:[%s338 + $0x8] sm:$0xf]
      %v399 = vld [vmem:[%s338 + $0xc] sm:$0xf]
      %v400 = vld [vmem:[%s338 + $0x10] sm:$0xf]
      %v401 = vld [vmem:[%s338 + $0x14] sm:$0xf]
      %v402 = vld [vmem:[%s338 + $0x18] sm:$0xf]
      %v403 = vld [vmem:[%s338 + $0x1c] sm:$0xf]
      %vm404 = vsmask.f32 256
      %vm405 = vsmask.f32 4368
      %vm406 = vmor %vm404, %vm405
      %v408 = vshrl.u32 %v396, 16
      %v410 = vrot.slane %v408, 7
      %v411 = vshll.u32 %v396, 16
      %v413 = vor.u32 %v410, %v411
      %v414 = vrot.slane %v410, 4
      %v416 = vshrl.u32 %v397, 16
      %v418 = vrot.slane %v416, 7
      %v419 = vshll.u32 %v397, 16
      %v421 = vor.u32 %v418, %v419
      %v422 = vsel %vm406, %v414, %v421
      %v423 = vrot.slane %v418, 4
      %v425 = vshrl.u32 %v398, 16
      %v427 = vrot.slane %v425, 7
      %v428 = vshll.u32 %v398, 16
      %v430 = vor.u32 %v427, %v428
      %v431 = vsel %vm406, %v423, %v430
      %v432 = vrot.slane %v427, 4
      %v434 = vshrl.u32 %v399, 16
      %v436 = vrot.slane %v434, 7
      %v437 = vshll.u32 %v399, 16
      %v439 = vor.u32 %v436, %v437
      %v440 = vsel %vm406, %v432, %v439
      %v441 = vrot.slane %v436, 4
      %v443 = vshrl.u32 %v400, 16
      %v445 = vrot.slane %v443, 7
      %v446 = vshll.u32 %v400, 16
      %v448 = vor.u32 %v445, %v446
      %v449 = vsel %vm406, %v441, %v448
      %v450 = vrot.slane %v445, 4
      %v452 = vshrl.u32 %v401, 16
      %v454 = vrot.slane %v452, 7
      %v455 = vshll.u32 %v401, 16
      %v457 = vor.u32 %v454, %v455
      %v458 = vsel %vm406, %v450, %v457
      %v459 = vrot.slane %v454, 4
      %v461 = vshrl.u32 %v402, 16
      %v463 = vrot.slane %v461, 7
      %v464 = vshll.u32 %v402, 16
      %v466 = vor.u32 %v463, %v464
      %v467 = vsel %vm406, %v459, %v466
      %v468 = vrot.slane %v463, 4
      %v470 = vshrl.u32 %v403, 16
      %v472 = vrot.slane %v470, 7
      %v473 = vshll.u32 %v403, 16
      %v475 = vor.u32 %v472, %v473
      %v476 = vsel %vm406, %v468, %v475
      %v477 = vrot.slane %v472, 4
      %vm487 = vcmask 1043456
      %vm488 = vsmask.f32 7938
      %vm489 = vmand %vm487, %vm488
      %v490 = vld [vmem:[#allocation2 + $0x4] sm:$0xf]
      %v491 = vsel %vm489, %v413, %v490
      %492 = vst [vmem:[#allocation2 + $0x4] sm:$0xf] %v491
      %493 = vst [vmem:[#allocation2 + $0x8] sm:$0xf] %v422
      %494 = vst [vmem:[#allocation2 + $0xc] sm:$0xf] %v431
      %495 = vst [vmem:[#allocation2 + $0x10] sm:$0xf] %v440
      %496 = vst [vmem:[#allocation2 + $0x14] sm:$0xf] %v449
      %497 = vst [vmem:[#allocation2 + $0x18] sm:$0xf] %v458
      %498 = vst [vmem:[#allocation2 + $0x1c] sm:$0xf] %v467
      %499 = vst [vmem:[#allocation2 + $0x20] sm:$0xf] %v476
      %vm500 = vcmask 1040384
      %vm501 = vmand %vm500, %vm404
      %v502 = vld [vmem:[#allocation2 + $0x24] sm:$0x1]
      %v503 = vsel %vm501, %v477, %v502
      %504 = vst [vmem:[#allocation2 + $0x24] sm:$0x1] %v503
      %v505 = vld [vmem:[%s351] sm:$0xf]
      %v506 = vld [vmem:[%s367] sm:$0xf]
      %p507 = scmp.gt.s32.totalorder %s21, 0
      // Predicated region
      $region41: #{down_forward.3} parent=39 // pred_check
        %p508 = pneg %p507
      $region42: #{down_forward.3} parent=39 // pred_check_branch
        %510 = sbr.rel (%p508) target = $region44
      $region43: #{down_forward.3} parent=39 // pred_region
        %v512 = vshrl.u32 %v505, 16
        %v514 = vrot.slane %v512, 7
        %v515 = vshll.u32 %v505, 16
        %v517 = vor.u32 %v514, %v515
        %v518 = vrot.slane %v514, 4
        %v521 = vld [vmem:[#allocation2] sm:$0xf]
        %v522 = vsel %vm489, %v517, %v521
        %523 = vst [vmem:[#allocation2] sm:$0xf] %v522
        %v524 = vld [vmem:[#allocation2 + $0x4] sm:$0x1]
        %v525 = vsel %vm501, %v518, %v524
        %526 = vst [vmem:[#allocation2 + $0x4] sm:$0x1] %v525
      $region44: #{down_forward.3} parent=39 // pred_fallthru
        _
      %p527 = scmp.lt.s32.totalorder %s21, 0
      // Predicated region
      $region45: #{down_forward.3} parent=39 // pred_check
        %p528 = pneg %p527
      $region46: #{down_forward.3} parent=39 // pred_check_branch
        %530 = sbr.rel (%p528) target = $region48
      $region47: #{down_forward.3} parent=39 // pred_region
        %v532 = vshrl.u32 %v506, 16
        %v534 = vrot.slane %v532, 7
        %v535 = vshll.u32 %v506, 16
        %v537 = vor.u32 %v534, %v535
        %v538 = vrot.slane %v534, 4
        %v541 = vld [vmem:[#allocation2 + $0x24] sm:$0xf]
        %v542 = vsel %vm489, %v537, %v541
        %543 = vst [vmem:[#allocation2 + $0x24] sm:$0xf] %v542
        %v544 = vld [vmem:[#allocation2 + $0x28] sm:$0x1]
        %v545 = vsel %vm501, %v538, %v544
        %546 = vst [vmem:[#allocation2 + $0x28] sm:$0x1] %v545
      $region48: #{down_forward.3} parent=39 // pred_fallthru
        _
      %v547 = vlaneseq
      %v548 = vshrl.u32 %v547, 7
      %v549 = vadd.s32 %v548, 8
      %v550 = vadd.s32 %v548, 16
      %v551 = vadd.s32 %v548, 24
      %v552 = vadd.s32 %v548, 32
      %v553 = vadd.s32 %v548, 40
      %v554 = vadd.s32 %v548, 48
      %v555 = vadd.s32 %v548, 56
      %vm556 = vcmp.lt.s32.totalorder %v548, 0
      %v557 = vsub.s32 0, %v548
      %v558 = vsel %vm556, %v557, %v548
      %v559 = vshrl.u32 %v558, 3
      %v560 = vand.u32 %v558, 7
      %v561 = vsub.s32 0, %v560
      %v562 = vsel %vm556, %v561, %v560
      %vm563 = vcmp.lt.s32.totalorder %v549, 0
      %v564 = vsub.s32 0, %v549
      %v565 = vsel %vm563, %v564, %v549
      %v566 = vshrl.u32 %v565, 3
      %v567 = vand.u32 %v565, 7
      %v568 = vsub.s32 0, %v567
      %v569 = vsel %vm563, %v568, %v567
      %vm570 = vcmp.lt.s32.totalorder %v550, 0
      %v571 = vsub.s32 0, %v550
      %v572 = vsel %vm570, %v571, %v550
      %v573 = vshrl.u32 %v572, 3
      %v574 = vand.u32 %v572, 7
      %v575 = vsub.s32 0, %v574
      %v576 = vsel %vm570, %v575, %v574
      %vm577 = vcmp.lt.s32.totalorder %v551, 0
      %v578 = vsub.s32 0, %v551
      %v579 = vsel %vm577, %v578, %v551
      %v580 = vshrl.u32 %v579, 3
      %v581 = vand.u32 %v579, 7
      %v582 = vsub.s32 0, %v581
      %v583 = vsel %vm577, %v582, %v581
      %vm584 = vcmp.lt.s32.totalorder %v552, 0
      %v585 = vsub.s32 0, %v552
      %v586 = vsel %vm584, %v585, %v552
      %v587 = vshrl.u32 %v586, 3
      %v588 = vand.u32 %v586, 7
      %v589 = vsub.s32 0, %v588
      %v590 = vsel %vm584, %v589, %v588
      %vm591 = vcmp.lt.s32.totalorder %v553, 0
      %v592 = vsub.s32 0, %v553
      %v593 = vsel %vm591, %v592, %v553
      %v594 = vshrl.u32 %v593, 3
      %v595 = vand.u32 %v593, 7
      %v596 = vsub.s32 0, %v595
      %v597 = vsel %vm591, %v596, %v595
      %vm598 = vcmp.lt.s32.totalorder %v554, 0
      %v599 = vsub.s32 0, %v554
      %v600 = vsel %vm598, %v599, %v554
      %v601 = vshrl.u32 %v600, 3
      %v602 = vand.u32 %v600, 7
      %v603 = vsub.s32 0, %v602
      %v604 = vsel %vm598, %v603, %v602
      %vm605 = vcmp.lt.s32.totalorder %v555, 0
      %v606 = vsub.s32 0, %v555
      %v607 = vsel %vm605, %v606, %v555
      %v608 = vshrl.u32 %v607, 3
      %v609 = vand.u32 %v607, 7
      %v610 = vsub.s32 0, %v609
      %v611 = vsel %vm605, %v610, %v609
      %vm612 = vcmp.ne.s32.totalorder %v562, 0
      %vm613 = vcmp.ne.s32.totalorder %v569, 0
      %vm614 = vcmp.ne.s32.totalorder %v576, 0
      %vm615 = vcmp.ne.s32.totalorder %v583, 0
      %vm616 = vcmp.ne.s32.totalorder %v590, 0
      %vm617 = vcmp.ne.s32.totalorder %v597, 0
      %vm618 = vcmp.ne.s32.totalorder %v604, 0
      %vm619 = vcmp.ne.s32.totalorder %v611, 0
      %vm620 = vcmp.lt.s32.totalorder %v562, 0
      %vm621 = vcmp.lt.s32.totalorder %v569, 0
      %vm622 = vcmp.lt.s32.totalorder %v576, 0
      %vm623 = vcmp.lt.s32.totalorder %v583, 0
      %vm624 = vcmp.lt.s32.totalorder %v590, 0
      %vm625 = vcmp.lt.s32.totalorder %v597, 0
      %vm626 = vcmp.lt.s32.totalorder %v604, 0
      %vm627 = vcmp.lt.s32.totalorder %v611, 0
      %vm628 = vmand %vm620, %vm612
      %vm629 = vmand %vm621, %vm613
      %vm630 = vmand %vm622, %vm614
      %vm631 = vmand %vm623, %vm615
      %vm632 = vmand %vm624, %vm616
      %vm633 = vmand %vm625, %vm617
      %vm634 = vmand %vm626, %vm618
      %vm635 = vmand %vm627, %vm619
      %v636 = vadd.s32 %v562, 8
      %v637 = vadd.s32 %v569, 8
      %v638 = vadd.s32 %v576, 8
      %v639 = vadd.s32 %v583, 8
      %v640 = vadd.s32 %v590, 8
      %v641 = vadd.s32 %v597, 8
      %v642 = vadd.s32 %v604, 8
      %v643 = vadd.s32 %v611, 8
      %v644 = vsel %vm628, %v636, %v562
      %v645 = vsel %vm629, %v637, %v569
      %v646 = vsel %vm630, %v638, %v576
      %v647 = vsel %vm631, %v639, %v583
      %v648 = vsel %vm632, %v640, %v590
      %v649 = vsel %vm633, %v641, %v597
      %v650 = vsel %vm634, %v642, %v604
      %v651 = vsel %vm635, %v643, %v611
      %vm652 = vcmp.ne.s32.totalorder %v644, 0
      %vm653 = vcmp.ne.s32.totalorder %v645, 0
      %vm654 = vcmp.ne.s32.totalorder %v646, 0
      %vm655 = vcmp.ne.s32.totalorder %v647, 0
      %vm656 = vcmp.ne.s32.totalorder %v648, 0
      %vm657 = vcmp.ne.s32.totalorder %v649, 0
      %vm658 = vcmp.ne.s32.totalorder %v650, 0
      %vm659 = vcmp.ne.s32.totalorder %v651, 0
      %vm660 = vcmp.ne.s32.totalorder %v644, 7
      %vm661 = vcmp.ne.s32.totalorder %v645, 7
      %vm662 = vcmp.ne.s32.totalorder %v646, 7
      %vm663 = vcmp.ne.s32.totalorder %v647, 7
      %vm664 = vcmp.ne.s32.totalorder %v648, 7
      %vm665 = vcmp.ne.s32.totalorder %v649, 7
      %vm666 = vcmp.ne.s32.totalorder %v650, 7
      %vm667 = vcmp.ne.s32.totalorder %v651, 7
      %v668 = vld [vmem:[#allocation2] sm:$0xf]
      %v669 = vld [vmem:[#allocation2 + $0x4] sm:$0xf]
      %v670 = vld [vmem:[#allocation2 + $0x8] sm:$0xf]
      %v671 = vld [vmem:[#allocation2 + $0xc] sm:$0xf]
      %v672 = vld [vmem:[#allocation2 + $0x10] sm:$0xf]
      %v673 = vld [vmem:[#allocation2 + $0x14] sm:$0xf]
      %v674 = vld [vmem:[#allocation2 + $0x18] sm:$0xf]
      %v675 = vld [vmem:[#allocation2 + $0x1c] sm:$0xf]
      %v676 = vsel %vm652, 1, 0
      %v677 = vsel %vm653, 1, 0
      %v678 = vsel %vm654, 1, 0
      %v679 = vsel %vm655, 1, 0
      %v680 = vsel %vm656, 1, 0
      %v681 = vsel %vm657, 1, 0
      %v682 = vsel %vm658, 1, 0
      %v683 = vsel %vm659, 1, 0
      %vm684 = vcmp.eq.s32.totalorder %v676, 1
      %vm685 = vcmp.eq.s32.totalorder %v677, 1
      %vm686 = vcmp.eq.s32.totalorder %v678, 1
      %vm687 = vcmp.eq.s32.totalorder %v679, 1
      %vm688 = vcmp.eq.s32.totalorder %v680, 1
      %vm689 = vcmp.eq.s32.totalorder %v681, 1
      %vm690 = vcmp.eq.s32.totalorder %v682, 1
      %vm691 = vcmp.eq.s32.totalorder %v683, 1
      %vm692 = vmpackc.low %vm684, %vm684
      %vm693 = vmpackc.low %vm685, %vm685
      %vm694 = vmpackc.low %vm686, %vm686
      %vm695 = vmpackc.low %vm687, %vm687
      %vm696 = vmpackc.low %vm688, %vm688
      %vm697 = vmpackc.low %vm689, %vm689
      %vm698 = vmpackc.low %vm690, %vm690
      %vm699 = vmpackc.low %vm691, %vm691
      %v700 = vsel %vm692, %v668, 0
      %v701 = vsel %vm693, %v669, 0
      %v702 = vsel %vm694, %v670, 0
      %v703 = vsel %vm695, %v671, 0
      %v704 = vsel %vm696, %v672, 0
      %v705 = vsel %vm697, %v673, 0
      %v706 = vsel %vm698, %v674, 0
      %v707 = vsel %vm699, %v675, 0
      %v716 = vunpack.c.l.b16 %v700
      %v717 = vunpack.c.l.b16 %v701
      %v718 = vunpack.c.l.b16 %v702
      %v719 = vunpack.c.l.b16 %v703
      %v720 = vunpack.c.l.b16 %v704
      %v721 = vunpack.c.l.b16 %v705
      %v722 = vunpack.c.l.b16 %v706
      %v723 = vunpack.c.l.b16 %v707
      %v724 = vpack.c.b16 %v717, %v716
      %v725 = vpack.c.b16 %v719, %v718
      %v726 = vpack.c.b16 %v721, %v720
      %v727 = vpack.c.b16 %v723, %v722
      %732 = vst [vmem:[#allocation3] sm:$0xff] %v724
      %733 = vst [vmem:[#allocation3 + $0x48] sm:$0xff] %v725
      %734 = vst [vmem:[#allocation3 + $0x90] sm:$0xff] %v726
      %735 = vst [vmem:[#allocation3 + $0xd8] sm:$0xff] %v727
      %v736 = vld [vmem:[#allocation2] sm:$0xf]
      %v737 = vld [vmem:[#allocation2 + $0x4] sm:$0xf]
      %v738 = vld [vmem:[#allocation2 + $0x8] sm:$0xf]
      %v739 = vld [vmem:[#allocation2 + $0xc] sm:$0xf]
      %v740 = vld [vmem:[#allocation2 + $0x10] sm:$0xf]
      %v741 = vld [vmem:[#allocation2 + $0x14] sm:$0xf]
      %v742 = vld [vmem:[#allocation2 + $0x18] sm:$0xf]
      %v743 = vld [vmem:[#allocation2 + $0x1c] sm:$0xf]
      %v744 = vld [vmem:[#allocation2 + $0x20] sm:$0x1]
      %v754 = vunpack.c.l.b16 %v736
      %v755 = vunpack.c.l.b16 %v737
      %v756 = vunpack.c.l.b16 %v738
      %v757 = vunpack.c.l.b16 %v739
      %v758 = vunpack.c.l.b16 %v740
      %v759 = vunpack.c.l.b16 %v741
      %v760 = vunpack.c.l.b16 %v742
      %v761 = vunpack.c.l.b16 %v743
      %v762 = vunpack.c.l.b16 %v744
      %v763 = vpack.c.b16 %v755, %v754
      %v764 = vpack.c.b16 %v757, %v756
      %v765 = vpack.c.b16 %v759, %v758
      %v766 = vpack.c.b16 %v761, %v760
      %v767 = vpack.c.b16 %v762, %v762
      %vm768 = vsmask.f32 7424
      %v770 = vshrl.u32 %v763, 16
      %v772 = vshll.u32 %v763, 16
      %v774 = vrot.slane %v772, 1
      %v775 = vor.u32 %v770, %v774
      %v777 = vshll.u32 %v764, 16
      %v779 = vrot.slane %v777, 1
      %v780 = vsel %vm768, %v775, %v779
      %v781 = vshrl.u32 %v764, 16
      %v783 = vor.u32 %v781, %v779
      %v785 = vshll.u32 %v765, 16
      %v787 = vrot.slane %v785, 1
      %v788 = vsel %vm768, %v783, %v787
      %v789 = vshrl.u32 %v765, 16
      %v791 = vor.u32 %v789, %v787
      %v793 = vshll.u32 %v766, 16
      %v795 = vrot.slane %v793, 1
      %v796 = vsel %vm768, %v791, %v795
      %v797 = vshrl.u32 %v766, 16
      %v799 = vor.u32 %v797, %v795
      %v801 = vshll.u32 %v767, 16
      %v803 = vrot.slane %v801, 1
      %v804 = vsel %vm768, %v799, %v803
      %809 = vst [vmem:[#allocation3 + $0x8] sm:$0xff] %v780
      %810 = vst [vmem:[#allocation3 + $0x50] sm:$0xff] %v788
      %811 = vst [vmem:[#allocation3 + $0x98] sm:$0xff] %v796
      %812 = vst [vmem:[#allocation3 + $0xe0] sm:$0xff] %v804
      %v813 = vld [vmem:[#allocation2] sm:$0xe]
      %v814 = vld [vmem:[#allocation2 + $0x4] sm:$0xf]
      %v815 = vld [vmem:[#allocation2 + $0x8] sm:$0xf]
      %v816 = vld [vmem:[#allocation2 + $0xc] sm:$0xf]
      %v817 = vld [vmem:[#allocation2 + $0x10] sm:$0xf]
      %v818 = vld [vmem:[#allocation2 + $0x14] sm:$0xf]
      %v819 = vld [vmem:[#allocation2 + $0x18] sm:$0xf]
      %v820 = vld [vmem:[#allocation2 + $0x1c] sm:$0xf]
      %v821 = vld [vmem:[#allocation2 + $0x20] sm:$0x1]
      %v822 = vsel %vm660, 1, 0
      %v823 = vsel %vm661, 1, 0
      %v824 = vsel %vm662, 1, 0
      %v825 = vsel %vm663, 1, 0
      %v826 = vsel %vm664, 1, 0
      %v827 = vsel %vm665, 1, 0
      %v828 = vsel %vm666, 1, 0
      %v829 = vsel %vm667, 1, 0
      %vm830 = vcmp.eq.s32.totalorder %v822, 1
      %vm831 = vcmp.eq.s32.totalorder %v823, 1
      %vm832 = vcmp.eq.s32.totalorder %v824, 1
      %vm833 = vcmp.eq.s32.totalorder %v825, 1
      %vm834 = vcmp.eq.s32.totalorder %v826, 1
      %vm835 = vcmp.eq.s32.totalorder %v827, 1
      %vm836 = vcmp.eq.s32.totalorder %v828, 1
      %vm837 = vcmp.eq.s32.totalorder %v829, 1
      %vm838 = vmpackc.low %vm830, %vm830
      %vm839 = vmpackc.low %vm831, %vm831
      %vm840 = vmpackc.low %vm832, %vm832
      %vm841 = vmpackc.low %vm833, %vm833
      %vm842 = vmpackc.low %vm834, %vm834
      %vm843 = vmpackc.low %vm835, %vm835
      %vm844 = vmpackc.low %vm836, %vm836
      %vm845 = vmpackc.low %vm837, %vm837
      %v846 = vsel %vm838, 65537, 0
      %v847 = vsel %vm839, 65537, 0
      %v848 = vsel %vm840, 65537, 0
      %v849 = vsel %vm841, 65537, 0
      %v850 = vsel %vm842, 65537, 0
      %v851 = vsel %vm843, 65537, 0
      %v852 = vsel %vm844, 65537, 0
      %v853 = vsel %vm845, 65537, 0
      %vm854 = vcmask 1044484
      %vm855 = vmor %vm500, %vm854
      %v856 = vrot.slane %v846, 7
      %v857 = vrot.slane %v856, 4
      %v858 = vrot.slane %v847, 7
      %v859 = vsel %vm855, %v857, %v858
      %v860 = vrot.slane %v858, 4
      %v861 = vrot.slane %v848, 7
      %v862 = vsel %vm855, %v860, %v861
      %v863 = vrot.slane %v861, 4
      %v864 = vrot.slane %v849, 7
      %v865 = vsel %vm855, %v863, %v864
      %v866 = vrot.slane %v864, 4
      %v867 = vrot.slane %v850, 7
      %v868 = vsel %vm855, %v866, %v867
      %v869 = vrot.slane %v867, 4
      %v870 = vrot.slane %v851, 7
      %v871 = vsel %vm855, %v869, %v870
      %v872 = vrot.slane %v870, 4
      %v873 = vrot.slane %v852, 7
      %v874 = vsel %vm855, %v872, %v873
      %v875 = vrot.slane %v873, 4
      %v876 = vrot.slane %v853, 7
      %v877 = vsel %vm855, %v875, %v876
      %v878 = vrot.slane %v876, 4
      %vm879 = vcmp.ne.s16.totalorder %v856, 0
      %vm880 = vcmp.ne.s16.totalorder %v859, 0
      %vm881 = vcmp.ne.s16.totalorder %v862, 0
      %vm882 = vcmp.ne.s16.totalorder %v865, 0
      %vm883 = vcmp.ne.s16.totalorder %v868, 0
      %vm884 = vcmp.ne.s16.totalorder %v871, 0
      %vm885 = vcmp.ne.s16.totalorder %v874, 0
      %vm886 = vcmp.ne.s16.totalorder %v877, 0
      %vm887 = vcmp.ne.s16.totalorder %v878, 0
      %v888 = vsel %vm879, %v813, 0
      %v889 = vsel %vm880, %v814, 0
      %v890 = vsel %vm881, %v815, 0
      %v891 = vsel %vm882, %v816, 0
      %v892 = vsel %vm883, %v817, 0
      %v893 = vsel %vm884, %v818, 0
      %v894 = vsel %vm885, %v819, 0
      %v895 = vsel %vm886, %v820, 0
      %v896 = vsel %vm887, %v821, 0
      %v906 = vunpack.c.l.b16 %v888
      %v907 = vunpack.c.l.b16 %v889
      %v908 = vunpack.c.l.b16 %v890
      %v909 = vunpack.c.l.b16 %v891
      %v910 = vunpack.c.l.b16 %v892
      %v911 = vunpack.c.l.b16 %v893
      %v912 = vunpack.c.l.b16 %v894
      %v913 = vunpack.c.l.b16 %v895
      %v914 = vunpack.c.l.b16 %v896
      %v915 = vpack.c.b16 %v907, %v906
      %v916 = vpack.c.b16 %v909, %v908
      %v917 = vpack.c.b16 %v911, %v910
      %v918 = vpack.c.b16 %v913, %v912
      %v919 = vpack.c.b16 %v914, %v914
      %vm920 = vcmask 1046528
      %v921 = vrot.slane %v915, 1
      %v922 = vrot.slane %v916, 1
      %v923 = vsel %vm920, %v921, %v922
      %v924 = vrot.slane %v917, 1
      %v925 = vsel %vm920, %v922, %v924
      %v926 = vrot.slane %v918, 1
      %v927 = vsel %vm920, %v924, %v926
      %v928 = vrot.slane %v919, 1
      %v929 = vsel %vm920, %v926, %v928
      %934 = vst [vmem:[#allocation3 + $0x10] sm:$0xff] %v923
      %935 = vst [vmem:[#allocation3 + $0x58] sm:$0xff] %v925
      %936 = vst [vmem:[#allocation3 + $0xa0] sm:$0xff] %v927
      %937 = vst [vmem:[#allocation3 + $0xe8] sm:$0xff] %v929
      %v938 = vld [vmem:[#allocation2 + $0x4] sm:$0xf]
      %v939 = vld [vmem:[#allocation2 + $0x8] sm:$0xf]
      %v940 = vld [vmem:[#allocation2 + $0xc] sm:$0xf]
      %v941 = vld [vmem:[#allocation2 + $0x10] sm:$0xf]
      %v942 = vld [vmem:[#allocation2 + $0x14] sm:$0xf]
      %v943 = vld [vmem:[#allocation2 + $0x18] sm:$0xf]
      %v944 = vld [vmem:[#allocation2 + $0x1c] sm:$0xf]
      %v945 = vld [vmem:[#allocation2 + $0x20] sm:$0xf]
      %v946 = vsel %vm692, %v938, 0
      %v947 = vsel %vm693, %v939, 0
      %v948 = vsel %vm694, %v940, 0
      %v949 = vsel %vm695, %v941, 0
      %v950 = vsel %vm696, %v942, 0
      %v951 = vsel %vm697, %v943, 0
      %v952 = vsel %vm698, %v944, 0
      %v953 = vsel %vm699, %v945, 0
      %v962 = vunpack.c.l.b16 %v946
      %v963 = vunpack.c.l.b16 %v947
      %v964 = vunpack.c.l.b16 %v948
      %v965 = vunpack.c.l.b16 %v949
      %v966 = vunpack.c.l.b16 %v950
      %v967 = vunpack.c.l.b16 %v951
      %v968 = vunpack.c.l.b16 %v952
      %v969 = vunpack.c.l.b16 %v953
      %v970 = vpack.c.b16 %v963, %v962
      %v971 = vpack.c.b16 %v965, %v964
      %v972 = vpack.c.b16 %v967, %v966
      %v973 = vpack.c.b16 %v969, %v968
      %978 = vst [vmem:[#allocation3 + $0x18] sm:$0xff] %v970
      %979 = vst [vmem:[#allocation3 + $0x60] sm:$0xff] %v971
      %980 = vst [vmem:[#allocation3 + $0xa8] sm:$0xff] %v972
      %981 = vst [vmem:[#allocation3 + $0xf0] sm:$0xff] %v973
      %v982 = vld [vmem:[#allocation2 + $0x4] sm:$0xf]
      %v983 = vld [vmem:[#allocation2 + $0x8] sm:$0xf]
      %v984 = vld [vmem:[#allocation2 + $0xc] sm:$0xf]
      %v985 = vld [vmem:[#allocation2 + $0x10] sm:$0xf]
      %v986 = vld [vmem:[#allocation2 + $0x14] sm:$0xf]
      %v987 = vld [vmem:[#allocation2 + $0x18] sm:$0xf]
      %v988 = vld [vmem:[#allocation2 + $0x1c] sm:$0xf]
      %v989 = vld [vmem:[#allocation2 + $0x20] sm:$0xf]
      %v990 = vld [vmem:[#allocation2 + $0x24] sm:$0x1]
      %v1000 = vunpack.c.l.b16 %v982
      %v1001 = vunpack.c.l.b16 %v983
      %v1002 = vunpack.c.l.b16 %v984
      %v1003 = vunpack.c.l.b16 %v985
      %v1004 = vunpack.c.l.b16 %v986
      %v1005 = vunpack.c.l.b16 %v987
      %v1006 = vunpack.c.l.b16 %v988
      %v1007 = vunpack.c.l.b16 %v989
      %v1008 = vunpack.c.l.b16 %v990
      %v1009 = vpack.c.b16 %v1001, %v1000
      %v1010 = vpack.c.b16 %v1003, %v1002
      %v1011 = vpack.c.b16 %v1005, %v1004
      %v1012 = vpack.c.b16 %v1007, %v1006
      %v1013 = vpack.c.b16 %v1008, %v1008
      %v1015 = vshrl.u32 %v1009, 16
      %v1017 = vshll.u32 %v1009, 16
      %v1019 = vrot.slane %v1017, 1
      %v1020 = vor.u32 %v1015, %v1019
      %v1022 = vshll.u32 %v1010, 16
      %v1024 = vrot.slane %v1022, 1
      %v1025 = vsel %vm768, %v1020, %v1024
      %v1026 = vshrl.u32 %v1010, 16
      %v1028 = vor.u32 %v1026, %v1024
      %v1030 = vshll.u32 %v1011, 16
      %v1032 = vrot.slane %v1030, 1
      %v1033 = vsel %vm768, %v1028, %v1032
      %v1034 = vshrl.u32 %v1011, 16
      %v1036 = vor.u32 %v1034, %v1032
      %v1038 = vshll.u32 %v1012, 16
      %v1040 = vrot.slane %v1038, 1
      %v1041 = vsel %vm768, %v1036, %v1040
      %v1042 = vshrl.u32 %v1012, 16
      %v1044 = vor.u32 %v1042, %v1040
      %v1046 = vshll.u32 %v1013, 16
      %v1048 = vrot.slane %v1046, 1
      %v1049 = vsel %vm768, %v1044, %v1048
      %1054 = vst [vmem:[#allocation3 + $0x20] sm:$0xff] %v1025
      %1055 = vst [vmem:[#allocation3 + $0x68] sm:$0xff] %v1033
      %1056 = vst [vmem:[#allocation3 + $0xb0] sm:$0xff] %v1041
      %1057 = vst [vmem:[#allocation3 + $0xf8] sm:$0xff] %v1049
      %v1058 = vld [vmem:[#allocation2 + $0x4] sm:$0xe]
      %v1059 = vld [vmem:[#allocation2 + $0x8] sm:$0xf]
      %v1060 = vld [vmem:[#allocation2 + $0xc] sm:$0xf]
      %v1061 = vld [vmem:[#allocation2 + $0x10] sm:$0xf]
      %v1062 = vld [vmem:[#allocation2 + $0x14] sm:$0xf]
      %v1063 = vld [vmem:[#allocation2 + $0x18] sm:$0xf]
      %v1064 = vld [vmem:[#allocation2 + $0x1c] sm:$0xf]
      %v1065 = vld [vmem:[#allocation2 + $0x20] sm:$0xf]
      %v1066 = vld [vmem:[#allocation2 + $0x24] sm:$0x1]
      %v1067 = vsel %vm879, %v1058, 0
      %v1068 = vsel %vm880, %v1059, 0
      %v1069 = vsel %vm881, %v1060, 0
      %v1070 = vsel %vm882, %v1061, 0
      %v1071 = vsel %vm883, %v1062, 0
      %v1072 = vsel %vm884, %v1063, 0
      %v1073 = vsel %vm885, %v1064, 0
      %v1074 = vsel %vm886, %v1065, 0
      %v1075 = vsel %vm887, %v1066, 0
      %v1085 = vunpack.c.l.b16 %v1067
      %v1086 = vunpack.c.l.b16 %v1068
      %v1087 = vunpack.c.l.b16 %v1069
      %v1088 = vunpack.c.l.b16 %v1070
      %v1089 = vunpack.c.l.b16 %v1071
      %v1090 = vunpack.c.l.b16 %v1072
      %v1091 = vunpack.c.l.b16 %v1073
      %v1092 = vunpack.c.l.b16 %v1074
      %v1093 = vunpack.c.l.b16 %v1075
      %v1094 = vpack.c.b16 %v1086, %v1085
      %v1095 = vpack.c.b16 %v1088, %v1087
      %v1096 = vpack.c.b16 %v1090, %v1089
      %v1097 = vpack.c.b16 %v1092, %v1091
      %v1098 = vpack.c.b16 %v1093, %v1093
      %v1099 = vrot.slane %v1094, 1
      %v1100 = vrot.slane %v1095, 1
      %v1101 = vsel %vm920, %v1099, %v1100
      %v1102 = vrot.slane %v1096, 1
      %v1103 = vsel %vm920, %v1100, %v1102
      %v1104 = vrot.slane %v1097, 1
      %v1105 = vsel %vm920, %v1102, %v1104
      %v1106 = vrot.slane %v1098, 1
      %v1107 = vsel %vm920, %v1104, %v1106
      %1112 = vst [vmem:[#allocation3 + $0x28] sm:$0xff] %v1101
      %1113 = vst [vmem:[#allocation3 + $0x70] sm:$0xff] %v1103
      %1114 = vst [vmem:[#allocation3 + $0xb8] sm:$0xff] %v1105
      %1115 = vst [vmem:[#allocation3 + $0x100] sm:$0xff] %v1107
      %v1116 = vld [vmem:[#allocation2 + $0x8] sm:$0xf]
      %v1117 = vld [vmem:[#allocation2 + $0xc] sm:$0xf]
      %v1118 = vld [vmem:[#allocation2 + $0x10] sm:$0xf]
      %v1119 = vld [vmem:[#allocation2 + $0x14] sm:$0xf]
      %v1120 = vld [vmem:[#allocation2 + $0x18] sm:$0xf]
      %v1121 = vld [vmem:[#allocation2 + $0x1c] sm:$0xf]
      %v1122 = vld [vmem:[#allocation2 + $0x20] sm:$0xf]
      %v1123 = vld [vmem:[#allocation2 + $0x24] sm:$0xf]
      %v1124 = vsel %vm692, %v1116, 0
      %v1125 = vsel %vm693, %v1117, 0
      %v1126 = vsel %vm694, %v1118, 0
      %v1127 = vsel %vm695, %v1119, 0
      %v1128 = vsel %vm696, %v1120, 0
      %v1129 = vsel %vm697, %v1121, 0
      %v1130 = vsel %vm698, %v1122, 0
      %v1131 = vsel %vm699, %v1123, 0
      %v1140 = vunpack.c.l.b16 %v1124
      %v1141 = vunpack.c.l.b16 %v1125
      %v1142 = vunpack.c.l.b16 %v1126
      %v1143 = vunpack.c.l.b16 %v1127
      %v1144 = vunpack.c.l.b16 %v1128
      %v1145 = vunpack.c.l.b16 %v1129
      %v1146 = vunpack.c.l.b16 %v1130
      %v1147 = vunpack.c.l.b16 %v1131
      %v1148 = vpack.c.b16 %v1141, %v1140
      %v1149 = vpack.c.b16 %v1143, %v1142
      %v1150 = vpack.c.b16 %v1145, %v1144
      %v1151 = vpack.c.b16 %v1147, %v1146
      %1156 = vst [vmem:[#allocation3 + $0x30] sm:$0xff] %v1148
      %1157 = vst [vmem:[#allocation3 + $0x78] sm:$0xff] %v1149
      %1158 = vst [vmem:[#allocation3 + $0xc0] sm:$0xff] %v1150
      %1159 = vst [vmem:[#allocation3 + $0x108] sm:$0xff] %v1151
      %v1160 = vld [vmem:[#allocation2 + $0x8] sm:$0xf]
      %v1161 = vld [vmem:[#allocation2 + $0xc] sm:$0xf]
      %v1162 = vld [vmem:[#allocation2 + $0x10] sm:$0xf]
      %v1163 = vld [vmem:[#allocation2 + $0x14] sm:$0xf]
      %v1164 = vld [vmem:[#allocation2 + $0x18] sm:$0xf]
      %v1165 = vld [vmem:[#allocation2 + $0x1c] sm:$0xf]
      %v1166 = vld [vmem:[#allocation2 + $0x20] sm:$0xf]
      %v1167 = vld [vmem:[#allocation2 + $0x24] sm:$0xf]
      %v1168 = vld [vmem:[#allocation2 + $0x28] sm:$0x1]
      %v1178 = vunpack.c.l.b16 %v1160
      %v1179 = vunpack.c.l.b16 %v1161
      %v1180 = vunpack.c.l.b16 %v1162
      %v1181 = vunpack.c.l.b16 %v1163
      %v1182 = vunpack.c.l.b16 %v1164
      %v1183 = vunpack.c.l.b16 %v1165
      %v1184 = vunpack.c.l.b16 %v1166
      %v1185 = vunpack.c.l.b16 %v1167
      %v1186 = vunpack.c.l.b16 %v1168
      %v1187 = vpack.c.b16 %v1179, %v1178
      %v1188 = vpack.c.b16 %v1181, %v1180
      %v1189 = vpack.c.b16 %v1183, %v1182
      %v1190 = vpack.c.b16 %v1185, %v1184
      %v1191 = vpack.c.b16 %v1186, %v1186
      %v1193 = vshrl.u32 %v1187, 16
      %v1195 = vshll.u32 %v1187, 16
      %v1197 = vrot.slane %v1195, 1
      %v1198 = vor.u32 %v1193, %v1197
      %v1200 = vshll.u32 %v1188, 16
      %v1202 = vrot.slane %v1200, 1
      %v1203 = vsel %vm768, %v1198, %v1202
      %v1204 = vshrl.u32 %v1188, 16
      %v1206 = vor.u32 %v1204, %v1202
      %v1208 = vshll.u32 %v1189, 16
      %v1210 = vrot.slane %v1208, 1
      %v1211 = vsel %vm768, %v1206, %v1210
      %v1212 = vshrl.u32 %v1189, 16
      %v1214 = vor.u32 %v1212, %v1210
      %v1216 = vshll.u32 %v1190, 16
      %v1218 = vrot.slane %v1216, 1
      %v1219 = vsel %vm768, %v1214, %v1218
      %v1220 = vshrl.u32 %v1190, 16
      %v1222 = vor.u32 %v1220, %v1218
      %v1224 = vshll.u32 %v1191, 16
      %v1226 = vrot.slane %v1224, 1
      %v1227 = vsel %vm768, %v1222, %v1226
      %1232 = vst [vmem:[#allocation3 + $0x38] sm:$0xff] %v1203
      %1233 = vst [vmem:[#allocation3 + $0x80] sm:$0xff] %v1211
      %1234 = vst [vmem:[#allocation3 + $0xc8] sm:$0xff] %v1219
      %1235 = vst [vmem:[#allocation3 + $0x110] sm:$0xff] %v1227
      %v1236 = vld [vmem:[#allocation2 + $0x8] sm:$0xe]
      %v1237 = vld [vmem:[#allocation2 + $0xc] sm:$0xf]
      %v1238 = vld [vmem:[#allocation2 + $0x10] sm:$0xf]
      %v1239 = vld [vmem:[#allocation2 + $0x14] sm:$0xf]
      %v1240 = vld [vmem:[#allocation2 + $0x18] sm:$0xf]
      %v1241 = vld [vmem:[#allocation2 + $0x1c] sm:$0xf]
      %v1242 = vld [vmem:[#allocation2 + $0x20] sm:$0xf]
      %v1243 = vld [vmem:[#allocation2 + $0x24] sm:$0xf]
      %v1244 = vld [vmem:[#allocation2 + $0x28] sm:$0x1]
      %v1245 = vsel %vm879, %v1236, 0
      %v1246 = vsel %vm880, %v1237, 0
      %v1247 = vsel %vm881, %v1238, 0
      %v1248 = vsel %vm882, %v1239, 0
      %v1249 = vsel %vm883, %v1240, 0
      %v1250 = vsel %vm884, %v1241, 0
      %v1251 = vsel %vm885, %v1242, 0
      %v1252 = vsel %vm886, %v1243, 0
      %v1253 = vsel %vm887, %v1244, 0
      %v1263 = vunpack.c.l.b16 %v1245
      %v1264 = vunpack.c.l.b16 %v1246
      %v1265 = vunpack.c.l.b16 %v1247
      %v1266 = vunpack.c.l.b16 %v1248
      %v1267 = vunpack.c.l.b16 %v1249
      %v1268 = vunpack.c.l.b16 %v1250
      %v1269 = vunpack.c.l.b16 %v1251
      %v1270 = vunpack.c.l.b16 %v1252
      %v1271 = vunpack.c.l.b16 %v1253
      %v1272 = vpack.c.b16 %v1264, %v1263
      %v1273 = vpack.c.b16 %v1266, %v1265
      %v1274 = vpack.c.b16 %v1268, %v1267
      %v1275 = vpack.c.b16 %v1270, %v1269
      %v1276 = vpack.c.b16 %v1271, %v1271
      %v1277 = vrot.slane %v1272, 1
      %v1278 = vrot.slane %v1273, 1
      %v1279 = vsel %vm920, %v1277, %v1278
      %v1280 = vrot.slane %v1274, 1
      %v1281 = vsel %vm920, %v1278, %v1280
      %v1282 = vrot.slane %v1275, 1
      %v1283 = vsel %vm920, %v1280, %v1282
      %v1284 = vrot.slane %v1276, 1
      %v1285 = vsel %vm920, %v1282, %v1284
      %1290 = vst [vmem:[#allocation3 + $0x40] sm:$0xff] %v1279
      %1291 = vst [vmem:[#allocation3 + $0x88] sm:$0xff] %v1281
      %1292 = vst [vmem:[#allocation3 + $0xd0] sm:$0xff] %v1283
      %1293 = vst [vmem:[#allocation3 + $0x118] sm:$0xff] %v1285
      %v1294 = vld [vmem:[#allocation3] sm:$0xff]
      %v1295 = vld [vmem:[#allocation3 + $0x8] sm:$0xff]
      %v1296 = vld [vmem:[#allocation3 + $0x10] sm:$0xff]
      %v1297 = vld [vmem:[#allocation3 + $0x18] sm:$0xff]
      %v1298 = vld [vmem:[#allocation3 + $0x20] sm:$0xff]
      %v1299 = vld [vmem:[#allocation3 + $0x28] sm:$0xff]
      %v1300 = vld [vmem:[#allocation3 + $0x30] sm:$0xff]
      %v1301 = vld [vmem:[#allocation3 + $0x38] sm:$0xff]
      %v1302 = vld [vmem:[#allocation3 + $0x40] sm:$0xff]
      %v1303 = vld [vmem:[#allocation3 + $0x48] sm:$0xff]
      %v1304 = vld [vmem:[#allocation3 + $0x50] sm:$0xff]
      %v1305 = vld [vmem:[#allocation3 + $0x58] sm:$0xff]
      %v1306 = vld [vmem:[#allocation3 + $0x60] sm:$0xff]
      %v1307 = vld [vmem:[#allocation3 + $0x68] sm:$0xff]
      %v1308 = vld [vmem:[#allocation3 + $0x70] sm:$0xff]
      %v1309 = vld [vmem:[#allocation3 + $0x78] sm:$0xff]
      %v1310 = vld [vmem:[#allocation3 + $0x80] sm:$0xff]
      %v1311 = vld [vmem:[#allocation3 + $0x88] sm:$0xff]
      %v1312 = vld [vmem:[#allocation3 + $0x90] sm:$0xff]
      %v1313 = vld [vmem:[#allocation3 + $0x98] sm:$0xff]
      %v1314 = vld [vmem:[#allocation3 + $0xa0] sm:$0xff]
      %v1315 = vld [vmem:[#allocation3 + $0xa8] sm:$0xff]
      %v1316 = vld [vmem:[#allocation3 + $0xb0] sm:$0xff]
      %v1317 = vld [vmem:[#allocation3 + $0xb8] sm:$0xff]
      %v1318 = vld [vmem:[#allocation3 + $0xc0] sm:$0xff]
      %v1319 = vld [vmem:[#allocation3 + $0xc8] sm:$0xff]
      %v1320 = vld [vmem:[#allocation3 + $0xd0] sm:$0xff]
      %v1321 = vld [vmem:[#allocation3 + $0xd8] sm:$0xff]
      %v1322 = vld [vmem:[#allocation3 + $0xe0] sm:$0xff]
      %v1323 = vld [vmem:[#allocation3 + $0xe8] sm:$0xff]
      %v1324 = vld [vmem:[#allocation3 + $0xf0] sm:$0xff]
      %v1325 = vld [vmem:[#allocation3 + $0xf8] sm:$0xff]
      %v1326 = vld [vmem:[#allocation3 + $0x100] sm:$0xff]
      %v1327 = vld [vmem:[#allocation3 + $0x108] sm:$0xff]
      %v1328 = vld [vmem:[#allocation3 + $0x110] sm:$0xff]
      %v1329 = vld [vmem:[#allocation3 + $0x118] sm:$0xff]
      %v1330 = vld [vmem:[%s3] sm:$0xf]
      %v1331 = vld [vmem:[%s3 + $0x4] sm:$0xf]
      %v1332 = vld [vmem:[%s3 + $0x8] sm:$0xf]
      %v1333 = vld [vmem:[%s3 + $0xc] sm:$0xf]
      %v1334 = vld [vmem:[%s3 + $0x10] sm:$0xf]
      %v1335 = vld [vmem:[%s3 + $0x14] sm:$0xf]
      %v1336 = vld [vmem:[%s3 + $0x18] sm:$0xf]
      %v1337 = vld [vmem:[%s3 + $0x1c] sm:$0xf]
      %v1338 = vld [vmem:[%s3 + $0x20] sm:$0xf]
      %v1339 = vld [vmem:[%s3 + $0x24] sm:$0xf]
      %v1340 = vld [vmem:[%s3 + $0x28] sm:$0xf]
      %v1341 = vld [vmem:[%s3 + $0x2c] sm:$0xf]
      %v1342 = vld [vmem:[%s3 + $0x30] sm:$0xf]
      %v1343 = vld [vmem:[%s3 + $0x34] sm:$0xf]
      %v1344 = vld [vmem:[%s3 + $0x38] sm:$0xf]
      %v1345 = vld [vmem:[%s3 + $0x3c] sm:$0xf]
      %v1346 = vld [vmem:[%s3 + $0x40] sm:$0xf]
      %v1347 = vld [vmem:[%s3 + $0x44] sm:$0xf]
      %v1348 = vld [vmem:[%s3 + $0x48] sm:$0xf]
      %v1349 = vld [vmem:[%s3 + $0x4c] sm:$0xf]
      %v1350 = vld [vmem:[%s3 + $0x50] sm:$0xf]
      %v1351 = vld [vmem:[%s3 + $0x54] sm:$0xf]
      %v1352 = vld [vmem:[%s3 + $0x58] sm:$0xf]
      %v1353 = vld [vmem:[%s3 + $0x5c] sm:$0xf]
      %v1354 = vld [vmem:[%s3 + $0x60] sm:$0xf]
      %v1355 = vld [vmem:[%s3 + $0x64] sm:$0xf]
      %v1356 = vld [vmem:[%s3 + $0x68] sm:$0xf]
      %v1357 = vld [vmem:[%s3 + $0x6c] sm:$0xf]
      %v1358 = vld [vmem:[%s3 + $0x70] sm:$0xf]
      %v1359 = vld [vmem:[%s3 + $0x74] sm:$0xf]
      %v1360 = vld [vmem:[%s3 + $0x78] sm:$0xf]
      %v1361 = vld [vmem:[%s3 + $0x7c] sm:$0xf]
      %v1362 = vld [vmem:[%s3 + $0x80] sm:$0xf]
      %v1363 = vld [vmem:[%s3 + $0x84] sm:$0xf]
      %v1364 = vld [vmem:[%s3 + $0x88] sm:$0xf]
      %v1365 = vld [vmem:[%s3 + $0x8c] sm:$0xf]
      %v1366 = vld [vmem:[%s3 + $0x90] sm:$0xf]
      %v1367 = vld [vmem:[%s3 + $0x94] sm:$0xf]
      %v1368 = vld [vmem:[%s3 + $0x98] sm:$0xf]
      %v1369 = vld [vmem:[%s3 + $0x9c] sm:$0xf]
      %v1370 = vld [vmem:[%s3 + $0xa0] sm:$0xf]
      %v1371 = vld [vmem:[%s3 + $0xa4] sm:$0xf]
      %v1372 = vld [vmem:[%s3 + $0xa8] sm:$0xf]
      %v1373 = vld [vmem:[%s3 + $0xac] sm:$0xf]
      %v1374 = vld [vmem:[%s3 + $0xb0] sm:$0xf]
      %v1375 = vld [vmem:[%s3 + $0xb4] sm:$0xf]
      %v1376 = vld [vmem:[%s3 + $0xb8] sm:$0xf]
      %v1377 = vld [vmem:[%s3 + $0xbc] sm:$0xf]
      %v1378 = vld [vmem:[%s3 + $0xc0] sm:$0xf]
      %v1379 = vld [vmem:[%s3 + $0xc4] sm:$0xf]
      %v1380 = vld [vmem:[%s3 + $0xc8] sm:$0xf]
      %v1381 = vld [vmem:[%s3 + $0xcc] sm:$0xf]
      %v1382 = vld [vmem:[%s3 + $0xd0] sm:$0xf]
      %v1383 = vld [vmem:[%s3 + $0xd4] sm:$0xf]
      %v1384 = vld [vmem:[%s3 + $0xd8] sm:$0xf]
      %v1385 = vld [vmem:[%s3 + $0xdc] sm:$0xf]
      %v1386 = vld [vmem:[%s3 + $0xe0] sm:$0xf]
      %v1387 = vld [vmem:[%s3 + $0xe4] sm:$0xf]
      %v1388 = vld [vmem:[%s3 + $0xe8] sm:$0xf]
      %v1389 = vld [vmem:[%s3 + $0xec] sm:$0xf]
      %v1390 = vld [vmem:[%s3 + $0xf0] sm:$0xf]
      %v1391 = vld [vmem:[%s3 + $0xf4] sm:$0xf]
      %v1392 = vld [vmem:[%s3 + $0xf8] sm:$0xf]
      %v1393 = vld [vmem:[%s3 + $0xfc] sm:$0xf]
      %v1394 = vld [vmem:[%s3 + $0x100] sm:$0xf]
      %v1395 = vld [vmem:[%s3 + $0x104] sm:$0xf]
      %v1396 = vld [vmem:[%s3 + $0x108] sm:$0xf]
      %v1397 = vld [vmem:[%s3 + $0x10c] sm:$0xf]
      %v1398 = vld [vmem:[%s3 + $0x110] sm:$0xf]
      %v1399 = vld [vmem:[%s3 + $0x114] sm:$0xf]
      %v1400 = vld [vmem:[%s3 + $0x118] sm:$0xf]
      %v1401 = vld [vmem:[%s3 + $0x11c] sm:$0xf]
      %v1402 = vld [vmem:[%s3 + $0x120] sm:$0xf]
      %v1403 = vld [vmem:[%s3 + $0x124] sm:$0xf]
      %v1404 = vld [vmem:[%s3 + $0x128] sm:$0xf]
      %v1405 = vld [vmem:[%s3 + $0x12c] sm:$0xf]
      %v1406 = vld [vmem:[%s3 + $0x130] sm:$0xf]
      %v1407 = vld [vmem:[%s3 + $0x134] sm:$0xf]
      %v1408 = vld [vmem:[%s3 + $0x138] sm:$0xf]
      %v1409 = vld [vmem:[%s3 + $0x13c] sm:$0xf]
      %v1410 = vld [vmem:[%s3 + $0x140] sm:$0xf]
      %v1411 = vld [vmem:[%s3 + $0x144] sm:$0xf]
      %v1412 = vld [vmem:[%s3 + $0x148] sm:$0xf]
      %v1413 = vld [vmem:[%s3 + $0x14c] sm:$0xf]
      %v1414 = vld [vmem:[%s3 + $0x150] sm:$0xf]
      %v1415 = vld [vmem:[%s3 + $0x154] sm:$0xf]
      %v1416 = vld [vmem:[%s3 + $0x158] sm:$0xf]
      %v1417 = vld [vmem:[%s3 + $0x15c] sm:$0xf]
      %v1418 = vld [vmem:[%s3 + $0x160] sm:$0xf]
      %v1419 = vld [vmem:[%s3 + $0x164] sm:$0xf]
      %v1420 = vld [vmem:[%s3 + $0x168] sm:$0xf]
      %v1421 = vld [vmem:[%s3 + $0x16c] sm:$0xf]
      %v1422 = vld [vmem:[%s3 + $0x170] sm:$0xf]
      %v1423 = vld [vmem:[%s3 + $0x174] sm:$0xf]
      %v1424 = vld [vmem:[%s3 + $0x178] sm:$0xf]
      %v1425 = vld [vmem:[%s3 + $0x17c] sm:$0xf]
      %v1426 = vld [vmem:[%s3 + $0x180] sm:$0xf]
      %v1427 = vld [vmem:[%s3 + $0x184] sm:$0xf]
      %v1428 = vld [vmem:[%s3 + $0x188] sm:$0xf]
      %v1429 = vld [vmem:[%s3 + $0x18c] sm:$0xf]
      %v1430 = vld [vmem:[%s3 + $0x190] sm:$0xf]
      %v1431 = vld [vmem:[%s3 + $0x194] sm:$0xf]
      %v1432 = vld [vmem:[%s3 + $0x198] sm:$0xf]
      %v1433 = vld [vmem:[%s3 + $0x19c] sm:$0xf]
      %v1434 = vld [vmem:[%s3 + $0x1a0] sm:$0xf]
      %v1435 = vld [vmem:[%s3 + $0x1a4] sm:$0xf]
      %v1436 = vld [vmem:[%s3 + $0x1a8] sm:$0xf]
      %v1437 = vld [vmem:[%s3 + $0x1ac] sm:$0xf]
      %v1438 = vld [vmem:[%s3 + $0x1b0] sm:$0xf]
      %v1439 = vld [vmem:[%s3 + $0x1b4] sm:$0xf]
      %v1440 = vld [vmem:[%s3 + $0x1b8] sm:$0xf]
      %v1441 = vld [vmem:[%s3 + $0x1bc] sm:$0xf]
      %v1442 = vld [vmem:[%s3 + $0x1c0] sm:$0xf]
      %v1443 = vld [vmem:[%s3 + $0x1c4] sm:$0xf]
      %v1444 = vld [vmem:[%s3 + $0x1c8] sm:$0xf]
      %v1445 = vld [vmem:[%s3 + $0x1cc] sm:$0xf]
      %v1446 = vld [vmem:[%s3 + $0x1d0] sm:$0xf]
      %v1447 = vld [vmem:[%s3 + $0x1d4] sm:$0xf]
      %v1448 = vld [vmem:[%s3 + $0x1d8] sm:$0xf]
      %v1449 = vld [vmem:[%s3 + $0x1dc] sm:$0xf]
      %v1450 = vld [vmem:[%s3 + $0x1e0] sm:$0xf]
      %v1451 = vld [vmem:[%s3 + $0x1e4] sm:$0xf]
      %v1452 = vld [vmem:[%s3 + $0x1e8] sm:$0xf]
      %v1453 = vld [vmem:[%s3 + $0x1ec] sm:$0xf]
      %v1454 = vld [vmem:[%s3 + $0x1f0] sm:$0xf]
      %v1455 = vld [vmem:[%s3 + $0x1f4] sm:$0xf]
      %v1456 = vld [vmem:[%s3 + $0x1f8] sm:$0xf]
      %v1457 = vld [vmem:[%s3 + $0x1fc] sm:$0xf]
      %v1458 = vld [vmem:[%s3 + $0x200] sm:$0xf]
      %v1459 = vld [vmem:[%s3 + $0x204] sm:$0xf]
      %v1460 = vld [vmem:[%s3 + $0x208] sm:$0xf]
      %v1461 = vld [vmem:[%s3 + $0x20c] sm:$0xf]
      %v1462 = vld [vmem:[%s3 + $0x210] sm:$0xf]
      %v1463 = vld [vmem:[%s3 + $0x214] sm:$0xf]
      %v1464 = vld [vmem:[%s3 + $0x218] sm:$0xf]
      %v1465 = vld [vmem:[%s3 + $0x21c] sm:$0xf]
      %v1466 = vld [vmem:[%s3 + $0x220] sm:$0xf]
      %v1467 = vld [vmem:[%s3 + $0x224] sm:$0xf]
      %v1468 = vld [vmem:[%s3 + $0x228] sm:$0xf]
      %v1469 = vld [vmem:[%s3 + $0x22c] sm:$0xf]
      %v1470 = vld [vmem:[%s3 + $0x230] sm:$0xf]
      %v1471 = vld [vmem:[%s3 + $0x234] sm:$0xf]
      %v1472 = vld [vmem:[%s3 + $0x238] sm:$0xf]
      %v1473 = vld [vmem:[%s3 + $0x23c] sm:$0xf]
      %v1474 = vld [vmem:[%s4] sm:$0x1]
      %v1476 = vlaneseq
      %v1477 = vshrl.u32 %v1476, 7
      %v1478 = vsub.s32 0, %v1477
      %v1479 = vrot.slane %v1474, %v1478
      %v1625 = vunpack.c.l.b16 %v1330
      %v1626 = vunpack.c.l.b16 %v1331
      %v1627 = vunpack.c.l.b16 %v1332
      %v1628 = vunpack.c.l.b16 %v1333
      %v1629 = vunpack.c.l.b16 %v1334
      %v1630 = vunpack.c.l.b16 %v1335
      %v1631 = vunpack.c.l.b16 %v1336
      %v1632 = vunpack.c.l.b16 %v1337
      %v1633 = vunpack.c.l.b16 %v1338
      %v1634 = vunpack.c.l.b16 %v1339
      %v1635 = vunpack.c.l.b16 %v1340
      %v1636 = vunpack.c.l.b16 %v1341
      %v1637 = vunpack.c.l.b16 %v1342
      %v1638 = vunpack.c.l.b16 %v1343
      %v1639 = vunpack.c.l.b16 %v1344
      %v1640 = vunpack.c.l.b16 %v1345
      %v1641 = vunpack.c.l.b16 %v1346
      %v1642 = vunpack.c.l.b16 %v1347
      %v1643 = vunpack.c.l.b16 %v1348
      %v1644 = vunpack.c.l.b16 %v1349
      %v1645 = vunpack.c.l.b16 %v1350
      %v1646 = vunpack.c.l.b16 %v1351
      %v1647 = vunpack.c.l.b16 %v1352
      %v1648 = vunpack.c.l.b16 %v1353
      %v1649 = vunpack.c.l.b16 %v1354
      %v1650 = vunpack.c.l.b16 %v1355
      %v1651 = vunpack.c.l.b16 %v1356
      %v1652 = vunpack.c.l.b16 %v1357
      %v1653 = vunpack.c.l.b16 %v1358
      %v1654 = vunpack.c.l.b16 %v1359
      %v1655 = vunpack.c.l.b16 %v1360
      %v1656 = vunpack.c.l.b16 %v1361
      %v1657 = vunpack.c.l.b16 %v1362
      %v1658 = vunpack.c.l.b16 %v1363
      %v1659 = vunpack.c.l.b16 %v1364
      %v1660 = vunpack.c.l.b16 %v1365
      %v1661 = vunpack.c.l.b16 %v1366
      %v1662 = vunpack.c.l.b16 %v1367
      %v1663 = vunpack.c.l.b16 %v1368
      %v1664 = vunpack.c.l.b16 %v1369
      %v1665 = vunpack.c.l.b16 %v1370
      %v1666 = vunpack.c.l.b16 %v1371
      %v1667 = vunpack.c.l.b16 %v1372
      %v1668 = vunpack.c.l.b16 %v1373
      %v1669 = vunpack.c.l.b16 %v1374
      %v1670 = vunpack.c.l.b16 %v1375
      %v1671 = vunpack.c.l.b16 %v1376
      %v1672 = vunpack.c.l.b16 %v1377
      %v1673 = vunpack.c.l.b16 %v1378
      %v1674 = vunpack.c.l.b16 %v1379
      %v1675 = vunpack.c.l.b16 %v1380
      %v1676 = vunpack.c.l.b16 %v1381
      %v1677 = vunpack.c.l.b16 %v1382
      %v1678 = vunpack.c.l.b16 %v1383
      %v1679 = vunpack.c.l.b16 %v1384
      %v1680 = vunpack.c.l.b16 %v1385
      %v1681 = vunpack.c.l.b16 %v1386
      %v1682 = vunpack.c.l.b16 %v1387
      %v1683 = vunpack.c.l.b16 %v1388
      %v1684 = vunpack.c.l.b16 %v1389
      %v1685 = vunpack.c.l.b16 %v1390
      %v1686 = vunpack.c.l.b16 %v1391
      %v1687 = vunpack.c.l.b16 %v1392
      %v1688 = vunpack.c.l.b16 %v1393
      %v1689 = vunpack.c.l.b16 %v1394
      %v1690 = vunpack.c.l.b16 %v1395
      %v1691 = vunpack.c.l.b16 %v1396
      %v1692 = vunpack.c.l.b16 %v1397
      %v1693 = vunpack.c.l.b16 %v1398
      %v1694 = vunpack.c.l.b16 %v1399
      %v1695 = vunpack.c.l.b16 %v1400
      %v1696 = vunpack.c.l.b16 %v1401
      %v1697 = vunpack.c.l.b16 %v1402
      %v1698 = vunpack.c.l.b16 %v1403
      %v1699 = vunpack.c.l.b16 %v1404
      %v1700 = vunpack.c.l.b16 %v1405
      %v1701 = vunpack.c.l.b16 %v1406
      %v1702 = vunpack.c.l.b16 %v1407
      %v1703 = vunpack.c.l.b16 %v1408
      %v1704 = vunpack.c.l.b16 %v1409
      %v1705 = vunpack.c.l.b16 %v1410
      %v1706 = vunpack.c.l.b16 %v1411
      %v1707 = vunpack.c.l.b16 %v1412
      %v1708 = vunpack.c.l.b16 %v1413
      %v1709 = vunpack.c.l.b16 %v1414
      %v1710 = vunpack.c.l.b16 %v1415
      %v1711 = vunpack.c.l.b16 %v1416
      %v1712 = vunpack.c.l.b16 %v1417
      %v1713 = vunpack.c.l.b16 %v1418
      %v1714 = vunpack.c.l.b16 %v1419
      %v1715 = vunpack.c.l.b16 %v1420
      %v1716 = vunpack.c.l.b16 %v1421
      %v1717 = vunpack.c.l.b16 %v1422
      %v1718 = vunpack.c.l.b16 %v1423
      %v1719 = vunpack.c.l.b16 %v1424
      %v1720 = vunpack.c.l.b16 %v1425
      %v1721 = vunpack.c.l.b16 %v1426
      %v1722 = vunpack.c.l.b16 %v1427
      %v1723 = vunpack.c.l.b16 %v1428
      %v1724 = vunpack.c.l.b16 %v1429
      %v1725 = vunpack.c.l.b16 %v1430
      %v1726 = vunpack.c.l.b16 %v1431
      %v1727 = vunpack.c.l.b16 %v1432
      %v1728 = vunpack.c.l.b16 %v1433
      %v1729 = vunpack.c.l.b16 %v1434
      %v1730 = vunpack.c.l.b16 %v1435
      %v1731 = vunpack.c.l.b16 %v1436
      %v1732 = vunpack.c.l.b16 %v1437
      %v1733 = vunpack.c.l.b16 %v1438
      %v1734 = vunpack.c.l.b16 %v1439
      %v1735 = vunpack.c.l.b16 %v1440
      %v1736 = vunpack.c.l.b16 %v1441
      %v1737 = vunpack.c.l.b16 %v1442
      %v1738 = vunpack.c.l.b16 %v1443
      %v1739 = vunpack.c.l.b16 %v1444
      %v1740 = vunpack.c.l.b16 %v1445
      %v1741 = vunpack.c.l.b16 %v1446
      %v1742 = vunpack.c.l.b16 %v1447
      %v1743 = vunpack.c.l.b16 %v1448
      %v1744 = vunpack.c.l.b16 %v1449
      %v1745 = vunpack.c.l.b16 %v1450
      %v1746 = vunpack.c.l.b16 %v1451
      %v1747 = vunpack.c.l.b16 %v1452
      %v1748 = vunpack.c.l.b16 %v1453
      %v1749 = vunpack.c.l.b16 %v1454
      %v1750 = vunpack.c.l.b16 %v1455
      %v1751 = vunpack.c.l.b16 %v1456
      %v1752 = vunpack.c.l.b16 %v1457
      %v1753 = vunpack.c.l.b16 %v1458
      %v1754 = vunpack.c.l.b16 %v1459
      %v1755 = vunpack.c.l.b16 %v1460
      %v1756 = vunpack.c.l.b16 %v1461
      %v1757 = vunpack.c.l.b16 %v1462
      %v1758 = vunpack.c.l.b16 %v1463
      %v1759 = vunpack.c.l.b16 %v1464
      %v1760 = vunpack.c.l.b16 %v1465
      %v1761 = vunpack.c.l.b16 %v1466
      %v1762 = vunpack.c.l.b16 %v1467
      %v1763 = vunpack.c.l.b16 %v1468
      %v1764 = vunpack.c.l.b16 %v1469
      %v1765 = vunpack.c.l.b16 %v1470
      %v1766 = vunpack.c.l.b16 %v1471
      %v1767 = vunpack.c.l.b16 %v1472
      %v1768 = vunpack.c.l.b16 %v1473
      %v1769 = vpack.c.b16 %v1626, %v1625
      %v1770 = vpack.c.b16 %v1628, %v1627
      %v1771 = vpack.c.b16 %v1630, %v1629
      %v1772 = vpack.c.b16 %v1632, %v1631
      %v1773 = vpack.c.b16 %v1634, %v1633
      %v1774 = vpack.c.b16 %v1636, %v1635
      %v1775 = vpack.c.b16 %v1638, %v1637
      %v1776 = vpack.c.b16 %v1640, %v1639
      %v1777 = vpack.c.b16 %v1642, %v1641
      %v1778 = vpack.c.b16 %v1644, %v1643
      %v1779 = vpack.c.b16 %v1646, %v1645
      %v1780 = vpack.c.b16 %v1648, %v1647
      %v1781 = vpack.c.b16 %v1650, %v1649
      %v1782 = vpack.c.b16 %v1652, %v1651
      %v1783 = vpack.c.b16 %v1654, %v1653
      %v1784 = vpack.c.b16 %v1656, %v1655
      %v1785 = vpack.c.b16 %v1658, %v1657
      %v1786 = vpack.c.b16 %v1660, %v1659
      %v1787 = vpack.c.b16 %v1662, %v1661
      %v1788 = vpack.c.b16 %v1664, %v1663
      %v1789 = vpack.c.b16 %v1666, %v1665
      %v1790 = vpack.c.b16 %v1668, %v1667
      %v1791 = vpack.c.b16 %v1670, %v1669
      %v1792 = vpack.c.b16 %v1672, %v1671
      %v1793 = vpack.c.b16 %v1674, %v1673
      %v1794 = vpack.c.b16 %v1676, %v1675
      %v1795 = vpack.c.b16 %v1678, %v1677
      %v1796 = vpack.c.b16 %v1680, %v1679
      %v1797 = vpack.c.b16 %v1682, %v1681
      %v1798 = vpack.c.b16 %v1684, %v1683
      %v1799 = vpack.c.b16 %v1686, %v1685
      %v1800 = vpack.c.b16 %v1688, %v1687
      %v1801 = vpack.c.b16 %v1690, %v1689
      %v1802 = vpack.c.b16 %v1692, %v1691
      %v1803 = vpack.c.b16 %v1694, %v1693
      %v1804 = vpack.c.b16 %v1696, %v1695
      %v1805 = vpack.c.b16 %v1698, %v1697
      %v1806 = vpack.c.b16 %v1700, %v1699
      %v1807 = vpack.c.b16 %v1702, %v1701
      %v1808 = vpack.c.b16 %v1704, %v1703
      %v1809 = vpack.c.b16 %v1706, %v1705
      %v1810 = vpack.c.b16 %v1708, %v1707
      %v1811 = vpack.c.b16 %v1710, %v1709
      %v1812 = vpack.c.b16 %v1712, %v1711
      %v1813 = vpack.c.b16 %v1714, %v1713
      %v1814 = vpack.c.b16 %v1716, %v1715
      %v1815 = vpack.c.b16 %v1718, %v1717
      %v1816 = vpack.c.b16 %v1720, %v1719
      %v1817 = vpack.c.b16 %v1722, %v1721
      %v1818 = vpack.c.b16 %v1724, %v1723
      %v1819 = vpack.c.b16 %v1726, %v1725
      %v1820 = vpack.c.b16 %v1728, %v1727
      %v1821 = vpack.c.b16 %v1730, %v1729
      %v1822 = vpack.c.b16 %v1732, %v1731
      %v1823 = vpack.c.b16 %v1734, %v1733
      %v1824 = vpack.c.b16 %v1736, %v1735
      %v1825 = vpack.c.b16 %v1738, %v1737
      %v1826 = vpack.c.b16 %v1740, %v1739
      %v1827 = vpack.c.b16 %v1742, %v1741
      %v1828 = vpack.c.b16 %v1744, %v1743
      %v1829 = vpack.c.b16 %v1746, %v1745
      %v1830 = vpack.c.b16 %v1748, %v1747
      %v1831 = vpack.c.b16 %v1750, %v1749
      %v1832 = vpack.c.b16 %v1752, %v1751
      %v1833 = vpack.c.b16 %v1754, %v1753
      %v1834 = vpack.c.b16 %v1756, %v1755
      %v1835 = vpack.c.b16 %v1758, %v1757
      %v1836 = vpack.c.b16 %v1760, %v1759
      %v1837 = vpack.c.b16 %v1762, %v1761
      %v1838 = vpack.c.b16 %v1764, %v1763
      %v1839 = vpack.c.b16 %v1766, %v1765
      %v1840 = vpack.c.b16 %v1768, %v1767
      %1913 = vmatprep.subr.bf16.mxu0 0
      %1914 = vmatpush1.bf16.msra.mxu0 %v1769
      %1915 = vmatprep.subr.bf16.mxu0 0
      %1916 = vmatpush1.bf16.msra.mxu0 %v1770
      %1917 = vmatprep.subr.bf16.mxu0 0
      %1918 = vmatpush1.bf16.msra.mxu0 %v1771
      %1919 = vmatprep.subr.bf16.mxu0 0
      %1920 = vmatpush1.bf16.msra.mxu0 %v1772
      %1921 = vmatprep.subr.bf16.mxu0 0
      %1922 = vmatpush1.bf16.msra.mxu0 %v1773
      %1923 = vmatprep.subr.bf16.mxu0 0
      %1924 = vmatpush1.bf16.msra.mxu0 %v1774
      %1925 = vmatprep.subr.bf16.mxu0 0
      %1926 = vmatpush1.bf16.msra.mxu0 %v1775
      %1927 = vmatprep.subr.bf16.mxu0 0
      %1928 = vmatpush1.bf16.msra.mxu0 %v1776
      %1929 = vmatprep.subr.bf16.mxu0 0
      %1930 = vmatpush1.bf16.msra.mxu0 %v1777
      %1931 = vmatprep.subr.bf16.mxu0 0
      %1932 = vmatpush1.bf16.msra.mxu0 %v1778
      %1933 = vmatprep.subr.bf16.mxu0 0
      %1934 = vmatpush1.bf16.msra.mxu0 %v1779
      %1935 = vmatprep.subr.bf16.mxu0 0
      %1936 = vmatpush1.bf16.msra.mxu0 %v1780
      %1937 = vmatprep.subr.bf16.mxu0 0
      %1938 = vmatpush1.bf16.msra.mxu0 %v1781
      %1939 = vmatprep.subr.bf16.mxu0 0
      %1940 = vmatpush1.bf16.msra.mxu0 %v1782
      %1941 = vmatprep.subr.bf16.mxu0 0
      %1942 = vmatpush1.bf16.msra.mxu0 %v1783
      %1943 = vmatprep.subr.bf16.mxu0 0
      %1944 = vmatpush1.bf16.msra.mxu0 %v1784
      %1945 = vmatprep.mubr.bf16.mxu0 %v1295
      %1946 = vmatmul.mubr.bf16.gmra.mrb[0].mxu0 %v1294
      %v1947 = vpop.f32.mrb[0].mxu0
      %v1948 = vadd.f32 %v1479, %v1947
      %v1949 = vpop.f32.mrb[0].mxu0
      %v1950 = vpop.f32.mrb[0].mxu0
      %v1951 = vadd.f32 %v1479, %v1950
      %v1952 = vpop.f32.mrb[0].mxu0
      %1953 = vmatprep.mubr.bf16.mxu0 %v1304
      %1954 = vmatmul.mubr.bf16.gmra.mrb[0].mxu0 %v1303
      %v1955 = vpop.f32.mrb[0].mxu0
      %v1956 = vadd.f32 %v1479, %v1955
      %v1957 = vpop.f32.mrb[0].mxu0
      %v1958 = vpop.f32.mrb[0].mxu0
      %v1959 = vadd.f32 %v1479, %v1958
      %v1960 = vpop.f32.mrb[0].mxu0
      %1961 = vmatprep.mubr.bf16.mxu0 %v1313
      %1962 = vmatmul.mubr.bf16.gmra.mrb[0].mxu0 %v1312
      %v1963 = vpop.f32.mrb[0].mxu0
      %v1964 = vadd.f32 %v1479, %v1963
      %v1965 = vpop.f32.mrb[0].mxu0
      %v1966 = vpop.f32.mrb[0].mxu0
      %v1967 = vadd.f32 %v1479, %v1966
      %v1968 = vpop.f32.mrb[0].mxu0
      %1969 = vmatprep.mubr.bf16.mxu0 %v1322
      %1970 = vmatmul.mubr.bf16.gmra.mrb[0].mxu0 %v1321
      %v1971 = vpop.f32.mrb[0].mxu0
      %v1972 = vadd.f32 %v1479, %v1971
      %v1973 = vpop.f32.mrb[0].mxu0
      %v1974 = vpop.f32.mrb[0].mxu0
      %v1975 = vadd.f32 %v1479, %v1974
      %v1976 = vpop.f32.mrb[0].mxu0
      %1977 = vdwg.mxu0
      %1978 = vmatprep.subr.bf16.mxu0 0
      %1979 = vmatpush1.bf16.msra.mxu0 %v1785
      %1980 = vmatprep.subr.bf16.mxu0 0
      %1981 = vmatpush1.bf16.msra.mxu0 %v1786
      %1982 = vmatprep.subr.bf16.mxu0 0
      %1983 = vmatpush1.bf16.msra.mxu0 %v1787
      %1984 = vmatprep.subr.bf16.mxu0 0
      %1985 = vmatpush1.bf16.msra.mxu0 %v1788
      %1986 = vmatprep.subr.bf16.mxu0 0
      %1987 = vmatpush1.bf16.msra.mxu0 %v1789
      %1988 = vmatprep.subr.bf16.mxu0 0
      %1989 = vmatpush1.bf16.msra.mxu0 %v1790
      %1990 = vmatprep.subr.bf16.mxu0 0
      %1991 = vmatpush1.bf16.msra.mxu0 %v1791
      %1992 = vmatprep.subr.bf16.mxu0 0
      %1993 = vmatpush1.bf16.msra.mxu0 %v1792
      %1994 = vmatprep.subr.bf16.mxu0 0
      %1995 = vmatpush1.bf16.msra.mxu0 %v1793
      %1996 = vmatprep.subr.bf16.mxu0 0
      %1997 = vmatpush1.bf16.msra.mxu0 %v1794
      %1998 = vmatprep.subr.bf16.mxu0 0
      %1999 = vmatpush1.bf16.msra.mxu0 %v1795
      %2000 = vmatprep.subr.bf16.mxu0 0
      %2001 = vmatpush1.bf16.msra.mxu0 %v1796
      %2002 = vmatprep.subr.bf16.mxu0 0
      %2003 = vmatpush1.bf16.msra.mxu0 %v1797
      %2004 = vmatprep.subr.bf16.mxu0 0
      %2005 = vmatpush1.bf16.msra.mxu0 %v1798
      %2006 = vmatprep.subr.bf16.mxu0 0
      %2007 = vmatpush1.bf16.msra.mxu0 %v1799
      %2008 = vmatprep.subr.bf16.mxu0 0
      %2009 = vmatpush1.bf16.msra.mxu0 %v1800
      %2010 = vmatprep.mubr.bf16.mxu0 %v1297
      %2011 = vmatmul.mubr.bf16.gmra.mrb[0].mxu0 %v1296
      %v2012 = vpop.f32.mrb[0].mxu0
      %v2013 = vadd.f32 %v1948, %v2012
      %v2014 = vpop.f32.mrb[0].mxu0
      %v2015 = vpop.f32.mrb[0].mxu0
      %v2016 = vadd.f32 %v1951, %v2015
      %v2017 = vpop.f32.mrb[0].mxu0
      %2018 = vmatprep.mubr.bf16.mxu0 %v1306
      %2019 = vmatmul.mubr.bf16.gmra.mrb[0].mxu0 %v1305
      %v2020 = vpop.f32.mrb[0].mxu0
      %v2021 = vadd.f32 %v1956, %v2020
      %v2022 = vpop.f32.mrb[0].mxu0
      %v2023 = vpop.f32.mrb[0].mxu0
      %v2024 = vadd.f32 %v1959, %v2023
      %v2025 = vpop.f32.mrb[0].mxu0
      %2026 = vmatprep.mubr.bf16.mxu0 %v1315
      %2027 = vmatmul.mubr.bf16.gmra.mrb[0].mxu0 %v1314
      %v2028 = vpop.f32.mrb[0].mxu0
      %v2029 = vadd.f32 %v1964, %v2028
      %v2030 = vpop.f32.mrb[0].mxu0
      %v2031 = vpop.f32.mrb[0].mxu0
      %v2032 = vadd.f32 %v1967, %v2031
      %v2033 = vpop.f32.mrb[0].mxu0
      %2034 = vmatprep.mubr.bf16.mxu0 %v1324
      %2035 = vmatmul.mubr.bf16.gmra.mrb[0].mxu0 %v1323
      %v2036 = vpop.f32.mrb[0].mxu0
      %v2037 = vadd.f32 %v1972, %v2036
      %v2038 = vpop.f32.mrb[0].mxu0
      %v2039 = vpop.f32.mrb[0].mxu0
      %v2040 = vadd.f32 %v1975, %v2039
      %v2041 = vpop.f32.mrb[0].mxu0
      %2042 = vdwg.mxu0
      %2043 = vmatprep.subr.bf16.mxu0 0
      %2044 = vmatpush1.bf16.msra.mxu0 %v1801
      %2045 = vmatprep.subr.bf16.mxu0 0
      %2046 = vmatpush1.bf16.msra.mxu0 %v1802
      %2047 = vmatprep.subr.bf16.mxu0 0
      %2048 = vmatpush1.bf16.msra.mxu0 %v1803
      %2049 = vmatprep.subr.bf16.mxu0 0
      %2050 = vmatpush1.bf16.msra.mxu0 %v1804
      %2051 = vmatprep.subr.bf16.mxu0 0
      %2052 = vmatpush1.bf16.msra.mxu0 %v1805
      %2053 = vmatprep.subr.bf16.mxu0 0
      %2054 = vmatpush1.bf16.msra.mxu0 %v1806
      %2055 = vmatprep.subr.bf16.mxu0 0
      %2056 = vmatpush1.bf16.msra.mxu0 %v1807
      %2057 = vmatprep.subr.bf16.mxu0 0
      %2058 = vmatpush1.bf16.msra.mxu0 %v1808
      %2059 = vmatprep.subr.bf16.mxu0 0
      %2060 = vmatpush1.bf16.msra.mxu0 %v1809
      %2061 = vmatprep.subr.bf16.mxu0 0
      %2062 = vmatpush1.bf16.msra.mxu0 %v1810
      %2063 = vmatprep.subr.bf16.mxu0 0
      %2064 = vmatpush1.bf16.msra.mxu0 %v1811
      %2065 = vmatprep.subr.bf16.mxu0 0
      %2066 = vmatpush1.bf16.msra.mxu0 %v1812
      %2067 = vmatprep.subr.bf16.mxu0 0
      %2068 = vmatpush1.bf16.msra.mxu0 %v1813
      %2069 = vmatprep.subr.bf16.mxu0 0
      %2070 = vmatpush1.bf16.msra.mxu0 %v1814
      %2071 = vmatprep.subr.bf16.mxu0 0
      %2072 = vmatpush1.bf16.msra.mxu0 %v1815
      %2073 = vmatprep.subr.bf16.mxu0 0
      %2074 = vmatpush1.bf16.msra.mxu0 %v1816
      %2075 = vmatprep.mubr.bf16.mxu0 %v1299
      %2076 = vmatmul.mubr.bf16.gmra.mrb[0].mxu0 %v1298
      %v2077 = vpop.f32.mrb[0].mxu0
      %v2078 = vadd.f32 %v2013, %v2077
      %v2079 = vpop.f32.mrb[0].mxu0
      %v2080 = vpop.f32.mrb[0].mxu0
      %v2081 = vadd.f32 %v2016, %v2080
      %v2082 = vpop.f32.mrb[0].mxu0
      %2083 = vmatprep.mubr.bf16.mxu0 %v1308
      %2084 = vmatmul.mubr.bf16.gmra.mrb[0].mxu0 %v1307
      %v2085 = vpop.f32.mrb[0].mxu0
      %v2086 = vadd.f32 %v2021, %v2085
      %v2087 = vpop.f32.mrb[0].mxu0
      %v2088 = vpop.f32.mrb[0].mxu0
      %v2089 = vadd.f32 %v2024, %v2088
      %v2090 = vpop.f32.mrb[0].mxu0
      %2091 = vmatprep.mubr.bf16.mxu0 %v1317
      %2092 = vmatmul.mubr.bf16.gmra.mrb[0].mxu0 %v1316
      %v2093 = vpop.f32.mrb[0].mxu0
      %v2094 = vadd.f32 %v2029, %v2093
      %v2095 = vpop.f32.mrb[0].mxu0
      %v2096 = vpop.f32.mrb[0].mxu0
      %v2097 = vadd.f32 %v2032, %v2096
      %v2098 = vpop.f32.mrb[0].mxu0
      %2099 = vmatprep.mubr.bf16.mxu0 %v1326
      %2100 = vmatmul.mubr.bf16.gmra.mrb[0].mxu0 %v1325
      %v2101 = vpop.f32.mrb[0].mxu0
      %v2102 = vadd.f32 %v2037, %v2101
      %v2103 = vpop.f32.mrb[0].mxu0
      %v2104 = vpop.f32.mrb[0].mxu0
      %v2105 = vadd.f32 %v2040, %v2104
      %v2106 = vpop.f32.mrb[0].mxu0
      %2107 = vdwg.mxu0
      %2108 = vmatprep.subr.bf16.mxu0 0
      %2109 = vmatpush1.bf16.msra.mxu0 %v1817
      %2110 = vmatprep.subr.bf16.mxu0 0
      %2111 = vmatpush1.bf16.msra.mxu0 %v1818
      %2112 = vmatprep.subr.bf16.mxu0 0
      %2113 = vmatpush1.bf16.msra.mxu0 %v1819
      %2114 = vmatprep.subr.bf16.mxu0 0
      %2115 = vmatpush1.bf16.msra.mxu0 %v1820
      %2116 = vmatprep.subr.bf16.mxu0 0
      %2117 = vmatpush1.bf16.msra.mxu0 %v1821
      %2118 = vmatprep.subr.bf16.mxu0 0
      %2119 = vmatpush1.bf16.msra.mxu0 %v1822
      %2120 = vmatprep.subr.bf16.mxu0 0
      %2121 = vmatpush1.bf16.msra.mxu0 %v1823
      %2122 = vmatprep.subr.bf16.mxu0 0
      %2123 = vmatpush1.bf16.msra.mxu0 %v1824
      %2124 = vmatprep.subr.bf16.mxu0 0
      %2125 = vmatpush1.bf16.msra.mxu0 %v1825
      %2126 = vmatprep.subr.bf16.mxu0 0
      %2127 = vmatpush1.bf16.msra.mxu0 %v1826
      %2128 = vmatprep.subr.bf16.mxu0 0
      %2129 = vmatpush1.bf16.msra.mxu0 %v1827
      %2130 = vmatprep.subr.bf16.mxu0 0
      %2131 = vmatpush1.bf16.msra.mxu0 %v1828
      %2132 = vmatprep.subr.bf16.mxu0 0
      %2133 = vmatpush1.bf16.msra.mxu0 %v1829
      %2134 = vmatprep.subr.bf16.mxu0 0
      %2135 = vmatpush1.bf16.msra.mxu0 %v1830
      %2136 = vmatprep.subr.bf16.mxu0 0
      %2137 = vmatpush1.bf16.msra.mxu0 %v1831
      %2138 = vmatprep.subr.bf16.mxu0 0
      %2139 = vmatpush1.bf16.msra.mxu0 %v1832
      %2140 = vmatprep.mubr.bf16.mxu0 %v1301
      %2141 = vmatmul.mubr.bf16.gmra.mrb[0].mxu0 %v1300
      %v2142 = vpop.f32.mrb[0].mxu0
      %v2143 = vadd.f32 %v2078, %v2142
      %v2144 = vpop.f32.mrb[0].mxu0
      %v2145 = vpop.f32.mrb[0].mxu0
      %v2146 = vadd.f32 %v2081, %v2145
      %v2147 = vpop.f32.mrb[0].mxu0
      %2148 = vmatprep.mubr.bf16.mxu0 %v1310
      %2149 = vmatmul.mubr.bf16.gmra.mrb[0].mxu0 %v1309
      %v2150 = vpop.f32.mrb[0].mxu0
      %v2151 = vadd.f32 %v2086, %v2150
      %v2152 = vpop.f32.mrb[0].mxu0
      %v2153 = vpop.f32.mrb[0].mxu0
      %v2154 = vadd.f32 %v2089, %v2153
      %v2155 = vpop.f32.mrb[0].mxu0
      %2156 = vmatprep.mubr.bf16.mxu0 %v1319
      %2157 = vmatmul.mubr.bf16.gmra.mrb[0].mxu0 %v1318
      %v2158 = vpop.f32.mrb[0].mxu0
      %v2159 = vadd.f32 %v2094, %v2158
      %v2160 = vpop.f32.mrb[0].mxu0
      %v2161 = vpop.f32.mrb[0].mxu0
      %v2162 = vadd.f32 %v2097, %v2161
      %v2163 = vpop.f32.mrb[0].mxu0
      %2164 = vmatprep.mubr.bf16.mxu0 %v1328
      %2165 = vmatmul.mubr.bf16.gmra.mrb[0].mxu0 %v1327
      %v2166 = vpop.f32.mrb[0].mxu0
      %v2167 = vadd.f32 %v2102, %v2166
      %v2168 = vpop.f32.mrb[0].mxu0
      %v2169 = vpop.f32.mrb[0].mxu0
      %v2170 = vadd.f32 %v2105, %v2169
      %v2171 = vpop.f32.mrb[0].mxu0
      %2172 = vdwg.mxu0
      %2173 = vmatprep.subr.bf16.mxu0 0
      %2174 = vmatpush1.bf16.msra.mxu0 %v1833
      %2175 = vmatprep.subr.bf16.mxu0 0
      %2176 = vmatpush1.bf16.msra.mxu0 %v1834
      %2177 = vmatprep.subr.bf16.mxu0 0
      %2178 = vmatpush1.bf16.msra.mxu0 %v1835
      %2179 = vmatprep.subr.bf16.mxu0 0
      %2180 = vmatpush1.bf16.msra.mxu0 %v1836
      %2181 = vmatprep.subr.bf16.mxu0 0
      %2182 = vmatpush1.bf16.msra.mxu0 %v1837
      %2183 = vmatprep.subr.bf16.mxu0 0
      %2184 = vmatpush1.bf16.msra.mxu0 %v1838
      %2185 = vmatprep.subr.bf16.mxu0 0
      %2186 = vmatpush1.bf16.msra.mxu0 %v1839
      %2187 = vmatprep.subr.bf16.mxu0 0
      %2188 = vmatpush1.bf16.msra.mxu0 %v1840
      %2189 = vmatprep.subr.bf16.mxu0 0
      %2190 = vmatpush1.bf16.msra.mxu0 0
      %2191 = vmatprep.subr.bf16.mxu0 0
      %2192 = vmatpush1.bf16.msra.mxu0 0
      %2193 = vmatprep.subr.bf16.mxu0 0
      %2194 = vmatpush1.bf16.msra.mxu0 0
      %2195 = vmatprep.subr.bf16.mxu0 0
      %2196 = vmatpush1.bf16.msra.mxu0 0
      %2197 = vmatprep.subr.bf16.mxu0 0
      %2198 = vmatpush1.bf16.msra.mxu0 0
      %2199 = vmatprep.subr.bf16.mxu0 0
      %2200 = vmatpush1.bf16.msra.mxu0 0
      %2201 = vmatprep.subr.bf16.mxu0 0
      %2202 = vmatpush1.bf16.msra.mxu0 0
      %2203 = vmatprep.subr.bf16.mxu0 0
      %2204 = vmatpush1.bf16.msra.mxu0 0
      %2205 = vmatprep.mubr.bf16.mxu0 0
      %2206 = vmatmul.mubr.bf16.gmra.mrb[0].mxu0 %v1302
      %v2207 = vpop.f32.mrb[0].mxu0
      %v2208 = vadd.f32 %v2143, %v2207
      %v2209 = vpop.f32.mrb[0].mxu0
      %v2210 = vpop.f32.mrb[0].mxu0
      %v2211 = vadd.f32 %v2146, %v2210
      %v2212 = vpop.f32.mrb[0].mxu0
      %2213 = vmatprep.mubr.bf16.mxu0 0
      %2214 = vmatmul.mubr.bf16.gmra.mrb[0].mxu0 %v1311
      %v2215 = vpop.f32.mrb[0].mxu0
      %v2216 = vadd.f32 %v2151, %v2215
      %v2217 = vpop.f32.mrb[0].mxu0
      %v2218 = vpop.f32.mrb[0].mxu0
      %v2219 = vadd.f32 %v2154, %v2218
      %v2220 = vpop.f32.mrb[0].mxu0
      %2221 = vmatprep.mubr.bf16.mxu0 0
      %2222 = vmatmul.mubr.bf16.gmra.mrb[0].mxu0 %v1320
      %v2223 = vpop.f32.mrb[0].mxu0
      %v2224 = vadd.f32 %v2159, %v2223
      %v2225 = vpop.f32.mrb[0].mxu0
      %v2226 = vpop.f32.mrb[0].mxu0
      %v2227 = vadd.f32 %v2162, %v2226
      %v2228 = vpop.f32.mrb[0].mxu0
      %2229 = vmatprep.mubr.bf16.mxu0 0
      %2230 = vmatmul.mubr.bf16.gmra.mrb[0].mxu0 %v1329
      %v2231 = vpop.f32.mrb[0].mxu0
      %v2232 = vadd.f32 %v2167, %v2231
      %v2233 = vpop.f32.mrb[0].mxu0
      %v2234 = vpop.f32.mrb[0].mxu0
      %v2235 = vadd.f32 %v2170, %v2234
      %v2236 = vpop.f32.mrb[0].mxu0
      %2237 = vdwg.mxu0
      %vm2238 = vcmp.gt.f32.partialorder %v2208, 0.0
      %vm2239 = vcmp.gt.f32.partialorder %v2211, 0.0
      %vm2240 = vcmp.gt.f32.partialorder %v2216, 0.0
      %vm2241 = vcmp.gt.f32.partialorder %v2219, 0.0
      %vm2242 = vcmp.gt.f32.partialorder %v2224, 0.0
      %vm2243 = vcmp.gt.f32.partialorder %v2227, 0.0
      %vm2244 = vcmp.gt.f32.partialorder %v2232, 0.0
      %vm2245 = vcmp.gt.f32.partialorder %v2235, 0.0
      %v2246 = vmul.f32 %v2208, 0.01
      %v2247 = vmul.f32 %v2211, 0.01
      %v2248 = vmul.f32 %v2216, 0.01
      %v2249 = vmul.f32 %v2219, 0.01
      %v2250 = vmul.f32 %v2224, 0.01
      %v2251 = vmul.f32 %v2227, 0.01
      %v2252 = vmul.f32 %v2232, 0.01
      %v2253 = vmul.f32 %v2235, 0.01
      %v2254 = vsel %vm2238, %v2208, %v2246
      %v2255 = vsel %vm2239, %v2211, %v2247
      %v2256 = vsel %vm2240, %v2216, %v2248
      %v2257 = vsel %vm2241, %v2219, %v2249
      %v2258 = vsel %vm2242, %v2224, %v2250
      %v2259 = vsel %vm2243, %v2227, %v2251
      %v2260 = vsel %vm2244, %v2232, %v2252
      %v2261 = vsel %vm2245, %v2235, %v2253
      %2262 = vst [vmem:[%s380] sm:$0xff] %v2254
      %2263 = vst [vmem:[%s380 + $0x8] sm:$0xff] %v2255
      %2264 = vst [vmem:[%s380 + $0x10] sm:$0xff] %v2256
      %2265 = vst [vmem:[%s380 + $0x18] sm:$0xff] %v2257
      %2266 = vst [vmem:[%s380 + $0x20] sm:$0xff] %v2258
      %2267 = vst [vmem:[%s380 + $0x28] sm:$0xff] %v2259
      %2268 = vst [vmem:[%s380 + $0x30] sm:$0xff] %v2260
      %2269 = vst [vmem:[%s380 + $0x38] sm:$0xff] %v2261
      %s2270 = smul.u32 8, %s21
      %p2271 = scmp.lt.s32.totalorder %s20, 1
      %s2272 = scalar_select %p2271, %s20, 1
      %p2273 = scmp.lt.s32.totalorder %s2270, 7
      %s2274 = scalar_select %p2273, %s2270, 7
      %s2275 = smul.addr %s2272, 8
      %s2276 = sadd.s32 %s2274, %s2275
      %s2277 = smul.addr %s2276, 8
      %s2278 = scalar_lea.vmem %s5, %s2277
      // Predicated region
      $region49: #{down_forward.3} parent=39 // pred_check
        %p2279 = pneg %p190
      $region50: #{down_forward.3} parent=39 // pred_check_branch
        %2281 = sbr.rel (%p2279) target = $region52
      $region51: #{down_forward.3} parent=39 // pred_region
        %s2282 = smul.u32 8, %s21
      $region52: #{down_forward.3} parent=39 // pred_fallthru
        _
    $region40: #{down_forward.3} parent=5 // pred_fallthru
      _
    %p2283 = scmp.le.s32.totalorder 2, %s11
    // Predicated region
    $region53: #{down_forward.3} parent=5 // pred_check
      %p2284 = pneg %p2283
    $region54: #{down_forward.3} parent=5 // pred_check_branch
      %2286 = sbr.rel (%p2284) target = $region56
    $region55: #{down_forward.3} parent=5 // pred_region
      %s2287 = ssub.s32 %s11, 2
      // Predicated region
      $region57: #{down_forward.3} parent=55 // pred_check
        %p2288 = pneg %p196
      $region58: #{down_forward.3} parent=55 // pred_check_branch
        %2290 = sbr.rel (%p2288) target = $region60
      $region59: #{down_forward.3} parent=55 // pred_region
        %s2291 = smul.u32 8, %s23
        %p2292 = scmp.lt.s32.totalorder %s22, 1
        %s2293 = scalar_select %p2292, %s22, 1
        %p2294 = scmp.lt.s32.totalorder %s2291, 7
        %s2295 = scalar_select %p2294, %s2291, 7
        %s2296 = smul.addr %s2293, 8
        %s2297 = sadd.s32 %s2295, %s2296
        %s2298 = smul.addr %s2297, 8
        %s2299 = scalar_lea.vmem %s5, %s2298
      $region60: #{down_forward.3} parent=55 // pred_fallthru
        _
    $region56: #{down_forward.3} parent=5 // pred_fallthru
      _
  $region6: #{down_forward.3} parent=0 // loop_footer
    %s15 = sadd.s32 1, %s11
  $region7: #{down_forward.3} parent=0 // loop_footer_branch
    %10 = sbr.rel target = $region3
  $region8: #{down_forward.3} parent=0 // loop_exit
    _

</llo_original>
